<compile_context>
chip_gen: v7x
topology: tpu7x:2x2x1
jax: 0.10.0
libtpu: 0.0.40
codegen_flags: <defaults>
</compile_context>

<pallas_src>
import jax
import jax.numpy as jnp
import numpy as np
from jax.experimental import pallas as pl
from jax.experimental.pallas import tpu as pltpu


def _estimator_kernel(uy_ref, z0_ref, A_ref, Wuy_ref, b_ref, C_ref, c_ref,
                      Q_ref, R_ref, P0_ref,
                      zmu_ref, zcov_ref, ymu_ref, ycov_ref,
                      z_scr, P_scr):
    """One time-block of the filter rollout (state carried in VMEM scratch)."""
    tb = pl.program_id(0)
    TT, B, _ = zmu_ref.shape
    p = ymu_ref.shape[2]

    # Initialize the carried filter state at the first time block.
    @pl.when(tb == 0)
    def _():
        z_scr[...] = z0_ref[...]
        P_scr[...] = P0_ref[...]

    A = A_ref[...]
    C = C_ref[...]
    Q = Q_ref[...]
    R = R_ref[...]

    # Hoisted transposes / broadcasts (JAX does not CSE these inside the loop).
    AT = A.T
    CT = C.T
    c_b = jnp.broadcast_to(c_ref[...], (B, p))

    # Data-side contribution of the whole block in ONE MXU matmul:
    #   D[t*B + bb, :] = u[t, bb] @ Bm + y[t, bb] @ K + bias
    D = jnp.dot(uy_ref[...], Wuy_ref[...],
                preferred_element_type=jnp.float32) + b_ref[...]   # (TT*B, n)

    z = z_scr[...]        # (B, n)  carried hidden mean
    P = P_scr[...]        # (n, n)  carried covariance (shared across batch)

    # Statically unrolled over the small time block (TT <= 32).
    for t in range(TT):
        d_t = D[t * B:(t + 1) * B, :]                              # (B, n)

        # Mean update (MXU matmul + VPU tanh).
        z = jnp.tanh(jnp.dot(z, A, preferred_element_type=jnp.float32) + d_t)
        y_mu = jnp.dot(z, C, preferred_element_type=jnp.float32) + c_b

        # Covariance propagation, once per timestep (not per batch element).
        PA = jnp.dot(P, A, preferred_element_type=jnp.float32)
        P = jnp.dot(AT, PA, preferred_element_type=jnp.float32) + Q
        PC = jnp.dot(P, C, preferred_element_type=jnp.float32)
        y_cov = jnp.dot(CT, PC, preferred_element_type=jnp.float32) + R

        # Whole-tensor stores (no per-batch dynamic sub-tile stores).
        zmu_ref[t] = z
        ymu_ref[t] = y_mu
        zcov_ref[t] = P
        ycov_ref[t] = y_cov

    # Carry state to the next time block.
    z_scr[...] = z
    P_scr[...] = P


class PallasEstimator:
    """Concrete Gaussian estimator with the forward rollout in a Pallas kernel."""

    def __init__(self, n, m, p, key):
        ks = jax.random.split(key, 6)
        s = 0.3
        self.A = (s * jax.random.normal(ks[0], (n, n))).astype(jnp.float32)
        self.Bm = (s * jax.random.normal(ks[1], (m, n))).astype(jnp.float32)
        self.K = (s * jax.random.normal(ks[2], (p, n))).astype(jnp.float32)
        self.b = (s * jax.random.normal(ks[3], (1, n))).astype(jnp.float32)
        self.C = (s * jax.random.normal(ks[4], (n, p))).astype(jnp.float32)
        self.c = (s * jax.random.normal(ks[5], (1, p))).astype(jnp.float32)
        self.Q = (0.01 * jnp.eye(n)).astype(jnp.float32)
        self.R = (0.05 * jnp.eye(p)).astype(jnp.float32)
        self.P0 = (0.1 * jnp.eye(n)).astype(jnp.float32)
        self.n, self.m, self.p = n, m, p

    def get_initial_hidden_state(self, batch_size, z0=None):
        if z0 is not None:
            return z0
        return jnp.zeros((batch_size, self.n), jnp.float32)

    def forward(self, time, y, u, z0, return_hidden=False):
        # `time` only defines T here (constant-rate rollout).
        T, B, p = y.shape
        m = u.shape[-1]
        n = z0.shape[-1]
        assert (m, p, n) == (self.m, self.p, self.n)

        # --- Time blocking: TT timesteps per grid step (whole sequence for small T).
        # TT=32 is a multiple of 8 so TT*B stays sublane aligned when multi-block.
        TT = T if T <= 32 else 32
        n_blk = pl.cdiv(T, TT)
        T_pad = n_blk * TT
        if T_pad != T:
            y = jnp.concatenate(
                [y, jnp.zeros((T_pad - T, B, p), y.dtype)], axis=0)
            u = jnp.concatenate(
                [u, jnp.zeros((T_pad - T, B, m), u.dtype)], axis=0)

        # --- Fuse the two data-side matmuls (u@Bm + y@K): concat inputs and
        #     weights outside the kernel; kernel sees a lane-dense 2-D slab.
        uy = jnp.concatenate([u, y], axis=-1).astype(jnp.float32)   # (T_pad, B, m+p)
        uy = uy.reshape(T_pad * B, m + p)
        Wuy = jnp.concatenate([self.Bm, self.K], axis=0)            # (m+p, n)

        const2 = lambda tb: (0, 0)

        out_shapes = (
            jax.ShapeDtypeStruct((T_pad, B, n), jnp.float32),    # z mean
            jax.ShapeDtypeStruct((T_pad, n, n), jnp.float32),    # z cov (shared over B)
            jax.ShapeDtypeStruct((T_pad, B, p), jnp.float32),    # y mean
            jax.ShapeDtypeStruct((T_pad, p, p), jnp.float32),    # y cov (shared over B)
        )

        grid_spec = pltpu.PrefetchScalarGridSpec(
            num_scalar_prefetch=0,
            grid=(n_blk,),
            in_specs=[
                pl.BlockSpec((TT * B, m + p), lambda tb: (tb, 0)),   # fused [u | y]
                pl.BlockSpec((B, n), const2),                        # z0
                pl.BlockSpec((n, n), const2),                        # A
                pl.BlockSpec((m + p, n), const2),                    # [Bm; K]
                pl.BlockSpec((1, n), const2),                        # b
                pl.BlockSpec((n, p), const2),                        # C
                pl.BlockSpec((1, p), const2),                        # c
                pl.BlockSpec((n, n), const2),                        # Q
                pl.BlockSpec((p, p), const2),                        # R
                pl.BlockSpec((n, n), const2),                        # P0
            ],
            out_specs=[
                pl.BlockSpec((TT, B, n), lambda tb: (tb, 0, 0)),
                pl.BlockSpec((TT, n, n), lambda tb: (tb, 0, 0)),
                pl.BlockSpec((TT, B, p), lambda tb: (tb, 0, 0)),
                pl.BlockSpec((TT, p, p), lambda tb: (tb, 0, 0)),
            ],
            scratch_shapes=[
                pltpu.VMEM((B, n), jnp.float32),   # carried z mean
                pltpu.VMEM((n, n), jnp.float32),   # carried covariance
            ],
        )

        z_mu, z_cov_s, y_mu, y_cov_s = pl.pallas_call(
            _estimator_kernel,
            out_shape=out_shapes,
            grid_spec=grid_spec,
            compiler_params=pltpu.CompilerParams(
                dimension_semantics=("arbitrary",)),  # sequential recurrence over time blocks
        )(uy, z0, self.A, Wuy, self.b, self.C, self.c, self.Q, self.R, self.P0)

        # Trim time padding; broadcast the batch-independent covariances back to
        # the interface shapes (identical across B, matching the reference).
        z_mu = z_mu[:T]
        y_mu = y_mu[:T]
        z_cov = jnp.broadcast_to(z_cov_s[:T, None], (T, B, n, n))
        y_cov = jnp.broadcast_to(y_cov_s[:T, None], (T, B, p, p))

        if return_hidden:
            return z_mu, z_cov
        return y_mu, y_cov

    # TODO(synk): loss / predict / latent_to_observation / log / eval_loss /
    # summary_plot of the abstract interface are training/sampling/matplotlib
    # glue, not kernelized.


def _reference_forward(est, y, u, z0):
    """Pure-JAX reference (lax.scan) for correctness checking."""
    A, Bm, K, b, C, c, Q, R, P0 = (est.A, est.Bm, est.K, est.b, est.C,
                                   est.c, est.Q, est.R, est.P0)
    B, n = z0.shape
    P_init = jnp.broadcast_to(P0[None], (B, n, n))

    def step(carry, inp):
        z, P = carry
        y_t, u_t = inp
        z_new = jnp.tanh(z @ A + u_t @ Bm + y_t @ K + b)
        P_new = jnp.einsum('ji,bjk,kl->bil', A, P, A) + Q
        y_mu = z_new @ C + c
        y_cov = jnp.einsum('ji,bjk,kl->bil', C, P_new, C) + R
        return (z_new, P_new), (z_new, P_new, y_mu, y_cov)

    _, (zmu, zcov, ymu, ycov) = jax.lax.scan(step, (z0, P_init), (y, u))
    return zmu, zcov, ymu, ycov


if __name__ == "__main__":
    T, B, p, m, n = 8, 2, 4, 4, 8

    key = jax.random.PRNGKey(0)
    k_y, k_u, k_z0, k_param = jax.random.split(key, 4)

    time = jnp.arange(T, dtype=jnp.float32) * 0.1
    y = jax.random.normal(k_y, (T, B, p), dtype=jnp.float32)
    u = jax.random.normal(k_u, (T, B, m), dtype=jnp.float32)
    z0 = jax.random.normal(k_z0, (B, n), dtype=jnp.float32)

    est = PallasEstimator(n, m, p, key=k_param)

    y_mu, y_cov = est.forward(time, y, u, z0)
    z_mu, z_cov = est.forward(time, y, u, z0, return_hidden=True)
    jax.block_until_ready((y_mu, y_cov, z_mu, z_cov))

    assert y_mu.shape == (T, B, p) and y_cov.shape == (T, B, p, p)
    assert z_mu.shape == (T, B, n) and z_cov.shape == (T, B, n, n)

    zmu_r, zcov_r, ymu_r, ycov_r = _reference_forward(est, y, u, z0)
    np.testing.assert_allclose(np.asarray(z_mu), np.asarray(zmu_r), rtol=1e-4, atol=1e-5)
    np.testing.assert_allclose(np.asarray(z_cov), np.asarray(zcov_r), rtol=1e-4, atol=1e-5)
    np.testing.assert_allclose(np.asarray(y_mu), np.asarray(ymu_r), rtol=1e-4, atol=1e-5)
    np.testing.assert_allclose(np.asarray(y_cov), np.asarray(ycov_r), rtol=1e-4, atol=1e-5)

    print("KERNEL_OK")
</pallas_src>

<mosaic_0001>
module attributes {stable_mosaic.version = 11 : i64} {
  func.func @_estimator_kernel(%arg0: i32, %arg1: memref<16x8xf32, #tpu.memory_space<vmem>>, %arg2: memref<2x8xf32, #tpu.memory_space<vmem>>, %arg3: memref<8x8xf32, #tpu.memory_space<vmem>>, %arg4: memref<8x8xf32, #tpu.memory_space<vmem>>, %arg5: memref<1x8xf32, #tpu.memory_space<vmem>>, %arg6: memref<8x4xf32, #tpu.memory_space<vmem>>, %arg7: memref<1x4xf32, #tpu.memory_space<vmem>>, %arg8: memref<8x8xf32, #tpu.memory_space<vmem>>, %arg9: memref<4x4xf32, #tpu.memory_space<vmem>>, %arg10: memref<8x8xf32, #tpu.memory_space<vmem>>, %arg11: memref<8x2x8xf32, #tpu.memory_space<vmem>>, %arg12: memref<8x8x8xf32, #tpu.memory_space<vmem>>, %arg13: memref<8x2x4xf32, #tpu.memory_space<vmem>>, %arg14: memref<8x4x4xf32, #tpu.memory_space<vmem>>, %arg15: memref<2x8xf32, #tpu.memory_space<vmem>>, %arg16: memref<8x8xf32, #tpu.memory_space<vmem>>) attributes {dimension_semantics = [#tpu.dimension_semantics<arbitrary>], iteration_bounds = array<i64: 1>, scalar_prefetch = 0 : i64, scratch_operands = 2 : i64, tpu.core_type = #tpu.core_type<tc>, window_params = [{transform_indices = @transform_0, window_bounds = array<i64: 16, 8>}, {pipeline_mode = #tpu.pipeline_mode<synchronous>, transform_indices = @transform_1, window_bounds = array<i64: 2, 8>}, {pipeline_mode = #tpu.pipeline_mode<synchronous>, transform_indices = @transform_2, window_bounds = array<i64: 8, 8>}, {pipeline_mode = #tpu.pipeline_mode<synchronous>, transform_indices = @transform_3, window_bounds = array<i64: 8, 8>}, {pipeline_mode = #tpu.pipeline_mode<synchronous>, transform_indices = @transform_4, window_bounds = array<i64: 1, 8>}, {pipeline_mode = #tpu.pipeline_mode<synchronous>, transform_indices = @transform_5, window_bounds = array<i64: 8, 4>}, {pipeline_mode = #tpu.pipeline_mode<synchronous>, transform_indices = @transform_6, window_bounds = array<i64: 1, 4>}, {pipeline_mode = #tpu.pipeline_mode<synchronous>, transform_indices = @transform_7, window_bounds = array<i64: 8, 8>}, {pipeline_mode = #tpu.pipeline_mode<synchronous>, transform_indices = @transform_8, window_bounds = array<i64: 4, 4>}, {pipeline_mode = #tpu.pipeline_mode<synchronous>, transform_indices = @transform_9, window_bounds = array<i64: 8, 8>}, {transform_indices = @transform_10, window_bounds = array<i64: 8, 2, 8>}, {transform_indices = @transform_11, window_bounds = array<i64: 8, 8, 8>}, {transform_indices = @transform_12, window_bounds = array<i64: 8, 2, 4>}, {transform_indices = @transform_13, window_bounds = array<i64: 8, 4, 4>}]} {
    %c0_i32 = arith.constant 0 : i32
    %0 = arith.cmpi eq, %arg0, %c0_i32 : i32
    %1 = arith.extui %0 : i1 to i32
    %c0_i32_0 = arith.constant 0 : i32
    %2 = arith.cmpi ne, %1, %c0_i32_0 : i32
    scf.if %2 {
      %c0_161 = arith.constant 0 : index
      %c0_162 = arith.constant 0 : index
      %214 = vector.load %arg2[%c0_161, %c0_162] : memref<2x8xf32, #tpu.memory_space<vmem>>, vector<2x8xf32>
      %c0_163 = arith.constant 0 : index
      %c0_164 = arith.constant 0 : index
      %215 = vector.load %arg15[%c0_163, %c0_164] : memref<2x8xf32, #tpu.memory_space<vmem>>, vector<2x8xf32>
      tpu.vector_store %arg15[%c0_163, %c0_164], %214 {strides = array<i32>} : memref<2x8xf32, #tpu.memory_space<vmem>>, vector<2x8xf32>,
      %c0_165 = arith.constant 0 : index
      %c0_166 = arith.constant 0 : index
      %216 = vector.load %arg10[%c0_165, %c0_166] : memref<8x8xf32, #tpu.memory_space<vmem>>, vector<8x8xf32>
      %c0_167 = arith.constant 0 : index
      %c0_168 = arith.constant 0 : index
      %217 = vector.load %arg16[%c0_167, %c0_168] : memref<8x8xf32, #tpu.memory_space<vmem>>, vector<8x8xf32>
      tpu.vector_store %arg16[%c0_167, %c0_168], %216 {strides = array<i32>} : memref<8x8xf32, #tpu.memory_space<vmem>>, vector<8x8xf32>,
    } else {
    }
    %c0 = arith.constant 0 : index
    %c0_1 = arith.constant 0 : index
    %3 = vector.load %arg3[%c0, %c0_1] : memref<8x8xf32, #tpu.memory_space<vmem>>, vector<8x8xf32>
    %c0_2 = arith.constant 0 : index
    %c0_3 = arith.constant 0 : index
    %4 = vector.load %arg6[%c0_2, %c0_3] : memref<8x4xf32, #tpu.memory_space<vmem>>, vector<8x4xf32>
    %c0_4 = arith.constant 0 : index
    %c0_5 = arith.constant 0 : index
    %5 = vector.load %arg8[%c0_4, %c0_5] : memref<8x8xf32, #tpu.memory_space<vmem>>, vector<8x8xf32>
    %c0_6 = arith.constant 0 : index
    %c0_7 = arith.constant 0 : index
    %6 = vector.load %arg9[%c0_6, %c0_7] : memref<4x4xf32, #tpu.memory_space<vmem>>, vector<4x4xf32>
    %7 = tpu.transpose %3, [1, 0] : vector<8x8xf32> -> vector<8x8xf32>
    %8 = tpu.transpose %4, [1, 0] : vector<8x4xf32> -> vector<4x8xf32>
    %c0_8 = arith.constant 0 : index
    %c0_9 = arith.constant 0 : index
    %9 = vector.load %arg7[%c0_8, %c0_9] : memref<1x4xf32, #tpu.memory_space<vmem>>, vector<1x4xf32>
    %10 = vector.shape_cast %9 : vector<1x4xf32> to vector<1x4xf32>
    %11 = vector.broadcast %10 : vector<1x4xf32> to vector<2x4xf32>
    %c0_10 = arith.constant 0 : index
    %c0_11 = arith.constant 0 : index
    %12 = vector.load %arg1[%c0_10, %c0_11] : memref<16x8xf32, #tpu.memory_space<vmem>>, vector<16x8xf32>
    %c0_12 = arith.constant 0 : index
    %c0_13 = arith.constant 0 : index
    %13 = vector.load %arg4[%c0_12, %c0_13] : memref<8x8xf32, #tpu.memory_space<vmem>>, vector<8x8xf32>
    %cst = arith.constant dense<0.000000e+00> : vector<16x8xf32>
    %14 = tpu.matmul %12, %13, %cst {dimension_numbers = #tpu.dot_dimension_numbers<[1], [0], [0], [1], [0, 0, 1, 1], [], []>} : vector<16x8xf32>, vector<8x8xf32>, vector<16x8xf32> -> vector<16x8xf32>
    %c0_14 = arith.constant 0 : index
    %c0_15 = arith.constant 0 : index
    %15 = vector.load %arg5[%c0_14, %c0_15] : memref<1x8xf32, #tpu.memory_space<vmem>>, vector<1x8xf32>
    %16 = vector.broadcast %15 : vector<1x8xf32> to vector<16x8xf32>
    %17 = arith.addf %14, %16 : vector<16x8xf32>
    %c0_16 = arith.constant 0 : index
    %c0_17 = arith.constant 0 : index
    %18 = vector.load %arg15[%c0_16, %c0_17] : memref<2x8xf32, #tpu.memory_space<vmem>>, vector<2x8xf32>
    %c0_18 = arith.constant 0 : index
    %c0_19 = arith.constant 0 : index
    %19 = vector.load %arg16[%c0_18, %c0_19] : memref<8x8xf32, #tpu.memory_space<vmem>>, vector<8x8xf32>
    %20 = vector.extract_strided_slice %17 {offsets = [0, 0], sizes = [2, 8], strides = [1, 1]} : vector<16x8xf32> to vector<2x8xf32>
    %cst_20 = arith.constant dense<0.000000e+00> : vector<2x8xf32>
    %21 = tpu.matmul %18, %3, %cst_20 {dimension_numbers = #tpu.dot_dimension_numbers<[1], [0], [0], [1], [0, 0, 1, 1], [], []>} : vector<2x8xf32>, vector<8x8xf32>, vector<2x8xf32> -> vector<2x8xf32>
    %22 = arith.addf %21, %20 : vector<2x8xf32>
    %23 = math.tanh %22 : vector<2x8xf32>
    %cst_21 = arith.constant dense<0.000000e+00> : vector<2x4xf32>
    %24 = tpu.matmul %23, %4, %cst_21 {dimension_numbers = #tpu.dot_dimension_numbers<[1], [0], [0], [1], [0, 0, 1, 1], [], []>} : vector<2x8xf32>, vector<8x4xf32>, vector<2x4xf32> -> vector<2x4xf32>
    %25 = arith.addf %24, %11 : vector<2x4xf32>
    %cst_22 = arith.constant dense<0.000000e+00> : vector<8x8xf32>
    %26 = tpu.matmul %19, %3, %cst_22 {dimension_numbers = #tpu.dot_dimension_numbers<[1], [0], [0], [1], [0, 0, 1, 1], [], []>} : vector<8x8xf32>, vector<8x8xf32>, vector<8x8xf32> -> vector<8x8xf32>
    %cst_23 = arith.constant dense<0.000000e+00> : vector<8x8xf32>
    %27 = tpu.matmul %7, %26, %cst_23 {dimension_numbers = #tpu.dot_dimension_numbers<[1], [0], [0], [1], [0, 0, 1, 1], [], []>} : vector<8x8xf32>, vector<8x8xf32>, vector<8x8xf32> -> vector<8x8xf32>
    %28 = arith.addf %27, %5 : vector<8x8xf32>
    %cst_24 = arith.constant dense<0.000000e+00> : vector<8x4xf32>
    %29 = tpu.matmul %28, %4, %cst_24 {dimension_numbers = #tpu.dot_dimension_numbers<[1], [0], [0], [1], [0, 0, 1, 1], [], []>} : vector<8x8xf32>, vector<8x4xf32>, vector<8x4xf32> -> vector<8x4xf32>
    %cst_25 = arith.constant dense<0.000000e+00> : vector<4x4xf32>
    %30 = tpu.matmul %8, %29, %cst_25 {dimension_numbers = #tpu.dot_dimension_numbers<[1], [0], [0], [1], [0, 0, 1, 1], [], []>} : vector<4x8xf32>, vector<8x4xf32>, vector<4x4xf32> -> vector<4x4xf32>
    %31 = arith.addf %30, %6 : vector<4x4xf32>
    %c0_26 = arith.constant 0 : index
    %c0_27 = arith.constant 0 : index
    %c0_28 = arith.constant 0 : index
    %32 = vector.load %arg11[%c0_26, %c0_27, %c0_28] : memref<8x2x8xf32, #tpu.memory_space<vmem>>, vector<1x2x8xf32>
    %33 = vector.shape_cast %32 : vector<1x2x8xf32> to vector<2x8xf32>
    %34 = vector.shape_cast %23 : vector<2x8xf32> to vector<1x2x8xf32>
    tpu.vector_store %arg11[%c0_26, %c0_27, %c0_28], %34 {strides = array<i32>} : memref<8x2x8xf32, #tpu.memory_space<vmem>>, vector<1x2x8xf32>,
    %c0_29 = arith.constant 0 : index
    %c0_30 = arith.constant 0 : index
    %c0_31 = arith.constant 0 : index
    %35 = vector.load %arg13[%c0_29, %c0_30, %c0_31] : memref<8x2x4xf32, #tpu.memory_space<vmem>>, vector<1x2x4xf32>
    %36 = vector.shape_cast %35 : vector<1x2x4xf32> to vector<2x4xf32>
    %37 = vector.shape_cast %25 : vector<2x4xf32> to vector<1x2x4xf32>
    tpu.vector_store %arg13[%c0_29, %c0_30, %c0_31], %37 {strides = array<i32>} : memref<8x2x4xf32, #tpu.memory_space<vmem>>, vector<1x2x4xf32>,
    %c0_32 = arith.constant 0 : index
    %c0_33 = arith.constant 0 : index
    %c0_34 = arith.constant 0 : index
    %38 = vector.load %arg12[%c0_32, %c0_33, %c0_34] : memref<8x8x8xf32, #tpu.memory_space<vmem>>, vector<1x8x8xf32>
    %39 = vector.shape_cast %38 : vector<1x8x8xf32> to vector<8x8xf32>
    %40 = vector.shape_cast %28 : vector<8x8xf32> to vector<1x8x8xf32>
    tpu.vector_store %arg12[%c0_32, %c0_33, %c0_34], %40 {strides = array<i32>} : memref<8x8x8xf32, #tpu.memory_space<vmem>>, vector<1x8x8xf32>,
    %c0_35 = arith.constant 0 : index
    %c0_36 = arith.constant 0 : index
    %c0_37 = arith.constant 0 : index
    %41 = vector.load %arg14[%c0_35, %c0_36, %c0_37] : memref<8x4x4xf32, #tpu.memory_space<vmem>>, vector<1x4x4xf32>
    %42 = vector.shape_cast %41 : vector<1x4x4xf32> to vector<4x4xf32>
    %43 = vector.shape_cast %31 : vector<4x4xf32> to vector<1x4x4xf32>
    tpu.vector_store %arg14[%c0_35, %c0_36, %c0_37], %43 {strides = array<i32>} : memref<8x4x4xf32, #tpu.memory_space<vmem>>, vector<1x4x4xf32>,
    %44 = vector.extract_strided_slice %17 {offsets = [2, 0], sizes = [2, 8], strides = [1, 1]} : vector<16x8xf32> to vector<2x8xf32>
    %cst_38 = arith.constant dense<0.000000e+00> : vector<2x8xf32>
    %45 = tpu.matmul %23, %3, %cst_38 {dimension_numbers = #tpu.dot_dimension_numbers<[1], [0], [0], [1], [0, 0, 1, 1], [], []>} : vector<2x8xf32>, vector<8x8xf32>, vector<2x8xf32> -> vector<2x8xf32>
    %46 = arith.addf %45, %44 : vector<2x8xf32>
    %47 = math.tanh %46 : vector<2x8xf32>
    %cst_39 = arith.constant dense<0.000000e+00> : vector<2x4xf32>
    %48 = tpu.matmul %47, %4, %cst_39 {dimension_numbers = #tpu.dot_dimension_numbers<[1], [0], [0], [1], [0, 0, 1, 1], [], []>} : vector<2x8xf32>, vector<8x4xf32>, vector<2x4xf32> -> vector<2x4xf32>
    %49 = arith.addf %48, %11 : vector<2x4xf32>
    %cst_40 = arith.constant dense<0.000000e+00> : vector<8x8xf32>
    %50 = tpu.matmul %28, %3, %cst_40 {dimension_numbers = #tpu.dot_dimension_numbers<[1], [0], [0], [1], [0, 0, 1, 1], [], []>} : vector<8x8xf32>, vector<8x8xf32>, vector<8x8xf32> -> vector<8x8xf32>
    %cst_41 = arith.constant dense<0.000000e+00> : vector<8x8xf32>
    %51 = tpu.matmul %7, %50, %cst_41 {dimension_numbers = #tpu.dot_dimension_numbers<[1], [0], [0], [1], [0, 0, 1, 1], [], []>} : vector<8x8xf32>, vector<8x8xf32>, vector<8x8xf32> -> vector<8x8xf32>
    %52 = arith.addf %51, %5 : vector<8x8xf32>
    %cst_42 = arith.constant dense<0.000000e+00> : vector<8x4xf32>
    %53 = tpu.matmul %52, %4, %cst_42 {dimension_numbers = #tpu.dot_dimension_numbers<[1], [0], [0], [1], [0, 0, 1, 1], [], []>} : vector<8x8xf32>, vector<8x4xf32>, vector<8x4xf32> -> vector<8x4xf32>
    %cst_43 = arith.constant dense<0.000000e+00> : vector<4x4xf32>
    %54 = tpu.matmul %8, %53, %cst_43 {dimension_numbers = #tpu.dot_dimension_numbers<[1], [0], [0], [1], [0, 0, 1, 1], [], []>} : vector<4x8xf32>, vector<8x4xf32>, vector<4x4xf32> -> vector<4x4xf32>
    %55 = arith.addf %54, %6 : vector<4x4xf32>
    %c1 = arith.constant 1 : index
    %c0_44 = arith.constant 0 : index
    %c0_45 = arith.constant 0 : index
    %56 = vector.load %arg11[%c1, %c0_44, %c0_45] : memref<8x2x8xf32, #tpu.memory_space<vmem>>, vector<1x2x8xf32>
    %57 = vector.shape_cast %56 : vector<1x2x8xf32> to vector<2x8xf32>
    %58 = vector.shape_cast %47 : vector<2x8xf32> to vector<1x2x8xf32>
    tpu.vector_store %arg11[%c1, %c0_44, %c0_45], %58 {strides = array<i32>} : memref<8x2x8xf32, #tpu.memory_space<vmem>>, vector<1x2x8xf32>,
    %c1_46 = arith.constant 1 : index
    %c0_47 = arith.constant 0 : index
    %c0_48 = arith.constant 0 : index
    %59 = vector.load %arg13[%c1_46, %c0_47, %c0_48] : memref<8x2x4xf32, #tpu.memory_space<vmem>>, vector<1x2x4xf32>
    %60 = vector.shape_cast %59 : vector<1x2x4xf32> to vector<2x4xf32>
    %61 = vector.shape_cast %49 : vector<2x4xf32> to vector<1x2x4xf32>
    tpu.vector_store %arg13[%c1_46, %c0_47, %c0_48], %61 {strides = array<i32>} : memref<8x2x4xf32, #tpu.memory_space<vmem>>, vector<1x2x4xf32>,
    %c1_49 = arith.constant 1 : index
    %c0_50 = arith.constant 0 : index
    %c0_51 = arith.constant 0 : index
    %62 = vector.load %arg12[%c1_49, %c0_50, %c0_51] : memref<8x8x8xf32, #tpu.memory_space<vmem>>, vector<1x8x8xf32>
    %63 = vector.shape_cast %62 : vector<1x8x8xf32> to vector<8x8xf32>
    %64 = vector.shape_cast %52 : vector<8x8xf32> to vector<1x8x8xf32>
    tpu.vector_store %arg12[%c1_49, %c0_50, %c0_51], %64 {strides = array<i32>} : memref<8x8x8xf32, #tpu.memory_space<vmem>>, vector<1x8x8xf32>,
    %c1_52 = arith.constant 1 : index
    %c0_53 = arith.constant 0 : index
    %c0_54 = arith.constant 0 : index
    %65 = vector.load %arg14[%c1_52, %c0_53, %c0_54] : memref<8x4x4xf32, #tpu.memory_space<vmem>>, vector<1x4x4xf32>
    %66 = vector.shape_cast %65 : vector<1x4x4xf32> to vector<4x4xf32>
    %67 = vector.shape_cast %55 : vector<4x4xf32> to vector<1x4x4xf32>
    tpu.vector_store %arg14[%c1_52, %c0_53, %c0_54], %67 {strides = array<i32>} : memref<8x4x4xf32, #tpu.memory_space<vmem>>, vector<1x4x4xf32>,
    %68 = vector.extract_strided_slice %17 {offsets = [4, 0], sizes = [2, 8], strides = [1, 1]} : vector<16x8xf32> to vector<2x8xf32>
    %cst_55 = arith.constant dense<0.000000e+00> : vector<2x8xf32>
    %69 = tpu.matmul %47, %3, %cst_55 {dimension_numbers = #tpu.dot_dimension_numbers<[1], [0], [0], [1], [0, 0, 1, 1], [], []>} : vector<2x8xf32>, vector<8x8xf32>, vector<2x8xf32> -> vector<2x8xf32>
    %70 = arith.addf %69, %68 : vector<2x8xf32>
    %71 = math.tanh %70 : vector<2x8xf32>
    %cst_56 = arith.constant dense<0.000000e+00> : vector<2x4xf32>
    %72 = tpu.matmul %71, %4, %cst_56 {dimension_numbers = #tpu.dot_dimension_numbers<[1], [0], [0], [1], [0, 0, 1, 1], [], []>} : vector<2x8xf32>, vector<8x4xf32>, vector<2x4xf32> -> vector<2x4xf32>
    %73 = arith.addf %72, %11 : vector<2x4xf32>
    %cst_57 = arith.constant dense<0.000000e+00> : vector<8x8xf32>
    %74 = tpu.matmul %52, %3, %cst_57 {dimension_numbers = #tpu.dot_dimension_numbers<[1], [0], [0], [1], [0, 0, 1, 1], [], []>} : vector<8x8xf32>, vector<8x8xf32>, vector<8x8xf32> -> vector<8x8xf32>
    %cst_58 = arith.constant dense<0.000000e+00> : vector<8x8xf32>
    %75 = tpu.matmul %7, %74, %cst_58 {dimension_numbers = #tpu.dot_dimension_numbers<[1], [0], [0], [1], [0, 0, 1, 1], [], []>} : vector<8x8xf32>, vector<8x8xf32>, vector<8x8xf32> -> vector<8x8xf32>
    %76 = arith.addf %75, %5 : vector<8x8xf32>
    %cst_59 = arith.constant dense<0.000000e+00> : vector<8x4xf32>
    %77 = tpu.matmul %76, %4, %cst_59 {dimension_numbers = #tpu.dot_dimension_numbers<[1], [0], [0], [1], [0, 0, 1, 1], [], []>} : vector<8x8xf32>, vector<8x4xf32>, vector<8x4xf32> -> vector<8x4xf32>
    %cst_60 = arith.constant dense<0.000000e+00> : vector<4x4xf32>
    %78 = tpu.matmul %8, %77, %cst_60 {dimension_numbers = #tpu.dot_dimension_numbers<[1], [0], [0], [1], [0, 0, 1, 1], [], []>} : vector<4x8xf32>, vector<8x4xf32>, vector<4x4xf32> -> vector<4x4xf32>
    %79 = arith.addf %78, %6 : vector<4x4xf32>
    %c2 = arith.constant 2 : index
    %c0_61 = arith.constant 0 : index
    %c0_62 = arith.constant 0 : index
    %80 = vector.load %arg11[%c2, %c0_61, %c0_62] : memref<8x2x8xf32, #tpu.memory_space<vmem>>, vector<1x2x8xf32>
    %81 = vector.shape_cast %80 : vector<1x2x8xf32> to vector<2x8xf32>
    %82 = vector.shape_cast %71 : vector<2x8xf32> to vector<1x2x8xf32>
    tpu.vector_store %arg11[%c2, %c0_61, %c0_62], %82 {strides = array<i32>} : memref<8x2x8xf32, #tpu.memory_space<vmem>>, vector<1x2x8xf32>,
    %c2_63 = arith.constant 2 : index
    %c0_64 = arith.constant 0 : index
    %c0_65 = arith.constant 0 : index
    %83 = vector.load %arg13[%c2_63, %c0_64, %c0_65] : memref<8x2x4xf32, #tpu.memory_space<vmem>>, vector<1x2x4xf32>
    %84 = vector.shape_cast %83 : vector<1x2x4xf32> to vector<2x4xf32>
    %85 = vector.shape_cast %73 : vector<2x4xf32> to vector<1x2x4xf32>
    tpu.vector_store %arg13[%c2_63, %c0_64, %c0_65], %85 {strides = array<i32>} : memref<8x2x4xf32, #tpu.memory_space<vmem>>, vector<1x2x4xf32>,
    %c2_66 = arith.constant 2 : index
    %c0_67 = arith.constant 0 : index
    %c0_68 = arith.constant 0 : index
    %86 = vector.load %arg12[%c2_66, %c0_67, %c0_68] : memref<8x8x8xf32, #tpu.memory_space<vmem>>, vector<1x8x8xf32>
    %87 = vector.shape_cast %86 : vector<1x8x8xf32> to vector<8x8xf32>
    %88 = vector.shape_cast %76 : vector<8x8xf32> to vector<1x8x8xf32>
    tpu.vector_store %arg12[%c2_66, %c0_67, %c0_68], %88 {strides = array<i32>} : memref<8x8x8xf32, #tpu.memory_space<vmem>>, vector<1x8x8xf32>,
    %c2_69 = arith.constant 2 : index
    %c0_70 = arith.constant 0 : index
    %c0_71 = arith.constant 0 : index
    %89 = vector.load %arg14[%c2_69, %c0_70, %c0_71] : memref<8x4x4xf32, #tpu.memory_space<vmem>>, vector<1x4x4xf32>
    %90 = vector.shape_cast %89 : vector<1x4x4xf32> to vector<4x4xf32>
    %91 = vector.shape_cast %79 : vector<4x4xf32> to vector<1x4x4xf32>
    tpu.vector_store %arg14[%c2_69, %c0_70, %c0_71], %91 {strides = array<i32>} : memref<8x4x4xf32, #tpu.memory_space<vmem>>, vector<1x4x4xf32>,
    %92 = vector.extract_strided_slice %17 {offsets = [6, 0], sizes = [2, 8], strides = [1, 1]} : vector<16x8xf32> to vector<2x8xf32>
    %cst_72 = arith.constant dense<0.000000e+00> : vector<2x8xf32>
    %93 = tpu.matmul %71, %3, %cst_72 {dimension_numbers = #tpu.dot_dimension_numbers<[1], [0], [0], [1], [0, 0, 1, 1], [], []>} : vector<2x8xf32>, vector<8x8xf32>, vector<2x8xf32> -> vector<2x8xf32>
    %94 = arith.addf %93, %92 : vector<2x8xf32>
    %95 = math.tanh %94 : vector<2x8xf32>
    %cst_73 = arith.constant dense<0.000000e+00> : vector<2x4xf32>
    %96 = tpu.matmul %95, %4, %cst_73 {dimension_numbers = #tpu.dot_dimension_numbers<[1], [0], [0], [1], [0, 0, 1, 1], [], []>} : vector<2x8xf32>, vector<8x4xf32>, vector<2x4xf32> -> vector<2x4xf32>
    %97 = arith.addf %96, %11 : vector<2x4xf32>
    %cst_74 = arith.constant dense<0.000000e+00> : vector<8x8xf32>
    %98 = tpu.matmul %76, %3, %cst_74 {dimension_numbers = #tpu.dot_dimension_numbers<[1], [0], [0], [1], [0, 0, 1, 1], [], []>} : vector<8x8xf32>, vector<8x8xf32>, vector<8x8xf32> -> vector<8x8xf32>
    %cst_75 = arith.constant dense<0.000000e+00> : vector<8x8xf32>
    %99 = tpu.matmul %7, %98, %cst_75 {dimension_numbers = #tpu.dot_dimension_numbers<[1], [0], [0], [1], [0, 0, 1, 1], [], []>} : vector<8x8xf32>, vector<8x8xf32>, vector<8x8xf32> -> vector<8x8xf32>
    %100 = arith.addf %99, %5 : vector<8x8xf32>
    %cst_76 = arith.constant dense<0.000000e+00> : vector<8x4xf32>
    %101 = tpu.matmul %100, %4, %cst_76 {dimension_numbers = #tpu.dot_dimension_numbers<[1], [0], [0], [1], [0, 0, 1, 1], [], []>} : vector<8x8xf32>, vector<8x4xf32>, vector<8x4xf32> -> vector<8x4xf32>
    %cst_77 = arith.constant dense<0.000000e+00> : vector<4x4xf32>
    %102 = tpu.matmul %8, %101, %cst_77 {dimension_numbers = #tpu.dot_dimension_numbers<[1], [0], [0], [1], [0, 0, 1, 1], [], []>} : vector<4x8xf32>, vector<8x4xf32>, vector<4x4xf32> -> vector<4x4xf32>
    %103 = arith.addf %102, %6 : vector<4x4xf32>
    %c3 = arith.constant 3 : index
    %c0_78 = arith.constant 0 : index
    %c0_79 = arith.constant 0 : index
    %104 = vector.load %arg11[%c3, %c0_78, %c0_79] : memref<8x2x8xf32, #tpu.memory_space<vmem>>, vector<1x2x8xf32>
    %105 = vector.shape_cast %104 : vector<1x2x8xf32> to vector<2x8xf32>
    %106 = vector.shape_cast %95 : vector<2x8xf32> to vector<1x2x8xf32>
    tpu.vector_store %arg11[%c3, %c0_78, %c0_79], %106 {strides = array<i32>} : memref<8x2x8xf32, #tpu.memory_space<vmem>>, vector<1x2x8xf32>,
    %c3_80 = arith.constant 3 : index
    %c0_81 = arith.constant 0 : index
    %c0_82 = arith.constant 0 : index
    %107 = vector.load %arg13[%c3_80, %c0_81, %c0_82] : memref<8x2x4xf32, #tpu.memory_space<vmem>>, vector<1x2x4xf32>
    %108 = vector.shape_cast %107 : vector<1x2x4xf32> to vector<2x4xf32>
    %109 = vector.shape_cast %97 : vector<2x4xf32> to vector<1x2x4xf32>
    tpu.vector_store %arg13[%c3_80, %c0_81, %c0_82], %109 {strides = array<i32>} : memref<8x2x4xf32, #tpu.memory_space<vmem>>, vector<1x2x4xf32>,
    %c3_83 = arith.constant 3 : index
    %c0_84 = arith.constant 0 : index
    %c0_85 = arith.constant 0 : index
    %110 = vector.load %arg12[%c3_83, %c0_84, %c0_85] : memref<8x8x8xf32, #tpu.memory_space<vmem>>, vector<1x8x8xf32>
    %111 = vector.shape_cast %110 : vector<1x8x8xf32> to vector<8x8xf32>
    %112 = vector.shape_cast %100 : vector<8x8xf32> to vector<1x8x8xf32>
    tpu.vector_store %arg12[%c3_83, %c0_84, %c0_85], %112 {strides = array<i32>} : memref<8x8x8xf32, #tpu.memory_space<vmem>>, vector<1x8x8xf32>,
    %c3_86 = arith.constant 3 : index
    %c0_87 = arith.constant 0 : index
    %c0_88 = arith.constant 0 : index
    %113 = vector.load %arg14[%c3_86, %c0_87, %c0_88] : memref<8x4x4xf32, #tpu.memory_space<vmem>>, vector<1x4x4xf32>
    %114 = vector.shape_cast %113 : vector<1x4x4xf32> to vector<4x4xf32>
    %115 = vector.shape_cast %103 : vector<4x4xf32> to vector<1x4x4xf32>
    tpu.vector_store %arg14[%c3_86, %c0_87, %c0_88], %115 {strides = array<i32>} : memref<8x4x4xf32, #tpu.memory_space<vmem>>, vector<1x4x4xf32>,
    %116 = vector.extract_strided_slice %17 {offsets = [8, 0], sizes = [2, 8], strides = [1, 1]} : vector<16x8xf32> to vector<2x8xf32>
    %cst_89 = arith.constant dense<0.000000e+00> : vector<2x8xf32>
    %117 = tpu.matmul %95, %3, %cst_89 {dimension_numbers = #tpu.dot_dimension_numbers<[1], [0], [0], [1], [0, 0, 1, 1], [], []>} : vector<2x8xf32>, vector<8x8xf32>, vector<2x8xf32> -> vector<2x8xf32>
    %118 = arith.addf %117, %116 : vector<2x8xf32>
    %119 = math.tanh %118 : vector<2x8xf32>
    %cst_90 = arith.constant dense<0.000000e+00> : vector<2x4xf32>
    %120 = tpu.matmul %119, %4, %cst_90 {dimension_numbers = #tpu.dot_dimension_numbers<[1], [0], [0], [1], [0, 0, 1, 1], [], []>} : vector<2x8xf32>, vector<8x4xf32>, vector<2x4xf32> -> vector<2x4xf32>
    %121 = arith.addf %120, %11 : vector<2x4xf32>
    %cst_91 = arith.constant dense<0.000000e+00> : vector<8x8xf32>
    %122 = tpu.matmul %100, %3, %cst_91 {dimension_numbers = #tpu.dot_dimension_numbers<[1], [0], [0], [1], [0, 0, 1, 1], [], []>} : vector<8x8xf32>, vector<8x8xf32>, vector<8x8xf32> -> vector<8x8xf32>
    %cst_92 = arith.constant dense<0.000000e+00> : vector<8x8xf32>
    %123 = tpu.matmul %7, %122, %cst_92 {dimension_numbers = #tpu.dot_dimension_numbers<[1], [0], [0], [1], [0, 0, 1, 1], [], []>} : vector<8x8xf32>, vector<8x8xf32>, vector<8x8xf32> -> vector<8x8xf32>
    %124 = arith.addf %123, %5 : vector<8x8xf32>
    %cst_93 = arith.constant dense<0.000000e+00> : vector<8x4xf32>
    %125 = tpu.matmul %124, %4, %cst_93 {dimension_numbers = #tpu.dot_dimension_numbers<[1], [0], [0], [1], [0, 0, 1, 1], [], []>} : vector<8x8xf32>, vector<8x4xf32>, vector<8x4xf32> -> vector<8x4xf32>
    %cst_94 = arith.constant dense<0.000000e+00> : vector<4x4xf32>
    %126 = tpu.matmul %8, %125, %cst_94 {dimension_numbers = #tpu.dot_dimension_numbers<[1], [0], [0], [1], [0, 0, 1, 1], [], []>} : vector<4x8xf32>, vector<8x4xf32>, vector<4x4xf32> -> vector<4x4xf32>
    %127 = arith.addf %126, %6 : vector<4x4xf32>
    %c4 = arith.constant 4 : index
    %c0_95 = arith.constant 0 : index
    %c0_96 = arith.constant 0 : index
    %128 = vector.load %arg11[%c4, %c0_95, %c0_96] : memref<8x2x8xf32, #tpu.memory_space<vmem>>, vector<1x2x8xf32>
    %129 = vector.shape_cast %128 : vector<1x2x8xf32> to vector<2x8xf32>
    %130 = vector.shape_cast %119 : vector<2x8xf32> to vector<1x2x8xf32>
    tpu.vector_store %arg11[%c4, %c0_95, %c0_96], %130 {strides = array<i32>} : memref<8x2x8xf32, #tpu.memory_space<vmem>>, vector<1x2x8xf32>,
    %c4_97 = arith.constant 4 : index
    %c0_98 = arith.constant 0 : index
    %c0_99 = arith.constant 0 : index
    %131 = vector.load %arg13[%c4_97, %c0_98, %c0_99] : memref<8x2x4xf32, #tpu.memory_space<vmem>>, vector<1x2x4xf32>
    %132 = vector.shape_cast %131 : vector<1x2x4xf32> to vector<2x4xf32>
    %133 = vector.shape_cast %121 : vector<2x4xf32> to vector<1x2x4xf32>
    tpu.vector_store %arg13[%c4_97, %c0_98, %c0_99], %133 {strides = array<i32>} : memref<8x2x4xf32, #tpu.memory_space<vmem>>, vector<1x2x4xf32>,
    %c4_100 = arith.constant 4 : index
    %c0_101 = arith.constant 0 : index
    %c0_102 = arith.constant 0 : index
    %134 = vector.load %arg12[%c4_100, %c0_101, %c0_102] : memref<8x8x8xf32, #tpu.memory_space<vmem>>, vector<1x8x8xf32>
    %135 = vector.shape_cast %134 : vector<1x8x8xf32> to vector<8x8xf32>
    %136 = vector.shape_cast %124 : vector<8x8xf32> to vector<1x8x8xf32>
    tpu.vector_store %arg12[%c4_100, %c0_101, %c0_102], %136 {strides = array<i32>} : memref<8x8x8xf32, #tpu.memory_space<vmem>>, vector<1x8x8xf32>,
    %c4_103 = arith.constant 4 : index
    %c0_104 = arith.constant 0 : index
    %c0_105 = arith.constant 0 : index
    %137 = vector.load %arg14[%c4_103, %c0_104, %c0_105] : memref<8x4x4xf32, #tpu.memory_space<vmem>>, vector<1x4x4xf32>
    %138 = vector.shape_cast %137 : vector<1x4x4xf32> to vector<4x4xf32>
    %139 = vector.shape_cast %127 : vector<4x4xf32> to vector<1x4x4xf32>
    tpu.vector_store %arg14[%c4_103, %c0_104, %c0_105], %139 {strides = array<i32>} : memref<8x4x4xf32, #tpu.memory_space<vmem>>, vector<1x4x4xf32>,
    %140 = vector.extract_strided_slice %17 {offsets = [10, 0], sizes = [2, 8], strides = [1, 1]} : vector<16x8xf32> to vector<2x8xf32>
    %cst_106 = arith.constant dense<0.000000e+00> : vector<2x8xf32>
    %141 = tpu.matmul %119, %3, %cst_106 {dimension_numbers = #tpu.dot_dimension_numbers<[1], [0], [0], [1], [0, 0, 1, 1], [], []>} : vector<2x8xf32>, vector<8x8xf32>, vector<2x8xf32> -> vector<2x8xf32>
    %142 = arith.addf %141, %140 : vector<2x8xf32>
    %143 = math.tanh %142 : vector<2x8xf32>
    %cst_107 = arith.constant dense<0.000000e+00> : vector<2x4xf32>
    %144 = tpu.matmul %143, %4, %cst_107 {dimension_numbers = #tpu.dot_dimension_numbers<[1], [0], [0], [1], [0, 0, 1, 1], [], []>} : vector<2x8xf32>, vector<8x4xf32>, vector<2x4xf32> -> vector<2x4xf32>
    %145 = arith.addf %144, %11 : vector<2x4xf32>
    %cst_108 = arith.constant dense<0.000000e+00> : vector<8x8xf32>
    %146 = tpu.matmul %124, %3, %cst_108 {dimension_numbers = #tpu.dot_dimension_numbers<[1], [0], [0], [1], [0, 0, 1, 1], [], []>} : vector<8x8xf32>, vector<8x8xf32>, vector<8x8xf32> -> vector<8x8xf32>
    %cst_109 = arith.constant dense<0.000000e+00> : vector<8x8xf32>
    %147 = tpu.matmul %7, %146, %cst_109 {dimension_numbers = #tpu.dot_dimension_numbers<[1], [0], [0], [1], [0, 0, 1, 1], [], []>} : vector<8x8xf32>, vector<8x8xf32>, vector<8x8xf32> -> vector<8x8xf32>
    %148 = arith.addf %147, %5 : vector<8x8xf32>
    %cst_110 = arith.constant dense<0.000000e+00> : vector<8x4xf32>
    %149 = tpu.matmul %148, %4, %cst_110 {dimension_numbers = #tpu.dot_dimension_numbers<[1], [0], [0], [1], [0, 0, 1, 1], [], []>} : vector<8x8xf32>, vector<8x4xf32>, vector<8x4xf32> -> vector<8x4xf32>
    %cst_111 = arith.constant dense<0.000000e+00> : vector<4x4xf32>
    %150 = tpu.matmul %8, %149, %cst_111 {dimension_numbers = #tpu.dot_dimension_numbers<[1], [0], [0], [1], [0, 0, 1, 1], [], []>} : vector<4x8xf32>, vector<8x4xf32>, vector<4x4xf32> -> vector<4x4xf32>
    %151 = arith.addf %150, %6 : vector<4x4xf32>
    %c5 = arith.constant 5 : index
    %c0_112 = arith.constant 0 : index
    %c0_113 = arith.constant 0 : index
    %152 = vector.load %arg11[%c5, %c0_112, %c0_113] : memref<8x2x8xf32, #tpu.memory_space<vmem>>, vector<1x2x8xf32>
    %153 = vector.shape_cast %152 : vector<1x2x8xf32> to vector<2x8xf32>
    %154 = vector.shape_cast %143 : vector<2x8xf32> to vector<1x2x8xf32>
    tpu.vector_store %arg11[%c5, %c0_112, %c0_113], %154 {strides = array<i32>} : memref<8x2x8xf32, #tpu.memory_space<vmem>>, vector<1x2x8xf32>,
    %c5_114 = arith.constant 5 : index
    %c0_115 = arith.constant 0 : index
    %c0_116 = arith.constant 0 : index
    %155 = vector.load %arg13[%c5_114, %c0_115, %c0_116] : memref<8x2x4xf32, #tpu.memory_space<vmem>>, vector<1x2x4xf32>
    %156 = vector.shape_cast %155 : vector<1x2x4xf32> to vector<2x4xf32>
    %157 = vector.shape_cast %145 : vector<2x4xf32> to vector<1x2x4xf32>
    tpu.vector_store %arg13[%c5_114, %c0_115, %c0_116], %157 {strides = array<i32>} : memref<8x2x4xf32, #tpu.memory_space<vmem>>, vector<1x2x4xf32>,
    %c5_117 = arith.constant 5 : index
    %c0_118 = arith.constant 0 : index
    %c0_119 = arith.constant 0 : index
    %158 = vector.load %arg12[%c5_117, %c0_118, %c0_119] : memref<8x8x8xf32, #tpu.memory_space<vmem>>, vector<1x8x8xf32>
    %159 = vector.shape_cast %158 : vector<1x8x8xf32> to vector<8x8xf32>
    %160 = vector.shape_cast %148 : vector<8x8xf32> to vector<1x8x8xf32>
    tpu.vector_store %arg12[%c5_117, %c0_118, %c0_119], %160 {strides = array<i32>} : memref<8x8x8xf32, #tpu.memory_space<vmem>>, vector<1x8x8xf32>,
    %c5_120 = arith.constant 5 : index
    %c0_121 = arith.constant 0 : index
    %c0_122 = arith.constant 0 : index
    %161 = vector.load %arg14[%c5_120, %c0_121, %c0_122] : memref<8x4x4xf32, #tpu.memory_space<vmem>>, vector<1x4x4xf32>
    %162 = vector.shape_cast %161 : vector<1x4x4xf32> to vector<4x4xf32>
    %163 = vector.shape_cast %151 : vector<4x4xf32> to vector<1x4x4xf32>
    tpu.vector_store %arg14[%c5_120, %c0_121, %c0_122], %163 {strides = array<i32>} : memref<8x4x4xf32, #tpu.memory_space<vmem>>, vector<1x4x4xf32>,
    %164 = vector.extract_strided_slice %17 {offsets = [12, 0], sizes = [2, 8], strides = [1, 1]} : vector<16x8xf32> to vector<2x8xf32>
    %cst_123 = arith.constant dense<0.000000e+00> : vector<2x8xf32>
    %165 = tpu.matmul %143, %3, %cst_123 {dimension_numbers = #tpu.dot_dimension_numbers<[1], [0], [0], [1], [0, 0, 1, 1], [], []>} : vector<2x8xf32>, vector<8x8xf32>, vector<2x8xf32> -> vector<2x8xf32>
    %166 = arith.addf %165, %164 : vector<2x8xf32>
    %167 = math.tanh %166 : vector<2x8xf32>
    %cst_124 = arith.constant dense<0.000000e+00> : vector<2x4xf32>
    %168 = tpu.matmul %167, %4, %cst_124 {dimension_numbers = #tpu.dot_dimension_numbers<[1], [0], [0], [1], [0, 0, 1, 1], [], []>} : vector<2x8xf32>, vector<8x4xf32>, vector<2x4xf32> -> vector<2x4xf32>
    %169 = arith.addf %168, %11 : vector<2x4xf32>
    %cst_125 = arith.constant dense<0.000000e+00> : vector<8x8xf32>
    %170 = tpu.matmul %148, %3, %cst_125 {dimension_numbers = #tpu.dot_dimension_numbers<[1], [0], [0], [1], [0, 0, 1, 1], [], []>} : vector<8x8xf32>, vector<8x8xf32>, vector<8x8xf32> -> vector<8x8xf32>
    %cst_126 = arith.constant dense<0.000000e+00> : vector<8x8xf32>
    %171 = tpu.matmul %7, %170, %cst_126 {dimension_numbers = #tpu.dot_dimension_numbers<[1], [0], [0], [1], [0, 0, 1, 1], [], []>} : vector<8x8xf32>, vector<8x8xf32>, vector<8x8xf32> -> vector<8x8xf32>
    %172 = arith.addf %171, %5 : vector<8x8xf32>
    %cst_127 = arith.constant dense<0.000000e+00> : vector<8x4xf32>
    %173 = tpu.matmul %172, %4, %cst_127 {dimension_numbers = #tpu.dot_dimension_numbers<[1], [0], [0], [1], [0, 0, 1, 1], [], []>} : vector<8x8xf32>, vector<8x4xf32>, vector<8x4xf32> -> vector<8x4xf32>
    %cst_128 = arith.constant dense<0.000000e+00> : vector<4x4xf32>
    %174 = tpu.matmul %8, %173, %cst_128 {dimension_numbers = #tpu.dot_dimension_numbers<[1], [0], [0], [1], [0, 0, 1, 1], [], []>} : vector<4x8xf32>, vector<8x4xf32>, vector<4x4xf32> -> vector<4x4xf32>
    %175 = arith.addf %174, %6 : vector<4x4xf32>
    %c6 = arith.constant 6 : index
    %c0_129 = arith.constant 0 : index
    %c0_130 = arith.constant 0 : index
    %176 = vector.load %arg11[%c6, %c0_129, %c0_130] : memref<8x2x8xf32, #tpu.memory_space<vmem>>, vector<1x2x8xf32>
    %177 = vector.shape_cast %176 : vector<1x2x8xf32> to vector<2x8xf32>
    %178 = vector.shape_cast %167 : vector<2x8xf32> to vector<1x2x8xf32>
    tpu.vector_store %arg11[%c6, %c0_129, %c0_130], %178 {strides = array<i32>} : memref<8x2x8xf32, #tpu.memory_space<vmem>>, vector<1x2x8xf32>,
    %c6_131 = arith.constant 6 : index
    %c0_132 = arith.constant 0 : index
    %c0_133 = arith.constant 0 : index
    %179 = vector.load %arg13[%c6_131, %c0_132, %c0_133] : memref<8x2x4xf32, #tpu.memory_space<vmem>>, vector<1x2x4xf32>
    %180 = vector.shape_cast %179 : vector<1x2x4xf32> to vector<2x4xf32>
    %181 = vector.shape_cast %169 : vector<2x4xf32> to vector<1x2x4xf32>
    tpu.vector_store %arg13[%c6_131, %c0_132, %c0_133], %181 {strides = array<i32>} : memref<8x2x4xf32, #tpu.memory_space<vmem>>, vector<1x2x4xf32>,
    %c6_134 = arith.constant 6 : index
    %c0_135 = arith.constant 0 : index
    %c0_136 = arith.constant 0 : index
    %182 = vector.load %arg12[%c6_134, %c0_135, %c0_136] : memref<8x8x8xf32, #tpu.memory_space<vmem>>, vector<1x8x8xf32>
    %183 = vector.shape_cast %182 : vector<1x8x8xf32> to vector<8x8xf32>
    %184 = vector.shape_cast %172 : vector<8x8xf32> to vector<1x8x8xf32>
    tpu.vector_store %arg12[%c6_134, %c0_135, %c0_136], %184 {strides = array<i32>} : memref<8x8x8xf32, #tpu.memory_space<vmem>>, vector<1x8x8xf32>,
    %c6_137 = arith.constant 6 : index
    %c0_138 = arith.constant 0 : index
    %c0_139 = arith.constant 0 : index
    %185 = vector.load %arg14[%c6_137, %c0_138, %c0_139] : memref<8x4x4xf32, #tpu.memory_space<vmem>>, vector<1x4x4xf32>
    %186 = vector.shape_cast %185 : vector<1x4x4xf32> to vector<4x4xf32>
    %187 = vector.shape_cast %175 : vector<4x4xf32> to vector<1x4x4xf32>
    tpu.vector_store %arg14[%c6_137, %c0_138, %c0_139], %187 {strides = array<i32>} : memref<8x4x4xf32, #tpu.memory_space<vmem>>, vector<1x4x4xf32>,
    %188 = vector.extract_strided_slice %17 {offsets = [14, 0], sizes = [2, 8], strides = [1, 1]} : vector<16x8xf32> to vector<2x8xf32>
    %cst_140 = arith.constant dense<0.000000e+00> : vector<2x8xf32>
    %189 = tpu.matmul %167, %3, %cst_140 {dimension_numbers = #tpu.dot_dimension_numbers<[1], [0], [0], [1], [0, 0, 1, 1], [], []>} : vector<2x8xf32>, vector<8x8xf32>, vector<2x8xf32> -> vector<2x8xf32>
    %190 = arith.addf %189, %188 : vector<2x8xf32>
    %191 = math.tanh %190 : vector<2x8xf32>
    %cst_141 = arith.constant dense<0.000000e+00> : vector<2x4xf32>
    %192 = tpu.matmul %191, %4, %cst_141 {dimension_numbers = #tpu.dot_dimension_numbers<[1], [0], [0], [1], [0, 0, 1, 1], [], []>} : vector<2x8xf32>, vector<8x4xf32>, vector<2x4xf32> -> vector<2x4xf32>
    %193 = arith.addf %192, %11 : vector<2x4xf32>
    %cst_142 = arith.constant dense<0.000000e+00> : vector<8x8xf32>
    %194 = tpu.matmul %172, %3, %cst_142 {dimension_numbers = #tpu.dot_dimension_numbers<[1], [0], [0], [1], [0, 0, 1, 1], [], []>} : vector<8x8xf32>, vector<8x8xf32>, vector<8x8xf32> -> vector<8x8xf32>
    %cst_143 = arith.constant dense<0.000000e+00> : vector<8x8xf32>
    %195 = tpu.matmul %7, %194, %cst_143 {dimension_numbers = #tpu.dot_dimension_numbers<[1], [0], [0], [1], [0, 0, 1, 1], [], []>} : vector<8x8xf32>, vector<8x8xf32>, vector<8x8xf32> -> vector<8x8xf32>
    %196 = arith.addf %195, %5 : vector<8x8xf32>
    %cst_144 = arith.constant dense<0.000000e+00> : vector<8x4xf32>
    %197 = tpu.matmul %196, %4, %cst_144 {dimension_numbers = #tpu.dot_dimension_numbers<[1], [0], [0], [1], [0, 0, 1, 1], [], []>} : vector<8x8xf32>, vector<8x4xf32>, vector<8x4xf32> -> vector<8x4xf32>
    %cst_145 = arith.constant dense<0.000000e+00> : vector<4x4xf32>
    %198 = tpu.matmul %8, %197, %cst_145 {dimension_numbers = #tpu.dot_dimension_numbers<[1], [0], [0], [1], [0, 0, 1, 1], [], []>} : vector<4x8xf32>, vector<8x4xf32>, vector<4x4xf32> -> vector<4x4xf32>
    %199 = arith.addf %198, %6 : vector<4x4xf32>
    %c7 = arith.constant 7 : index
    %c0_146 = arith.constant 0 : index
    %c0_147 = arith.constant 0 : index
    %200 = vector.load %arg11[%c7, %c0_146, %c0_147] : memref<8x2x8xf32, #tpu.memory_space<vmem>>, vector<1x2x8xf32>
    %201 = vector.shape_cast %200 : vector<1x2x8xf32> to vector<2x8xf32>
    %202 = vector.shape_cast %191 : vector<2x8xf32> to vector<1x2x8xf32>
    tpu.vector_store %arg11[%c7, %c0_146, %c0_147], %202 {strides = array<i32>} : memref<8x2x8xf32, #tpu.memory_space<vmem>>, vector<1x2x8xf32>,
    %c7_148 = arith.constant 7 : index
    %c0_149 = arith.constant 0 : index
    %c0_150 = arith.constant 0 : index
    %203 = vector.load %arg13[%c7_148, %c0_149, %c0_150] : memref<8x2x4xf32, #tpu.memory_space<vmem>>, vector<1x2x4xf32>
    %204 = vector.shape_cast %203 : vector<1x2x4xf32> to vector<2x4xf32>
    %205 = vector.shape_cast %193 : vector<2x4xf32> to vector<1x2x4xf32>
    tpu.vector_store %arg13[%c7_148, %c0_149, %c0_150], %205 {strides = array<i32>} : memref<8x2x4xf32, #tpu.memory_space<vmem>>, vector<1x2x4xf32>,
    %c7_151 = arith.constant 7 : index
    %c0_152 = arith.constant 0 : index
    %c0_153 = arith.constant 0 : index
    %206 = vector.load %arg12[%c7_151, %c0_152, %c0_153] : memref<8x8x8xf32, #tpu.memory_space<vmem>>, vector<1x8x8xf32>
    %207 = vector.shape_cast %206 : vector<1x8x8xf32> to vector<8x8xf32>
    %208 = vector.shape_cast %196 : vector<8x8xf32> to vector<1x8x8xf32>
    tpu.vector_store %arg12[%c7_151, %c0_152, %c0_153], %208 {strides = array<i32>} : memref<8x8x8xf32, #tpu.memory_space<vmem>>, vector<1x8x8xf32>,
    %c7_154 = arith.constant 7 : index
    %c0_155 = arith.constant 0 : index
    %c0_156 = arith.constant 0 : index
    %209 = vector.load %arg14[%c7_154, %c0_155, %c0_156] : memref<8x4x4xf32, #tpu.memory_space<vmem>>, vector<1x4x4xf32>
    %210 = vector.shape_cast %209 : vector<1x4x4xf32> to vector<4x4xf32>
    %211 = vector.shape_cast %199 : vector<4x4xf32> to vector<1x4x4xf32>
    tpu.vector_store %arg14[%c7_154, %c0_155, %c0_156], %211 {strides = array<i32>} : memref<8x4x4xf32, #tpu.memory_space<vmem>>, vector<1x4x4xf32>,
    %c0_157 = arith.constant 0 : index
    %c0_158 = arith.constant 0 : index
    %212 = vector.load %arg15[%c0_157, %c0_158] : memref<2x8xf32, #tpu.memory_space<vmem>>, vector<2x8xf32>
    tpu.vector_store %arg15[%c0_157, %c0_158], %191 {strides = array<i32>} : memref<2x8xf32, #tpu.memory_space<vmem>>, vector<2x8xf32>,
    %c0_159 = arith.constant 0 : index
    %c0_160 = arith.constant 0 : index
    %213 = vector.load %arg16[%c0_159, %c0_160] : memref<8x8xf32, #tpu.memory_space<vmem>>, vector<8x8xf32>
    tpu.vector_store %arg16[%c0_159, %c0_160], %196 {strides = array<i32>} : memref<8x8xf32, #tpu.memory_space<vmem>>, vector<8x8xf32>,
    return
  }
  func.func @transform_0(%arg0: i32) -> (i32, i32) {
    %c0_i32 = arith.constant 0 : i32
    %c0_i32_0 = arith.constant 0 : i32
    return %arg0, %c0_i32 : i32, i32
  }
  func.func @transform_1(%arg0: i32) -> (i32, i32) {
    %c0_i32 = arith.constant 0 : i32
    %c0_i32_0 = arith.constant 0 : i32
    %c0_i32_1 = arith.constant 0 : i32
    return %c0_i32, %c0_i32_0 : i32, i32
  }
  func.func @transform_2(%arg0: i32) -> (i32, i32) {
    %c0_i32 = arith.constant 0 : i32
    %c0_i32_0 = arith.constant 0 : i32
    %c0_i32_1 = arith.constant 0 : i32
    return %c0_i32, %c0_i32_0 : i32, i32
  }
  func.func @transform_3(%arg0: i32) -> (i32, i32) {
    %c0_i32 = arith.constant 0 : i32
    %c0_i32_0 = arith.constant 0 : i32
    %c0_i32_1 = arith.constant 0 : i32
    return %c0_i32, %c0_i32_0 : i32, i32
  }
  func.func @transform_4(%arg0: i32) -> (i32, i32) {
    %c0_i32 = arith.constant 0 : i32
    %c0_i32_0 = arith.constant 0 : i32
    %c0_i32_1 = arith.constant 0 : i32
    return %c0_i32, %c0_i32_0 : i32, i32
  }
  func.func @transform_5(%arg0: i32) -> (i32, i32) {
    %c0_i32 = arith.constant 0 : i32
    %c0_i32_0 = arith.constant 0 : i32
    %c0_i32_1 = arith.constant 0 : i32
    return %c0_i32, %c0_i32_0 : i32, i32
  }
  func.func @transform_6(%arg0: i32) -> (i32, i32) {
    %c0_i32 = arith.constant 0 : i32
    %c0_i32_0 = arith.constant 0 : i32
    %c0_i32_1 = arith.constant 0 : i32
    return %c0_i32, %c0_i32_0 : i32, i32
  }
  func.func @transform_7(%arg0: i32) -> (i32, i32) {
    %c0_i32 = arith.constant 0 : i32
    %c0_i32_0 = arith.constant 0 : i32
    %c0_i32_1 = arith.constant 0 : i32
    return %c0_i32, %c0_i32_0 : i32, i32
  }
  func.func @transform_8(%arg0: i32) -> (i32, i32) {
    %c0_i32 = arith.constant 0 : i32
    %c0_i32_0 = arith.constant 0 : i32
    %c0_i32_1 = arith.constant 0 : i32
    return %c0_i32, %c0_i32_0 : i32, i32
  }
  func.func @transform_9(%arg0: i32) -> (i32, i32) {
    %c0_i32 = arith.constant 0 : i32
    %c0_i32_0 = arith.constant 0 : i32
    %c0_i32_1 = arith.constant 0 : i32
    return %c0_i32, %c0_i32_0 : i32, i32
  }
  func.func @transform_10(%arg0: i32) -> (i32, i32, i32) {
    %c0_i32 = arith.constant 0 : i32
    %c0_i32_0 = arith.constant 0 : i32
    %c0_i32_1 = arith.constant 0 : i32
    return %arg0, %c0_i32, %c0_i32_0 : i32, i32, i32
  }
  func.func @transform_11(%arg0: i32) -> (i32, i32, i32) {
    %c0_i32 = arith.constant 0 : i32
    %c0_i32_0 = arith.constant 0 : i32
    %c0_i32_1 = arith.constant 0 : i32
    return %arg0, %c0_i32, %c0_i32_0 : i32, i32, i32
  }
  func.func @transform_12(%arg0: i32) -> (i32, i32, i32) {
    %c0_i32 = arith.constant 0 : i32
    %c0_i32_0 = arith.constant 0 : i32
    %c0_i32_1 = arith.constant 0 : i32
    return %arg0, %c0_i32, %c0_i32_0 : i32, i32, i32
  }
  func.func @transform_13(%arg0: i32) -> (i32, i32, i32) {
    %c0_i32 = arith.constant 0 : i32
    %c0_i32_0 = arith.constant 0 : i32
    %c0_i32_1 = arith.constant 0 : i32
    return %arg0, %c0_i32, %c0_i32_0 : i32, i32, i32
  }
}

</mosaic_0001>

<llo_original>
// kernel: tpu_custom_call.1
$region0: #{tpu_custom_call.1}
  #allocation0 [shape = 'u32[]', space=smem, size = 0x4, offset = 0x4, fixed_abs, tag = 'smem constant byte address 0x4 - core index']
  #allocation1 [shape = 'u32[144,128]{1,0:T(1,128)}', space=vmem, size = 0x12000, scoped, tag = 'internal scratch']
  #allocation2 [shape = 'f32[2,8]{1,0:T(2,128)}', space=vmem, size = 0x400, scoped, tag = 'scratch operand']
  #allocation3 [shape = 'f32[8,8]{1,0:T(8,128)}', space=vmem, size = 0x1000, scoped, tag = 'scratch operand']
  %s0 = inlined_call_operand.vmem [shape: f32[16,8], index: 0, kind: input, shape index: {}]
  %s1 = inlined_call_operand.vmem [shape: f32[2,8], index: 1, kind: input, shape index: {}]
  %s2 = inlined_call_operand.vmem [shape: f32[8,8], index: 2, kind: input, shape index: {}]
  %s3 = inlined_call_operand.vmem [shape: f32[8,8], index: 3, kind: input, shape index: {}]
  %s4 = inlined_call_operand.vmem [shape: f32[1,8], index: 4, kind: input, shape index: {}]
  %s5 = inlined_call_operand.vmem [shape: f32[8,4], index: 5, kind: input, shape index: {}]
  %s6 = inlined_call_operand.vmem [shape: f32[1,4], index: 6, kind: input, shape index: {}]
  %s7 = inlined_call_operand.vmem [shape: f32[8,8], index: 7, kind: input, shape index: {}]
  %s8 = inlined_call_operand.vmem [shape: f32[4,4], index: 8, kind: input, shape index: {}]
  %s9 = inlined_call_operand.vmem [shape: f32[8,8], index: 9, kind: input, shape index: {}]
  %s10 = inlined_call_operand.hbm [shape: f32[8,2,8], index: 10, kind: output, shape index: {0}]
  %s11 = inlined_call_operand.hbm [shape: f32[8,8,8], index: 11, kind: output, shape index: {1}]
  %s12 = inlined_call_operand.vmem [shape: f32[8,2,4], index: 12, kind: output, shape index: {2}]
  %s13 = inlined_call_operand.vmem [shape: f32[8,4,4], index: 13, kind: output, shape index: {3}]
  %14 = xla_tuple %s10, %s11, %s12, %s13
  %s15 = sld [smem:[#allocation0]]
  $region78: #{tpu_custom_call.1} parent=0
    _
  %s17 = ssub.s32 1, %s15
  %s18 = scalar_select 0, %s17, %s15
  $region1: #{tpu_custom_call.1} parent=0
    #allocation4 [shape = 'u8[8192]{0}', space=vmem, size = 0x2000, scoped, tag = 'output window, operand 0, single buffered']
    #allocation5 [shape = 's32[1]{0}', space=sflag, size = 0x4, scoped, tag = 'scoped memory for tpu_custom_call.1']
    #allocation6 [shape = 'u8[32768]{0}', space=vmem, size = 0x8000, scoped, tag = 'output window, operand 1, single buffered']
    #allocation7 [shape = 's32[1]{0}', space=sflag, size = 0x4, scoped, tag = 'scoped memory for tpu_custom_call.1']
    %19 = vsyncpa [#allocation5], 0
    %20 = vsyncpa [#allocation7], 0
    // Predicated region
    $region2: #{tpu_custom_call.1} parent=1 // pred_check
      _
    $region3: #{tpu_custom_call.1} parent=1 // pred_check_branch
      %22 = sbr.rel (0) target = $region5
    $region4: #{tpu_custom_call.1} parent=1 // pred_region
      _
    $region5: #{tpu_custom_call.1} parent=1 // pred_fallthru
      _
    // Predicated region
    $region6: #{tpu_custom_call.1} parent=1 // pred_check
      _
    $region7: #{tpu_custom_call.1} parent=1 // pred_check_branch
      %24 = sbr.rel (0) target = $region9
    $region8: #{tpu_custom_call.1} parent=1 // pred_region
      _
    $region9: #{tpu_custom_call.1} parent=1 // pred_fallthru
      _
    // Predicated region
    $region10: #{tpu_custom_call.1} parent=1 // pred_check
      _
    $region11: #{tpu_custom_call.1} parent=1 // pred_check_branch
      %26 = sbr.rel (0) target = $region13
    $region12: #{tpu_custom_call.1} parent=1 // pred_region
      _
    $region13: #{tpu_custom_call.1} parent=1 // pred_fallthru
      _
    // Predicated region
    $region14: #{tpu_custom_call.1} parent=1 // pred_check
      _
    $region15: #{tpu_custom_call.1} parent=1 // pred_check_branch
      %28 = sbr.rel (0) target = $region17
    $region16: #{tpu_custom_call.1} parent=1 // pred_region
      _
    $region17: #{tpu_custom_call.1} parent=1 // pred_fallthru
      _
    // Predicated region
    $region18: #{tpu_custom_call.1} parent=1 // pred_check
      _
    $region19: #{tpu_custom_call.1} parent=1 // pred_check_branch
      %30 = sbr.rel (0) target = $region21
    $region20: #{tpu_custom_call.1} parent=1 // pred_region
      _
    $region21: #{tpu_custom_call.1} parent=1 // pred_fallthru
      _
    // Predicated region
    $region22: #{tpu_custom_call.1} parent=1 // pred_check
      _
    $region23: #{tpu_custom_call.1} parent=1 // pred_check_branch
      %32 = sbr.rel (0) target = $region25
    $region24: #{tpu_custom_call.1} parent=1 // pred_region
      _
    $region25: #{tpu_custom_call.1} parent=1 // pred_fallthru
      _
    // Predicated region
    $region26: #{tpu_custom_call.1} parent=1 // pred_check
      _
    $region27: #{tpu_custom_call.1} parent=1 // pred_check_branch
      %34 = sbr.rel (0) target = $region29
    $region28: #{tpu_custom_call.1} parent=1 // pred_region
      _
    $region29: #{tpu_custom_call.1} parent=1 // pred_fallthru
      _
    // Predicated region
    $region30: #{tpu_custom_call.1} parent=1 // pred_check
      _
    $region31: #{tpu_custom_call.1} parent=1 // pred_check_branch
      %36 = sbr.rel (0) target = $region33
    $region32: #{tpu_custom_call.1} parent=1 // pred_region
      _
    $region33: #{tpu_custom_call.1} parent=1 // pred_fallthru
      _
    // Predicated region
    $region34: #{tpu_custom_call.1} parent=1 // pred_check
      _
    $region35: #{tpu_custom_call.1} parent=1 // pred_check_branch
      %38 = sbr.rel (0) target = $region37
    $region36: #{tpu_custom_call.1} parent=1 // pred_region
      _
    $region37: #{tpu_custom_call.1} parent=1 // pred_fallthru
      _
    // Predicated region
    $region38: #{tpu_custom_call.1} parent=1 // pred_check
      _
    $region39: #{tpu_custom_call.1} parent=1 // pred_check_branch
      %40 = sbr.rel (0) target = $region41
    $region40: #{tpu_custom_call.1} parent=1 // pred_region
      _
    $region41: #{tpu_custom_call.1} parent=1 // pred_fallthru
      _
    %p41 = scmp.eq.s32.totalorder 0, 0
    // Predicated region
    $region42: #{tpu_custom_call.1} parent=1 // pred_check
      %p42 = pneg %p41
    $region43: #{tpu_custom_call.1} parent=1 // pred_check_branch
      %44 = sbr.rel (%p42) target = $region45
    $region44: #{tpu_custom_call.1} parent=1 // pred_region
      %v45 = vld [vmem:[%s1] sm:$0x3]
      %vm46 = vcmask 58368
      %47 = vst.msk [vmem:[#allocation2] sm:$0x3] %vm46, %v45
      %v48 = vld [vmem:[%s9] sm:$0xff]
      %vm49 = vcmask 64512
      %50 = vst.msk [vmem:[#allocation3] sm:$0xff] %vm49, %v48
    $region45: #{tpu_custom_call.1} parent=1 // pred_fallthru
      _
    %v51 = vld [vmem:[%s2] sm:$0xff]
    %v52 = vld [vmem:[%s5] sm:$0xff]
    %v53 = vld [vmem:[%s7] sm:$0xff]
    %v54 = vld [vmem:[%s8] sm:$0xf]
    %55 = vxpose.xlu0.b32.start [1/16] %v51, 128
    %56 = vxpose.xlu0.b32.cont [2/16] 0.0, 128
    %57 = vxpose.xlu0.b32.cont [3/16] 0.0, 128
    %58 = vxpose.xlu0.b32.cont [4/16] 0.0, 128
    %59 = vxpose.xlu0.b32.cont [5/16] 0.0, 128
    %60 = vxpose.xlu0.b32.cont [6/16] 0.0, 128
    %61 = vxpose.xlu0.b32.cont [7/16] 0.0, 128
    %62 = vxpose.xlu0.b32.cont [8/16] 0.0, 128
    %63 = vxpose.xlu0.b32.cont [9/16] 0.0, 128
    %64 = vxpose.xlu0.b32.cont [10/16] 0.0, 128
    %65 = vxpose.xlu0.b32.cont [11/16] 0.0, 128
    %66 = vxpose.xlu0.b32.cont [12/16] 0.0, 128
    %67 = vxpose.xlu0.b32.cont [13/16] 0.0, 128
    %68 = vxpose.xlu0.b32.cont [14/16] 0.0, 128
    %69 = vxpose.xlu0.b32.cont [15/16] 0.0, 128
    %70 = vxpose.xlu0.b32.end [16/16] 0.0, 128
    %v71 = vpop.trf.xlu0
    %v72 = vpop.trf.xlu0
    %v73 = vpop.trf.xlu0
    %v74 = vpop.trf.xlu0
    %v75 = vpop.trf.xlu0
    %v76 = vpop.trf.xlu0
    %v77 = vpop.trf.xlu0
    %v78 = vpop.trf.xlu0
    %v79 = vpop.trf.xlu0
    %v80 = vpop.trf.xlu0
    %v81 = vpop.trf.xlu0
    %v82 = vpop.trf.xlu0
    %v83 = vpop.trf.xlu0
    %v84 = vpop.trf.xlu0
    %v85 = vpop.trf.xlu0
    %v86 = vpop.trf.xlu0
    %87 = vxpose.xlu0.b32.start [1/16] %v52, 128
    %88 = vxpose.xlu0.b32.cont [2/16] 0.0, 128
    %89 = vxpose.xlu0.b32.cont [3/16] 0.0, 128
    %90 = vxpose.xlu0.b32.cont [4/16] 0.0, 128
    %91 = vxpose.xlu0.b32.cont [5/16] 0.0, 128
    %92 = vxpose.xlu0.b32.cont [6/16] 0.0, 128
    %93 = vxpose.xlu0.b32.cont [7/16] 0.0, 128
    %94 = vxpose.xlu0.b32.cont [8/16] 0.0, 128
    %95 = vxpose.xlu0.b32.cont [9/16] 0.0, 128
    %96 = vxpose.xlu0.b32.cont [10/16] 0.0, 128
    %97 = vxpose.xlu0.b32.cont [11/16] 0.0, 128
    %98 = vxpose.xlu0.b32.cont [12/16] 0.0, 128
    %99 = vxpose.xlu0.b32.cont [13/16] 0.0, 128
    %100 = vxpose.xlu0.b32.cont [14/16] 0.0, 128
    %101 = vxpose.xlu0.b32.cont [15/16] 0.0, 128
    %102 = vxpose.xlu0.b32.end [16/16] 0.0, 128
    %v103 = vpop.trf.xlu0
    %v104 = vpop.trf.xlu0
    %v105 = vpop.trf.xlu0
    %v106 = vpop.trf.xlu0
    %v107 = vpop.trf.xlu0
    %v108 = vpop.trf.xlu0
    %v109 = vpop.trf.xlu0
    %v110 = vpop.trf.xlu0
    %v111 = vpop.trf.xlu0
    %v112 = vpop.trf.xlu0
    %v113 = vpop.trf.xlu0
    %v114 = vpop.trf.xlu0
    %v115 = vpop.trf.xlu0
    %v116 = vpop.trf.xlu0
    %v117 = vpop.trf.xlu0
    %v118 = vpop.trf.xlu0
    %v119 = vld [vmem:[%s6] sm:$0x1]
    %v121 = vlaneseq
    %v122 = vshrl.u32 %v121, 7
    %v123 = vsub.s32 0, %v122
    %v124 = vrot.slane %v119, %v123
    %v126 = vld [vmem:[%s0] sm:$0xff]
    %v127 = vld [vmem:[%s0 + $0x8] sm:$0xff]
    %v128 = vld [vmem:[%s3] sm:$0xff]
    %v129 = vld [vmem:[%s4] sm:$0x1]
    %v131 = vlaneseq
    %v132 = vshrl.u32 %v131, 7
    %v133 = vsub.s32 0, %v132
    %v134 = vrot.slane %v129, %v133
    %vm136 = vcmask 64512
    %v138 = vsel %vm136, %v126, 0
    %v141 = vsel %vm136, %v127, 0
    %143 = vmatprep.subr.mxu0 0.0
    %144 = vmatpush1.msra.mxu0 %v128
    %145 = vmatprep.subr.mxu0 0.0
    %146 = vmatpush1.msra.mxu0 0.0
    %147 = vmatprep.subr.mxu0 0.0
    %148 = vmatpush1.msra.mxu0 0.0
    %149 = vmatprep.subr.mxu0 0.0
    %150 = vmatpush1.msra.mxu0 0.0
    %151 = vmatprep.subr.mxu0 0.0
    %152 = vmatpush1.msra.mxu0 0.0
    %153 = vmatprep.subr.mxu0 0.0
    %154 = vmatpush1.msra.mxu0 0.0
    %155 = vmatprep.subr.mxu0 0.0
    %156 = vmatpush1.msra.mxu0 0.0
    %157 = vmatprep.subr.mxu0 0.0
    %158 = vmatpush1.msra.mxu0 0.0
    %159 = vmatprep.subr.mxu0 0.0
    %160 = vmatpush1.msra.mxu0 0.0
    %161 = vmatprep.subr.mxu0 0.0
    %162 = vmatpush1.msra.mxu0 0.0
    %163 = vmatprep.subr.mxu0 0.0
    %164 = vmatpush1.msra.mxu0 0.0
    %165 = vmatprep.subr.mxu0 0.0
    %166 = vmatpush1.msra.mxu0 0.0
    %167 = vmatprep.subr.mxu0 0.0
    %168 = vmatpush1.msra.mxu0 0.0
    %169 = vmatprep.subr.mxu0 0.0
    %170 = vmatpush1.msra.mxu0 0.0
    %171 = vmatprep.subr.mxu0 0.0
    %172 = vmatpush1.msra.mxu0 0.0
    %173 = vmatprep.subr.mxu0 0.0
    %174 = vmatpush1.msra.mxu0 0.0
    %175 = vmatprep.subr.mxu0 0.0
    %176 = vmatpush1.msra.mxu0 0.0
    %177 = vmatprep.subr.mxu0 0.0
    %178 = vmatpush1.msra.mxu0 0.0
    %179 = vmatprep.subr.mxu0 0.0
    %180 = vmatpush1.msra.mxu0 0.0
    %181 = vmatprep.subr.mxu0 0.0
    %182 = vmatpush1.msra.mxu0 0.0
    %183 = vmatprep.subr.mxu0 0.0
    %184 = vmatpush1.msra.mxu0 0.0
    %185 = vmatprep.subr.mxu0 0.0
    %186 = vmatpush1.msra.mxu0 0.0
    %187 = vmatprep.subr.mxu0 0.0
    %188 = vmatpush1.msra.mxu0 0.0
    %189 = vmatprep.subr.mxu0 0.0
    %190 = vmatpush1.msra.mxu0 0.0
    %191 = vmatprep.subr.mxu0 0.0
    %192 = vmatpush1.msra.mxu0 0.0
    %193 = vmatprep.subr.mxu0 0.0
    %194 = vmatpush1.msra.mxu0 0.0
    %195 = vmatprep.subr.mxu0 0.0
    %196 = vmatpush1.msra.mxu0 0.0
    %197 = vmatprep.subr.mxu0 0.0
    %198 = vmatpush1.msra.mxu0 0.0
    %199 = vmatprep.subr.mxu0 0.0
    %200 = vmatpush1.msra.mxu0 0.0
    %201 = vmatprep.subr.mxu0 0.0
    %202 = vmatpush1.msra.mxu0 0.0
    %203 = vmatprep.subr.mxu0 0.0
    %204 = vmatpush1.msra.mxu0 0.0
    %205 = vmatprep.subr.mxu0 0.0
    %206 = vmatpush1.msra.mxu0 0.0
    %207 = vmatprep.mubr.f32.mxu0 0.0
    %208 = vmatmul.mubr.f32.gmra.mrb[0].mxu0 %v138
    %v209 = vpop.f32.mrb[0].mxu0
    %v210 = vadd.f32 %v134, %v209
    %v211 = vpop.f32.mrb[0].mxu0
    %212 = vmatprep.mubr.f32.mxu0 0.0
    %213 = vmatmul.mubr.f32.gmra.mrb[0].mxu0 %v141
    %v214 = vpop.f32.mrb[0].mxu0
    %v215 = vadd.f32 %v134, %v214
    %v216 = vpop.f32.mrb[0].mxu0
    %217 = vdwg.mxu0
    %v218 = vld [vmem:[#allocation2] sm:$0x3]
    %v219 = vld [vmem:[#allocation3] sm:$0xff]
    %v221 = vsel %vm136, %v218, 0
    %223 = vmatprep.subr.mxu0 0.0
    %224 = vmatpush1.msra.mxu0 %v51
    %225 = vmatprep.subr.mxu0 0.0
    %226 = vmatpush1.msra.mxu0 0.0
    %227 = vmatprep.subr.mxu0 0.0
    %228 = vmatpush1.msra.mxu0 0.0
    %229 = vmatprep.subr.mxu0 0.0
    %230 = vmatpush1.msra.mxu0 0.0
    %231 = vmatprep.subr.mxu0 0.0
    %232 = vmatpush1.msra.mxu0 0.0
    %233 = vmatprep.subr.mxu0 0.0
    %234 = vmatpush1.msra.mxu0 0.0
    %235 = vmatprep.subr.mxu0 0.0
    %236 = vmatpush1.msra.mxu0 0.0
    %237 = vmatprep.subr.mxu0 0.0
    %238 = vmatpush1.msra.mxu0 0.0
    %239 = vmatprep.subr.mxu0 0.0
    %240 = vmatpush1.msra.mxu0 0.0
    %241 = vmatprep.subr.mxu0 0.0
    %242 = vmatpush1.msra.mxu0 0.0
    %243 = vmatprep.subr.mxu0 0.0
    %244 = vmatpush1.msra.mxu0 0.0
    %245 = vmatprep.subr.mxu0 0.0
    %246 = vmatpush1.msra.mxu0 0.0
    %247 = vmatprep.subr.mxu0 0.0
    %248 = vmatpush1.msra.mxu0 0.0
    %249 = vmatprep.subr.mxu0 0.0
    %250 = vmatpush1.msra.mxu0 0.0
    %251 = vmatprep.subr.mxu0 0.0
    %252 = vmatpush1.msra.mxu0 0.0
    %253 = vmatprep.subr.mxu0 0.0
    %254 = vmatpush1.msra.mxu0 0.0
    %255 = vmatprep.subr.mxu0 0.0
    %256 = vmatpush1.msra.mxu0 0.0
    %257 = vmatprep.subr.mxu0 0.0
    %258 = vmatpush1.msra.mxu0 0.0
    %259 = vmatprep.subr.mxu0 0.0
    %260 = vmatpush1.msra.mxu0 0.0
    %261 = vmatprep.subr.mxu0 0.0
    %262 = vmatpush1.msra.mxu0 0.0
    %263 = vmatprep.subr.mxu0 0.0
    %264 = vmatpush1.msra.mxu0 0.0
    %265 = vmatprep.subr.mxu0 0.0
    %266 = vmatpush1.msra.mxu0 0.0
    %267 = vmatprep.subr.mxu0 0.0
    %268 = vmatpush1.msra.mxu0 0.0
    %269 = vmatprep.subr.mxu0 0.0
    %270 = vmatpush1.msra.mxu0 0.0
    %271 = vmatprep.subr.mxu0 0.0
    %272 = vmatpush1.msra.mxu0 0.0
    %273 = vmatprep.subr.mxu0 0.0
    %274 = vmatpush1.msra.mxu0 0.0
    %275 = vmatprep.subr.mxu0 0.0
    %276 = vmatpush1.msra.mxu0 0.0
    %277 = vmatprep.subr.mxu0 0.0
    %278 = vmatpush1.msra.mxu0 0.0
    %279 = vmatprep.subr.mxu0 0.0
    %280 = vmatpush1.msra.mxu0 0.0
    %281 = vmatprep.subr.mxu0 0.0
    %282 = vmatpush1.msra.mxu0 0.0
    %283 = vmatprep.subr.mxu0 0.0
    %284 = vmatpush1.msra.mxu0 0.0
    %285 = vmatprep.subr.mxu0 0.0
    %286 = vmatpush1.msra.mxu0 0.0
    %287 = vmatprep.mubr.f32.mxu0 0.0
    %288 = vmatmul.mubr.f32.gmra.mrb[0].mxu0 %v221
    %v289 = vpop.f32.mrb[0].mxu0
    %v290 = vadd.f32 %v210, %v289
    %v291 = vpop.f32.mrb[0].mxu0
    %292 = vdwg.mxu0
    %v293 = vtanh.pop %v290
    %v295 = vsel %vm136, %v293, 0
    %297 = vmatprep.subr.mxu0 0.0
    %298 = vmatpush1.msra.mxu0 %v52
    %299 = vmatprep.subr.mxu0 0.0
    %300 = vmatpush1.msra.mxu0 0.0
    %301 = vmatprep.subr.mxu0 0.0
    %302 = vmatpush1.msra.mxu0 0.0
    %303 = vmatprep.subr.mxu0 0.0
    %304 = vmatpush1.msra.mxu0 0.0
    %305 = vmatprep.subr.mxu0 0.0
    %306 = vmatpush1.msra.mxu0 0.0
    %307 = vmatprep.subr.mxu0 0.0
    %308 = vmatpush1.msra.mxu0 0.0
    %309 = vmatprep.subr.mxu0 0.0
    %310 = vmatpush1.msra.mxu0 0.0
    %311 = vmatprep.subr.mxu0 0.0
    %312 = vmatpush1.msra.mxu0 0.0
    %313 = vmatprep.subr.mxu0 0.0
    %314 = vmatpush1.msra.mxu0 0.0
    %315 = vmatprep.subr.mxu0 0.0
    %316 = vmatpush1.msra.mxu0 0.0
    %317 = vmatprep.subr.mxu0 0.0
    %318 = vmatpush1.msra.mxu0 0.0
    %319 = vmatprep.subr.mxu0 0.0
    %320 = vmatpush1.msra.mxu0 0.0
    %321 = vmatprep.subr.mxu0 0.0
    %322 = vmatpush1.msra.mxu0 0.0
    %323 = vmatprep.subr.mxu0 0.0
    %324 = vmatpush1.msra.mxu0 0.0
    %325 = vmatprep.subr.mxu0 0.0
    %326 = vmatpush1.msra.mxu0 0.0
    %327 = vmatprep.subr.mxu0 0.0
    %328 = vmatpush1.msra.mxu0 0.0
    %329 = vmatprep.subr.mxu0 0.0
    %330 = vmatpush1.msra.mxu0 0.0
    %331 = vmatprep.subr.mxu0 0.0
    %332 = vmatpush1.msra.mxu0 0.0
    %333 = vmatprep.subr.mxu0 0.0
    %334 = vmatpush1.msra.mxu0 0.0
    %335 = vmatprep.subr.mxu0 0.0
    %336 = vmatpush1.msra.mxu0 0.0
    %337 = vmatprep.subr.mxu0 0.0
    %338 = vmatpush1.msra.mxu0 0.0
    %339 = vmatprep.subr.mxu0 0.0
    %340 = vmatpush1.msra.mxu0 0.0
    %341 = vmatprep.subr.mxu0 0.0
    %342 = vmatpush1.msra.mxu0 0.0
    %343 = vmatprep.subr.mxu0 0.0
    %344 = vmatpush1.msra.mxu0 0.0
    %345 = vmatprep.subr.mxu0 0.0
    %346 = vmatpush1.msra.mxu0 0.0
    %347 = vmatprep.subr.mxu0 0.0
    %348 = vmatpush1.msra.mxu0 0.0
    %349 = vmatprep.subr.mxu0 0.0
    %350 = vmatpush1.msra.mxu0 0.0
    %351 = vmatprep.subr.mxu0 0.0
    %352 = vmatpush1.msra.mxu0 0.0
    %353 = vmatprep.subr.mxu0 0.0
    %354 = vmatpush1.msra.mxu0 0.0
    %355 = vmatprep.subr.mxu0 0.0
    %356 = vmatpush1.msra.mxu0 0.0
    %357 = vmatprep.subr.mxu0 0.0
    %358 = vmatpush1.msra.mxu0 0.0
    %359 = vmatprep.subr.mxu0 0.0
    %360 = vmatpush1.msra.mxu0 0.0
    %361 = vmatprep.mubr.f32.mxu0 0.0
    %362 = vmatmul.mubr.f32.gmra.mrb[0].mxu0 %v295
    %v363 = vpop.f32.mrb[0].mxu0
    %v364 = vadd.f32 %v124, %v363
    %v365 = vpop.f32.mrb[0].mxu0
    %366 = vdwg.mxu0
    %v368 = vsel %vm136, %v219, 0
    %370 = vmatprep.subr.mxu0 0.0
    %371 = vmatpush1.msra.mxu0 %v51
    %372 = vmatprep.subr.mxu0 0.0
    %373 = vmatpush1.msra.mxu0 0.0
    %374 = vmatprep.subr.mxu0 0.0
    %375 = vmatpush1.msra.mxu0 0.0
    %376 = vmatprep.subr.mxu0 0.0
    %377 = vmatpush1.msra.mxu0 0.0
    %378 = vmatprep.subr.mxu0 0.0
    %379 = vmatpush1.msra.mxu0 0.0
    %380 = vmatprep.subr.mxu0 0.0
    %381 = vmatpush1.msra.mxu0 0.0
    %382 = vmatprep.subr.mxu0 0.0
    %383 = vmatpush1.msra.mxu0 0.0
    %384 = vmatprep.subr.mxu0 0.0
    %385 = vmatpush1.msra.mxu0 0.0
    %386 = vmatprep.subr.mxu0 0.0
    %387 = vmatpush1.msra.mxu0 0.0
    %388 = vmatprep.subr.mxu0 0.0
    %389 = vmatpush1.msra.mxu0 0.0
    %390 = vmatprep.subr.mxu0 0.0
    %391 = vmatpush1.msra.mxu0 0.0
    %392 = vmatprep.subr.mxu0 0.0
    %393 = vmatpush1.msra.mxu0 0.0
    %394 = vmatprep.subr.mxu0 0.0
    %395 = vmatpush1.msra.mxu0 0.0
    %396 = vmatprep.subr.mxu0 0.0
    %397 = vmatpush1.msra.mxu0 0.0
    %398 = vmatprep.subr.mxu0 0.0
    %399 = vmatpush1.msra.mxu0 0.0
    %400 = vmatprep.subr.mxu0 0.0
    %401 = vmatpush1.msra.mxu0 0.0
    %402 = vmatprep.subr.mxu0 0.0
    %403 = vmatpush1.msra.mxu0 0.0
    %404 = vmatprep.subr.mxu0 0.0
    %405 = vmatpush1.msra.mxu0 0.0
    %406 = vmatprep.subr.mxu0 0.0
    %407 = vmatpush1.msra.mxu0 0.0
    %408 = vmatprep.subr.mxu0 0.0
    %409 = vmatpush1.msra.mxu0 0.0
    %410 = vmatprep.subr.mxu0 0.0
    %411 = vmatpush1.msra.mxu0 0.0
    %412 = vmatprep.subr.mxu0 0.0
    %413 = vmatpush1.msra.mxu0 0.0
    %414 = vmatprep.subr.mxu0 0.0
    %415 = vmatpush1.msra.mxu0 0.0
    %416 = vmatprep.subr.mxu0 0.0
    %417 = vmatpush1.msra.mxu0 0.0
    %418 = vmatprep.subr.mxu0 0.0
    %419 = vmatpush1.msra.mxu0 0.0
    %420 = vmatprep.subr.mxu0 0.0
    %421 = vmatpush1.msra.mxu0 0.0
    %422 = vmatprep.subr.mxu0 0.0
    %423 = vmatpush1.msra.mxu0 0.0
    %424 = vmatprep.subr.mxu0 0.0
    %425 = vmatpush1.msra.mxu0 0.0
    %426 = vmatprep.subr.mxu0 0.0
    %427 = vmatpush1.msra.mxu0 0.0
    %428 = vmatprep.subr.mxu0 0.0
    %429 = vmatpush1.msra.mxu0 0.0
    %430 = vmatprep.subr.mxu0 0.0
    %431 = vmatpush1.msra.mxu0 0.0
    %432 = vmatprep.subr.mxu0 0.0
    %433 = vmatpush1.msra.mxu0 0.0
    %434 = vmatprep.mubr.f32.mxu0 0.0
    %435 = vmatmul.mubr.f32.gmra.mrb[0].mxu0 %v368
    %v436 = vpop.f32.mrb[0].mxu0
    %v437 = vadd.f32 0.0, %v436
    %v438 = vpop.f32.mrb[0].mxu0
    %439 = vdwg.mxu0
    %v441 = vsel %vm136, %v71, 0
    %443 = vmatprep.subr.mxu0 0.0
    %444 = vmatpush1.msra.mxu0 %v437
    %445 = vmatprep.subr.mxu0 0.0
    %446 = vmatpush1.msra.mxu0 0.0
    %447 = vmatprep.subr.mxu0 0.0
    %448 = vmatpush1.msra.mxu0 0.0
    %449 = vmatprep.subr.mxu0 0.0
    %450 = vmatpush1.msra.mxu0 0.0
    %451 = vmatprep.subr.mxu0 0.0
    %452 = vmatpush1.msra.mxu0 0.0
    %453 = vmatprep.subr.mxu0 0.0
    %454 = vmatpush1.msra.mxu0 0.0
    %455 = vmatprep.subr.mxu0 0.0
    %456 = vmatpush1.msra.mxu0 0.0
    %457 = vmatprep.subr.mxu0 0.0
    %458 = vmatpush1.msra.mxu0 0.0
    %459 = vmatprep.subr.mxu0 0.0
    %460 = vmatpush1.msra.mxu0 0.0
    %461 = vmatprep.subr.mxu0 0.0
    %462 = vmatpush1.msra.mxu0 0.0
    %463 = vmatprep.subr.mxu0 0.0
    %464 = vmatpush1.msra.mxu0 0.0
    %465 = vmatprep.subr.mxu0 0.0
    %466 = vmatpush1.msra.mxu0 0.0
    %467 = vmatprep.subr.mxu0 0.0
    %468 = vmatpush1.msra.mxu0 0.0
    %469 = vmatprep.subr.mxu0 0.0
    %470 = vmatpush1.msra.mxu0 0.0
    %471 = vmatprep.subr.mxu0 0.0
    %472 = vmatpush1.msra.mxu0 0.0
    %473 = vmatprep.subr.mxu0 0.0
    %474 = vmatpush1.msra.mxu0 0.0
    %475 = vmatprep.subr.mxu0 0.0
    %476 = vmatpush1.msra.mxu0 0.0
    %477 = vmatprep.subr.mxu0 0.0
    %478 = vmatpush1.msra.mxu0 0.0
    %479 = vmatprep.subr.mxu0 0.0
    %480 = vmatpush1.msra.mxu0 0.0
    %481 = vmatprep.subr.mxu0 0.0
    %482 = vmatpush1.msra.mxu0 0.0
    %483 = vmatprep.subr.mxu0 0.0
    %484 = vmatpush1.msra.mxu0 0.0
    %485 = vmatprep.subr.mxu0 0.0
    %486 = vmatpush1.msra.mxu0 0.0
    %487 = vmatprep.subr.mxu0 0.0
    %488 = vmatpush1.msra.mxu0 0.0
    %489 = vmatprep.subr.mxu0 0.0
    %490 = vmatpush1.msra.mxu0 0.0
    %491 = vmatprep.subr.mxu0 0.0
    %492 = vmatpush1.msra.mxu0 0.0
    %493 = vmatprep.subr.mxu0 0.0
    %494 = vmatpush1.msra.mxu0 0.0
    %495 = vmatprep.subr.mxu0 0.0
    %496 = vmatpush1.msra.mxu0 0.0
    %497 = vmatprep.subr.mxu0 0.0
    %498 = vmatpush1.msra.mxu0 0.0
    %499 = vmatprep.subr.mxu0 0.0
    %500 = vmatpush1.msra.mxu0 0.0
    %501 = vmatprep.subr.mxu0 0.0
    %502 = vmatpush1.msra.mxu0 0.0
    %503 = vmatprep.subr.mxu0 0.0
    %504 = vmatpush1.msra.mxu0 0.0
    %505 = vmatprep.subr.mxu0 0.0
    %506 = vmatpush1.msra.mxu0 0.0
    %507 = vmatprep.mubr.f32.mxu0 0.0
    %508 = vmatmul.mubr.f32.gmra.mrb[0].mxu0 %v441
    %v509 = vpop.f32.mrb[0].mxu0
    %v510 = vadd.f32 %v53, %v509
    %v511 = vpop.f32.mrb[0].mxu0
    %512 = vdwg.mxu0
    %v514 = vsel %vm136, %v510, 0
    %516 = vmatprep.subr.mxu0 0.0
    %517 = vmatpush1.msra.mxu0 %v52
    %518 = vmatprep.subr.mxu0 0.0
    %519 = vmatpush1.msra.mxu0 0.0
    %520 = vmatprep.subr.mxu0 0.0
    %521 = vmatpush1.msra.mxu0 0.0
    %522 = vmatprep.subr.mxu0 0.0
    %523 = vmatpush1.msra.mxu0 0.0
    %524 = vmatprep.subr.mxu0 0.0
    %525 = vmatpush1.msra.mxu0 0.0
    %526 = vmatprep.subr.mxu0 0.0
    %527 = vmatpush1.msra.mxu0 0.0
    %528 = vmatprep.subr.mxu0 0.0
    %529 = vmatpush1.msra.mxu0 0.0
    %530 = vmatprep.subr.mxu0 0.0
    %531 = vmatpush1.msra.mxu0 0.0
    %532 = vmatprep.subr.mxu0 0.0
    %533 = vmatpush1.msra.mxu0 0.0
    %534 = vmatprep.subr.mxu0 0.0
    %535 = vmatpush1.msra.mxu0 0.0
    %536 = vmatprep.subr.mxu0 0.0
    %537 = vmatpush1.msra.mxu0 0.0
    %538 = vmatprep.subr.mxu0 0.0
    %539 = vmatpush1.msra.mxu0 0.0
    %540 = vmatprep.subr.mxu0 0.0
    %541 = vmatpush1.msra.mxu0 0.0
    %542 = vmatprep.subr.mxu0 0.0
    %543 = vmatpush1.msra.mxu0 0.0
    %544 = vmatprep.subr.mxu0 0.0
    %545 = vmatpush1.msra.mxu0 0.0
    %546 = vmatprep.subr.mxu0 0.0
    %547 = vmatpush1.msra.mxu0 0.0
    %548 = vmatprep.subr.mxu0 0.0
    %549 = vmatpush1.msra.mxu0 0.0
    %550 = vmatprep.subr.mxu0 0.0
    %551 = vmatpush1.msra.mxu0 0.0
    %552 = vmatprep.subr.mxu0 0.0
    %553 = vmatpush1.msra.mxu0 0.0
    %554 = vmatprep.subr.mxu0 0.0
    %555 = vmatpush1.msra.mxu0 0.0
    %556 = vmatprep.subr.mxu0 0.0
    %557 = vmatpush1.msra.mxu0 0.0
    %558 = vmatprep.subr.mxu0 0.0
    %559 = vmatpush1.msra.mxu0 0.0
    %560 = vmatprep.subr.mxu0 0.0
    %561 = vmatpush1.msra.mxu0 0.0
    %562 = vmatprep.subr.mxu0 0.0
    %563 = vmatpush1.msra.mxu0 0.0
    %564 = vmatprep.subr.mxu0 0.0
    %565 = vmatpush1.msra.mxu0 0.0
    %566 = vmatprep.subr.mxu0 0.0
    %567 = vmatpush1.msra.mxu0 0.0
    %568 = vmatprep.subr.mxu0 0.0
    %569 = vmatpush1.msra.mxu0 0.0
    %570 = vmatprep.subr.mxu0 0.0
    %571 = vmatpush1.msra.mxu0 0.0
    %572 = vmatprep.subr.mxu0 0.0
    %573 = vmatpush1.msra.mxu0 0.0
    %574 = vmatprep.subr.mxu0 0.0
    %575 = vmatpush1.msra.mxu0 0.0
    %576 = vmatprep.subr.mxu0 0.0
    %577 = vmatpush1.msra.mxu0 0.0
    %578 = vmatprep.subr.mxu0 0.0
    %579 = vmatpush1.msra.mxu0 0.0
    %580 = vmatprep.mubr.f32.mxu0 0.0
    %581 = vmatmul.mubr.f32.gmra.mrb[0].mxu0 %v514
    %v582 = vpop.f32.mrb[0].mxu0
    %v583 = vadd.f32 0.0, %v582
    %v584 = vpop.f32.mrb[0].mxu0
    %585 = vdwg.mxu0
    %v587 = vsel %vm136, %v103, 0
    %589 = vmatprep.subr.mxu0 0.0
    %590 = vmatpush1.msra.mxu0 %v583
    %591 = vmatprep.subr.mxu0 0.0
    %592 = vmatpush1.msra.mxu0 0.0
    %593 = vmatprep.subr.mxu0 0.0
    %594 = vmatpush1.msra.mxu0 0.0
    %595 = vmatprep.subr.mxu0 0.0
    %596 = vmatpush1.msra.mxu0 0.0
    %597 = vmatprep.subr.mxu0 0.0
    %598 = vmatpush1.msra.mxu0 0.0
    %599 = vmatprep.subr.mxu0 0.0
    %600 = vmatpush1.msra.mxu0 0.0
    %601 = vmatprep.subr.mxu0 0.0
    %602 = vmatpush1.msra.mxu0 0.0
    %603 = vmatprep.subr.mxu0 0.0
    %604 = vmatpush1.msra.mxu0 0.0
    %605 = vmatprep.subr.mxu0 0.0
    %606 = vmatpush1.msra.mxu0 0.0
    %607 = vmatprep.subr.mxu0 0.0
    %608 = vmatpush1.msra.mxu0 0.0
    %609 = vmatprep.subr.mxu0 0.0
    %610 = vmatpush1.msra.mxu0 0.0
    %611 = vmatprep.subr.mxu0 0.0
    %612 = vmatpush1.msra.mxu0 0.0
    %613 = vmatprep.subr.mxu0 0.0
    %614 = vmatpush1.msra.mxu0 0.0
    %615 = vmatprep.subr.mxu0 0.0
    %616 = vmatpush1.msra.mxu0 0.0
    %617 = vmatprep.subr.mxu0 0.0
    %618 = vmatpush1.msra.mxu0 0.0
    %619 = vmatprep.subr.mxu0 0.0
    %620 = vmatpush1.msra.mxu0 0.0
    %621 = vmatprep.subr.mxu0 0.0
    %622 = vmatpush1.msra.mxu0 0.0
    %623 = vmatprep.subr.mxu0 0.0
    %624 = vmatpush1.msra.mxu0 0.0
    %625 = vmatprep.subr.mxu0 0.0
    %626 = vmatpush1.msra.mxu0 0.0
    %627 = vmatprep.subr.mxu0 0.0
    %628 = vmatpush1.msra.mxu0 0.0
    %629 = vmatprep.subr.mxu0 0.0
    %630 = vmatpush1.msra.mxu0 0.0
    %631 = vmatprep.subr.mxu0 0.0
    %632 = vmatpush1.msra.mxu0 0.0
    %633 = vmatprep.subr.mxu0 0.0
    %634 = vmatpush1.msra.mxu0 0.0
    %635 = vmatprep.subr.mxu0 0.0
    %636 = vmatpush1.msra.mxu0 0.0
    %637 = vmatprep.subr.mxu0 0.0
    %638 = vmatpush1.msra.mxu0 0.0
    %639 = vmatprep.subr.mxu0 0.0
    %640 = vmatpush1.msra.mxu0 0.0
    %641 = vmatprep.subr.mxu0 0.0
    %642 = vmatpush1.msra.mxu0 0.0
    %643 = vmatprep.subr.mxu0 0.0
    %644 = vmatpush1.msra.mxu0 0.0
    %645 = vmatprep.subr.mxu0 0.0
    %646 = vmatpush1.msra.mxu0 0.0
    %647 = vmatprep.subr.mxu0 0.0
    %648 = vmatpush1.msra.mxu0 0.0
    %649 = vmatprep.subr.mxu0 0.0
    %650 = vmatpush1.msra.mxu0 0.0
    %651 = vmatprep.subr.mxu0 0.0
    %652 = vmatpush1.msra.mxu0 0.0
    %653 = vmatprep.mubr.f32.mxu0 0.0
    %654 = vmatmul.mubr.f32.gmra.mrb[0].mxu0 %v587
    %v655 = vpop.f32.mrb[0].mxu0
    %v656 = vadd.f32 %v54, %v655
    %v657 = vpop.f32.mrb[0].mxu0
    %658 = vdwg.mxu0
    %vm659 = vcmask 58368
    %660 = vst.msk [vmem:[#allocation4] sm:$0x3] %vm659, %v293
    %vm661 = vcmask 25600
    %662 = vst.msk [vmem:[%s12] sm:$0x3] %vm661, %v364
    %663 = vst.msk [vmem:[#allocation6] sm:$0xff] %vm136, %v510
    %vm664 = vcmask 27648
    %665 = vst.msk [vmem:[%s13] sm:$0xf] %vm664, %v656
    %v667 = vrot.slane %v210, 2
    %669 = vmatprep.subr.mxu0 0.0
    %670 = vmatpush1.msra.mxu0 %v51
    %671 = vmatprep.subr.mxu0 0.0
    %672 = vmatpush1.msra.mxu0 0.0
    %673 = vmatprep.subr.mxu0 0.0
    %674 = vmatpush1.msra.mxu0 0.0
    %675 = vmatprep.subr.mxu0 0.0
    %676 = vmatpush1.msra.mxu0 0.0
    %677 = vmatprep.subr.mxu0 0.0
    %678 = vmatpush1.msra.mxu0 0.0
    %679 = vmatprep.subr.mxu0 0.0
    %680 = vmatpush1.msra.mxu0 0.0
    %681 = vmatprep.subr.mxu0 0.0
    %682 = vmatpush1.msra.mxu0 0.0
    %683 = vmatprep.subr.mxu0 0.0
    %684 = vmatpush1.msra.mxu0 0.0
    %685 = vmatprep.subr.mxu0 0.0
    %686 = vmatpush1.msra.mxu0 0.0
    %687 = vmatprep.subr.mxu0 0.0
    %688 = vmatpush1.msra.mxu0 0.0
    %689 = vmatprep.subr.mxu0 0.0
    %690 = vmatpush1.msra.mxu0 0.0
    %691 = vmatprep.subr.mxu0 0.0
    %692 = vmatpush1.msra.mxu0 0.0
    %693 = vmatprep.subr.mxu0 0.0
    %694 = vmatpush1.msra.mxu0 0.0
    %695 = vmatprep.subr.mxu0 0.0
    %696 = vmatpush1.msra.mxu0 0.0
    %697 = vmatprep.subr.mxu0 0.0
    %698 = vmatpush1.msra.mxu0 0.0
    %699 = vmatprep.subr.mxu0 0.0
    %700 = vmatpush1.msra.mxu0 0.0
    %701 = vmatprep.subr.mxu0 0.0
    %702 = vmatpush1.msra.mxu0 0.0
    %703 = vmatprep.subr.mxu0 0.0
    %704 = vmatpush1.msra.mxu0 0.0
    %705 = vmatprep.subr.mxu0 0.0
    %706 = vmatpush1.msra.mxu0 0.0
    %707 = vmatprep.subr.mxu0 0.0
    %708 = vmatpush1.msra.mxu0 0.0
    %709 = vmatprep.subr.mxu0 0.0
    %710 = vmatpush1.msra.mxu0 0.0
    %711 = vmatprep.subr.mxu0 0.0
    %712 = vmatpush1.msra.mxu0 0.0
    %713 = vmatprep.subr.mxu0 0.0
    %714 = vmatpush1.msra.mxu0 0.0
    %715 = vmatprep.subr.mxu0 0.0
    %716 = vmatpush1.msra.mxu0 0.0
    %717 = vmatprep.subr.mxu0 0.0
    %718 = vmatpush1.msra.mxu0 0.0
    %719 = vmatprep.subr.mxu0 0.0
    %720 = vmatpush1.msra.mxu0 0.0
    %721 = vmatprep.subr.mxu0 0.0
    %722 = vmatpush1.msra.mxu0 0.0
    %723 = vmatprep.subr.mxu0 0.0
    %724 = vmatpush1.msra.mxu0 0.0
    %725 = vmatprep.subr.mxu0 0.0
    %726 = vmatpush1.msra.mxu0 0.0
    %727 = vmatprep.subr.mxu0 0.0
    %728 = vmatpush1.msra.mxu0 0.0
    %729 = vmatprep.subr.mxu0 0.0
    %730 = vmatpush1.msra.mxu0 0.0
    %731 = vmatprep.subr.mxu0 0.0
    %732 = vmatpush1.msra.mxu0 0.0
    %733 = vmatprep.mubr.f32.mxu0 0.0
    %734 = vmatmul.mubr.f32.gmra.mrb[0].mxu0 %v295
    %v735 = vpop.f32.mrb[0].mxu0
    %v736 = vadd.f32 %v667, %v735
    %v737 = vpop.f32.mrb[0].mxu0
    %738 = vdwg.mxu0
    %v739 = vtanh.pop %v736
    %v741 = vsel %vm136, %v739, 0
    %743 = vmatprep.subr.mxu0 0.0
    %744 = vmatpush1.msra.mxu0 %v52
    %745 = vmatprep.subr.mxu0 0.0
    %746 = vmatpush1.msra.mxu0 0.0
    %747 = vmatprep.subr.mxu0 0.0
    %748 = vmatpush1.msra.mxu0 0.0
    %749 = vmatprep.subr.mxu0 0.0
    %750 = vmatpush1.msra.mxu0 0.0
    %751 = vmatprep.subr.mxu0 0.0
    %752 = vmatpush1.msra.mxu0 0.0
    %753 = vmatprep.subr.mxu0 0.0
    %754 = vmatpush1.msra.mxu0 0.0
    %755 = vmatprep.subr.mxu0 0.0
    %756 = vmatpush1.msra.mxu0 0.0
    %757 = vmatprep.subr.mxu0 0.0
    %758 = vmatpush1.msra.mxu0 0.0
    %759 = vmatprep.subr.mxu0 0.0
    %760 = vmatpush1.msra.mxu0 0.0
    %761 = vmatprep.subr.mxu0 0.0
    %762 = vmatpush1.msra.mxu0 0.0
    %763 = vmatprep.subr.mxu0 0.0
    %764 = vmatpush1.msra.mxu0 0.0
    %765 = vmatprep.subr.mxu0 0.0
    %766 = vmatpush1.msra.mxu0 0.0
    %767 = vmatprep.subr.mxu0 0.0
    %768 = vmatpush1.msra.mxu0 0.0
    %769 = vmatprep.subr.mxu0 0.0
    %770 = vmatpush1.msra.mxu0 0.0
    %771 = vmatprep.subr.mxu0 0.0
    %772 = vmatpush1.msra.mxu0 0.0
    %773 = vmatprep.subr.mxu0 0.0
    %774 = vmatpush1.msra.mxu0 0.0
    %775 = vmatprep.subr.mxu0 0.0
    %776 = vmatpush1.msra.mxu0 0.0
    %777 = vmatprep.subr.mxu0 0.0
    %778 = vmatpush1.msra.mxu0 0.0
    %779 = vmatprep.subr.mxu0 0.0
    %780 = vmatpush1.msra.mxu0 0.0
    %781 = vmatprep.subr.mxu0 0.0
    %782 = vmatpush1.msra.mxu0 0.0
    %783 = vmatprep.subr.mxu0 0.0
    %784 = vmatpush1.msra.mxu0 0.0
    %785 = vmatprep.subr.mxu0 0.0
    %786 = vmatpush1.msra.mxu0 0.0
    %787 = vmatprep.subr.mxu0 0.0
    %788 = vmatpush1.msra.mxu0 0.0
    %789 = vmatprep.subr.mxu0 0.0
    %790 = vmatpush1.msra.mxu0 0.0
    %791 = vmatprep.subr.mxu0 0.0
    %792 = vmatpush1.msra.mxu0 0.0
    %793 = vmatprep.subr.mxu0 0.0
    %794 = vmatpush1.msra.mxu0 0.0
    %795 = vmatprep.subr.mxu0 0.0
    %796 = vmatpush1.msra.mxu0 0.0
    %797 = vmatprep.subr.mxu0 0.0
    %798 = vmatpush1.msra.mxu0 0.0
    %799 = vmatprep.subr.mxu0 0.0
    %800 = vmatpush1.msra.mxu0 0.0
    %801 = vmatprep.subr.mxu0 0.0
    %802 = vmatpush1.msra.mxu0 0.0
    %803 = vmatprep.subr.mxu0 0.0
    %804 = vmatpush1.msra.mxu0 0.0
    %805 = vmatprep.subr.mxu0 0.0
    %806 = vmatpush1.msra.mxu0 0.0
    %807 = vmatprep.mubr.f32.mxu0 0.0
    %808 = vmatmul.mubr.f32.gmra.mrb[0].mxu0 %v741
    %v809 = vpop.f32.mrb[0].mxu0
    %v810 = vadd.f32 %v124, %v809
    %v811 = vpop.f32.mrb[0].mxu0
    %812 = vdwg.mxu0
    %813 = vmatprep.subr.mxu0 0.0
    %814 = vmatpush1.msra.mxu0 %v51
    %815 = vmatprep.subr.mxu0 0.0
    %816 = vmatpush1.msra.mxu0 0.0
    %817 = vmatprep.subr.mxu0 0.0
    %818 = vmatpush1.msra.mxu0 0.0
    %819 = vmatprep.subr.mxu0 0.0
    %820 = vmatpush1.msra.mxu0 0.0
    %821 = vmatprep.subr.mxu0 0.0
    %822 = vmatpush1.msra.mxu0 0.0
    %823 = vmatprep.subr.mxu0 0.0
    %824 = vmatpush1.msra.mxu0 0.0
    %825 = vmatprep.subr.mxu0 0.0
    %826 = vmatpush1.msra.mxu0 0.0
    %827 = vmatprep.subr.mxu0 0.0
    %828 = vmatpush1.msra.mxu0 0.0
    %829 = vmatprep.subr.mxu0 0.0
    %830 = vmatpush1.msra.mxu0 0.0
    %831 = vmatprep.subr.mxu0 0.0
    %832 = vmatpush1.msra.mxu0 0.0
    %833 = vmatprep.subr.mxu0 0.0
    %834 = vmatpush1.msra.mxu0 0.0
    %835 = vmatprep.subr.mxu0 0.0
    %836 = vmatpush1.msra.mxu0 0.0
    %837 = vmatprep.subr.mxu0 0.0
    %838 = vmatpush1.msra.mxu0 0.0
    %839 = vmatprep.subr.mxu0 0.0
    %840 = vmatpush1.msra.mxu0 0.0
    %841 = vmatprep.subr.mxu0 0.0
    %842 = vmatpush1.msra.mxu0 0.0
    %843 = vmatprep.subr.mxu0 0.0
    %844 = vmatpush1.msra.mxu0 0.0
    %845 = vmatprep.subr.mxu0 0.0
    %846 = vmatpush1.msra.mxu0 0.0
    %847 = vmatprep.subr.mxu0 0.0
    %848 = vmatpush1.msra.mxu0 0.0
    %849 = vmatprep.subr.mxu0 0.0
    %850 = vmatpush1.msra.mxu0 0.0
    %851 = vmatprep.subr.mxu0 0.0
    %852 = vmatpush1.msra.mxu0 0.0
    %853 = vmatprep.subr.mxu0 0.0
    %854 = vmatpush1.msra.mxu0 0.0
    %855 = vmatprep.subr.mxu0 0.0
    %856 = vmatpush1.msra.mxu0 0.0
    %857 = vmatprep.subr.mxu0 0.0
    %858 = vmatpush1.msra.mxu0 0.0
    %859 = vmatprep.subr.mxu0 0.0
    %860 = vmatpush1.msra.mxu0 0.0
    %861 = vmatprep.subr.mxu0 0.0
    %862 = vmatpush1.msra.mxu0 0.0
    %863 = vmatprep.subr.mxu0 0.0
    %864 = vmatpush1.msra.mxu0 0.0
    %865 = vmatprep.subr.mxu0 0.0
    %866 = vmatpush1.msra.mxu0 0.0
    %867 = vmatprep.subr.mxu0 0.0
    %868 = vmatpush1.msra.mxu0 0.0
    %869 = vmatprep.subr.mxu0 0.0
    %870 = vmatpush1.msra.mxu0 0.0
    %871 = vmatprep.subr.mxu0 0.0
    %872 = vmatpush1.msra.mxu0 0.0
    %873 = vmatprep.subr.mxu0 0.0
    %874 = vmatpush1.msra.mxu0 0.0
    %875 = vmatprep.subr.mxu0 0.0
    %876 = vmatpush1.msra.mxu0 0.0
    %877 = vmatprep.mubr.f32.mxu0 0.0
    %878 = vmatmul.mubr.f32.gmra.mrb[0].mxu0 %v514
    %v879 = vpop.f32.mrb[0].mxu0
    %v880 = vadd.f32 0.0, %v879
    %v881 = vpop.f32.mrb[0].mxu0
    %882 = vdwg.mxu0
    %883 = vmatprep.subr.mxu0 0.0
    %884 = vmatpush1.msra.mxu0 %v880
    %885 = vmatprep.subr.mxu0 0.0
    %886 = vmatpush1.msra.mxu0 0.0
    %887 = vmatprep.subr.mxu0 0.0
    %888 = vmatpush1.msra.mxu0 0.0
    %889 = vmatprep.subr.mxu0 0.0
    %890 = vmatpush1.msra.mxu0 0.0
    %891 = vmatprep.subr.mxu0 0.0
    %892 = vmatpush1.msra.mxu0 0.0
    %893 = vmatprep.subr.mxu0 0.0
    %894 = vmatpush1.msra.mxu0 0.0
    %895 = vmatprep.subr.mxu0 0.0
    %896 = vmatpush1.msra.mxu0 0.0
    %897 = vmatprep.subr.mxu0 0.0
    %898 = vmatpush1.msra.mxu0 0.0
    %899 = vmatprep.subr.mxu0 0.0
    %900 = vmatpush1.msra.mxu0 0.0
    %901 = vmatprep.subr.mxu0 0.0
    %902 = vmatpush1.msra.mxu0 0.0
    %903 = vmatprep.subr.mxu0 0.0
    %904 = vmatpush1.msra.mxu0 0.0
    %905 = vmatprep.subr.mxu0 0.0
    %906 = vmatpush1.msra.mxu0 0.0
    %907 = vmatprep.subr.mxu0 0.0
    %908 = vmatpush1.msra.mxu0 0.0
    %909 = vmatprep.subr.mxu0 0.0
    %910 = vmatpush1.msra.mxu0 0.0
    %911 = vmatprep.subr.mxu0 0.0
    %912 = vmatpush1.msra.mxu0 0.0
    %913 = vmatprep.subr.mxu0 0.0
    %914 = vmatpush1.msra.mxu0 0.0
    %915 = vmatprep.subr.mxu0 0.0
    %916 = vmatpush1.msra.mxu0 0.0
    %917 = vmatprep.subr.mxu0 0.0
    %918 = vmatpush1.msra.mxu0 0.0
    %919 = vmatprep.subr.mxu0 0.0
    %920 = vmatpush1.msra.mxu0 0.0
    %921 = vmatprep.subr.mxu0 0.0
    %922 = vmatpush1.msra.mxu0 0.0
    %923 = vmatprep.subr.mxu0 0.0
    %924 = vmatpush1.msra.mxu0 0.0
    %925 = vmatprep.subr.mxu0 0.0
    %926 = vmatpush1.msra.mxu0 0.0
    %927 = vmatprep.subr.mxu0 0.0
    %928 = vmatpush1.msra.mxu0 0.0
    %929 = vmatprep.subr.mxu0 0.0
    %930 = vmatpush1.msra.mxu0 0.0
    %931 = vmatprep.subr.mxu0 0.0
    %932 = vmatpush1.msra.mxu0 0.0
    %933 = vmatprep.subr.mxu0 0.0
    %934 = vmatpush1.msra.mxu0 0.0
    %935 = vmatprep.subr.mxu0 0.0
    %936 = vmatpush1.msra.mxu0 0.0
    %937 = vmatprep.subr.mxu0 0.0
    %938 = vmatpush1.msra.mxu0 0.0
    %939 = vmatprep.subr.mxu0 0.0
    %940 = vmatpush1.msra.mxu0 0.0
    %941 = vmatprep.subr.mxu0 0.0
    %942 = vmatpush1.msra.mxu0 0.0
    %943 = vmatprep.subr.mxu0 0.0
    %944 = vmatpush1.msra.mxu0 0.0
    %945 = vmatprep.subr.mxu0 0.0
    %946 = vmatpush1.msra.mxu0 0.0
    %947 = vmatprep.mubr.f32.mxu0 0.0
    %948 = vmatmul.mubr.f32.gmra.mrb[0].mxu0 %v441
    %v949 = vpop.f32.mrb[0].mxu0
    %v950 = vadd.f32 %v53, %v949
    %v951 = vpop.f32.mrb[0].mxu0
    %952 = vdwg.mxu0
    %v954 = vsel %vm136, %v950, 0
    %956 = vmatprep.subr.mxu0 0.0
    %957 = vmatpush1.msra.mxu0 %v52
    %958 = vmatprep.subr.mxu0 0.0
    %959 = vmatpush1.msra.mxu0 0.0
    %960 = vmatprep.subr.mxu0 0.0
    %961 = vmatpush1.msra.mxu0 0.0
    %962 = vmatprep.subr.mxu0 0.0
    %963 = vmatpush1.msra.mxu0 0.0
    %964 = vmatprep.subr.mxu0 0.0
    %965 = vmatpush1.msra.mxu0 0.0
    %966 = vmatprep.subr.mxu0 0.0
    %967 = vmatpush1.msra.mxu0 0.0
    %968 = vmatprep.subr.mxu0 0.0
    %969 = vmatpush1.msra.mxu0 0.0
    %970 = vmatprep.subr.mxu0 0.0
    %971 = vmatpush1.msra.mxu0 0.0
    %972 = vmatprep.subr.mxu0 0.0
    %973 = vmatpush1.msra.mxu0 0.0
    %974 = vmatprep.subr.mxu0 0.0
    %975 = vmatpush1.msra.mxu0 0.0
    %976 = vmatprep.subr.mxu0 0.0
    %977 = vmatpush1.msra.mxu0 0.0
    %978 = vmatprep.subr.mxu0 0.0
    %979 = vmatpush1.msra.mxu0 0.0
    %980 = vmatprep.subr.mxu0 0.0
    %981 = vmatpush1.msra.mxu0 0.0
    %982 = vmatprep.subr.mxu0 0.0
    %983 = vmatpush1.msra.mxu0 0.0
    %984 = vmatprep.subr.mxu0 0.0
    %985 = vmatpush1.msra.mxu0 0.0
    %986 = vmatprep.subr.mxu0 0.0
    %987 = vmatpush1.msra.mxu0 0.0
    %988 = vmatprep.subr.mxu0 0.0
    %989 = vmatpush1.msra.mxu0 0.0
    %990 = vmatprep.subr.mxu0 0.0
    %991 = vmatpush1.msra.mxu0 0.0
    %992 = vmatprep.subr.mxu0 0.0
    %993 = vmatpush1.msra.mxu0 0.0
    %994 = vmatprep.subr.mxu0 0.0
    %995 = vmatpush1.msra.mxu0 0.0
    %996 = vmatprep.subr.mxu0 0.0
    %997 = vmatpush1.msra.mxu0 0.0
    %998 = vmatprep.subr.mxu0 0.0
    %999 = vmatpush1.msra.mxu0 0.0
    %1000 = vmatprep.subr.mxu0 0.0
    %1001 = vmatpush1.msra.mxu0 0.0
    %1002 = vmatprep.subr.mxu0 0.0
    %1003 = vmatpush1.msra.mxu0 0.0
    %1004 = vmatprep.subr.mxu0 0.0
    %1005 = vmatpush1.msra.mxu0 0.0
    %1006 = vmatprep.subr.mxu0 0.0
    %1007 = vmatpush1.msra.mxu0 0.0
    %1008 = vmatprep.subr.mxu0 0.0
    %1009 = vmatpush1.msra.mxu0 0.0
    %1010 = vmatprep.subr.mxu0 0.0
    %1011 = vmatpush1.msra.mxu0 0.0
    %1012 = vmatprep.subr.mxu0 0.0
    %1013 = vmatpush1.msra.mxu0 0.0
    %1014 = vmatprep.subr.mxu0 0.0
    %1015 = vmatpush1.msra.mxu0 0.0
    %1016 = vmatprep.subr.mxu0 0.0
    %1017 = vmatpush1.msra.mxu0 0.0
    %1018 = vmatprep.subr.mxu0 0.0
    %1019 = vmatpush1.msra.mxu0 0.0
    %1020 = vmatprep.mubr.f32.mxu0 0.0
    %1021 = vmatmul.mubr.f32.gmra.mrb[0].mxu0 %v954
    %v1022 = vpop.f32.mrb[0].mxu0
    %v1023 = vadd.f32 0.0, %v1022
    %v1024 = vpop.f32.mrb[0].mxu0
    %1025 = vdwg.mxu0
    %1026 = vmatprep.subr.mxu0 0.0
    %1027 = vmatpush1.msra.mxu0 %v1023
    %1028 = vmatprep.subr.mxu0 0.0
    %1029 = vmatpush1.msra.mxu0 0.0
    %1030 = vmatprep.subr.mxu0 0.0
    %1031 = vmatpush1.msra.mxu0 0.0
    %1032 = vmatprep.subr.mxu0 0.0
    %1033 = vmatpush1.msra.mxu0 0.0
    %1034 = vmatprep.subr.mxu0 0.0
    %1035 = vmatpush1.msra.mxu0 0.0
    %1036 = vmatprep.subr.mxu0 0.0
    %1037 = vmatpush1.msra.mxu0 0.0
    %1038 = vmatprep.subr.mxu0 0.0
    %1039 = vmatpush1.msra.mxu0 0.0
    %1040 = vmatprep.subr.mxu0 0.0
    %1041 = vmatpush1.msra.mxu0 0.0
    %1042 = vmatprep.subr.mxu0 0.0
    %1043 = vmatpush1.msra.mxu0 0.0
    %1044 = vmatprep.subr.mxu0 0.0
    %1045 = vmatpush1.msra.mxu0 0.0
    %1046 = vmatprep.subr.mxu0 0.0
    %1047 = vmatpush1.msra.mxu0 0.0
    %1048 = vmatprep.subr.mxu0 0.0
    %1049 = vmatpush1.msra.mxu0 0.0
    %1050 = vmatprep.subr.mxu0 0.0
    %1051 = vmatpush1.msra.mxu0 0.0
    %1052 = vmatprep.subr.mxu0 0.0
    %1053 = vmatpush1.msra.mxu0 0.0
    %1054 = vmatprep.subr.mxu0 0.0
    %1055 = vmatpush1.msra.mxu0 0.0
    %1056 = vmatprep.subr.mxu0 0.0
    %1057 = vmatpush1.msra.mxu0 0.0
    %1058 = vmatprep.subr.mxu0 0.0
    %1059 = vmatpush1.msra.mxu0 0.0
    %1060 = vmatprep.subr.mxu0 0.0
    %1061 = vmatpush1.msra.mxu0 0.0
    %1062 = vmatprep.subr.mxu0 0.0
    %1063 = vmatpush1.msra.mxu0 0.0
    %1064 = vmatprep.subr.mxu0 0.0
    %1065 = vmatpush1.msra.mxu0 0.0
    %1066 = vmatprep.subr.mxu0 0.0
    %1067 = vmatpush1.msra.mxu0 0.0
    %1068 = vmatprep.subr.mxu0 0.0
    %1069 = vmatpush1.msra.mxu0 0.0
    %1070 = vmatprep.subr.mxu0 0.0
    %1071 = vmatpush1.msra.mxu0 0.0
    %1072 = vmatprep.subr.mxu0 0.0
    %1073 = vmatpush1.msra.mxu0 0.0
    %1074 = vmatprep.subr.mxu0 0.0
    %1075 = vmatpush1.msra.mxu0 0.0
    %1076 = vmatprep.subr.mxu0 0.0
    %1077 = vmatpush1.msra.mxu0 0.0
    %1078 = vmatprep.subr.mxu0 0.0
    %1079 = vmatpush1.msra.mxu0 0.0
    %1080 = vmatprep.subr.mxu0 0.0
    %1081 = vmatpush1.msra.mxu0 0.0
    %1082 = vmatprep.subr.mxu0 0.0
    %1083 = vmatpush1.msra.mxu0 0.0
    %1084 = vmatprep.subr.mxu0 0.0
    %1085 = vmatpush1.msra.mxu0 0.0
    %1086 = vmatprep.subr.mxu0 0.0
    %1087 = vmatpush1.msra.mxu0 0.0
    %1088 = vmatprep.subr.mxu0 0.0
    %1089 = vmatpush1.msra.mxu0 0.0
    %1090 = vmatprep.mubr.f32.mxu0 0.0
    %1091 = vmatmul.mubr.f32.gmra.mrb[0].mxu0 %v587
    %v1092 = vpop.f32.mrb[0].mxu0
    %v1093 = vadd.f32 %v54, %v1092
    %v1094 = vpop.f32.mrb[0].mxu0
    %1095 = vdwg.mxu0
    %s1096 = scalar_lea.vmem [#allocation4], 2
    %1097 = vst.msk [vmem:[%s1096] sm:$0x3] %vm659, %v739
    %s1098 = scalar_lea.vmem %s12, 2
    %1099 = vst.msk [vmem:[%s1098] sm:$0x3] %vm661, %v810
    %s1100 = scalar_lea.vmem [#allocation6], 8
    %1101 = vst.msk [vmem:[%s1100] sm:$0xff] %vm136, %v950
    %s1102 = scalar_lea.vmem %s13, 4
    %1103 = vst.msk [vmem:[%s1102] sm:$0xf] %vm664, %v1093
    %v1104 = vrot.slane %v210, 4
    %1106 = vmatprep.subr.mxu0 0.0
    %1107 = vmatpush1.msra.mxu0 %v51
    %1108 = vmatprep.subr.mxu0 0.0
    %1109 = vmatpush1.msra.mxu0 0.0
    %1110 = vmatprep.subr.mxu0 0.0
    %1111 = vmatpush1.msra.mxu0 0.0
    %1112 = vmatprep.subr.mxu0 0.0
    %1113 = vmatpush1.msra.mxu0 0.0
    %1114 = vmatprep.subr.mxu0 0.0
    %1115 = vmatpush1.msra.mxu0 0.0
    %1116 = vmatprep.subr.mxu0 0.0
    %1117 = vmatpush1.msra.mxu0 0.0
    %1118 = vmatprep.subr.mxu0 0.0
    %1119 = vmatpush1.msra.mxu0 0.0
    %1120 = vmatprep.subr.mxu0 0.0
    %1121 = vmatpush1.msra.mxu0 0.0
    %1122 = vmatprep.subr.mxu0 0.0
    %1123 = vmatpush1.msra.mxu0 0.0
    %1124 = vmatprep.subr.mxu0 0.0
    %1125 = vmatpush1.msra.mxu0 0.0
    %1126 = vmatprep.subr.mxu0 0.0
    %1127 = vmatpush1.msra.mxu0 0.0
    %1128 = vmatprep.subr.mxu0 0.0
    %1129 = vmatpush1.msra.mxu0 0.0
    %1130 = vmatprep.subr.mxu0 0.0
    %1131 = vmatpush1.msra.mxu0 0.0
    %1132 = vmatprep.subr.mxu0 0.0
    %1133 = vmatpush1.msra.mxu0 0.0
    %1134 = vmatprep.subr.mxu0 0.0
    %1135 = vmatpush1.msra.mxu0 0.0
    %1136 = vmatprep.subr.mxu0 0.0
    %1137 = vmatpush1.msra.mxu0 0.0
    %1138 = vmatprep.subr.mxu0 0.0
    %1139 = vmatpush1.msra.mxu0 0.0
    %1140 = vmatprep.subr.mxu0 0.0
    %1141 = vmatpush1.msra.mxu0 0.0
    %1142 = vmatprep.subr.mxu0 0.0
    %1143 = vmatpush1.msra.mxu0 0.0
    %1144 = vmatprep.subr.mxu0 0.0
    %1145 = vmatpush1.msra.mxu0 0.0
    %1146 = vmatprep.subr.mxu0 0.0
    %1147 = vmatpush1.msra.mxu0 0.0
    %1148 = vmatprep.subr.mxu0 0.0
    %1149 = vmatpush1.msra.mxu0 0.0
    %1150 = vmatprep.subr.mxu0 0.0
    %1151 = vmatpush1.msra.mxu0 0.0
    %1152 = vmatprep.subr.mxu0 0.0
    %1153 = vmatpush1.msra.mxu0 0.0
    %1154 = vmatprep.subr.mxu0 0.0
    %1155 = vmatpush1.msra.mxu0 0.0
    %1156 = vmatprep.subr.mxu0 0.0
    %1157 = vmatpush1.msra.mxu0 0.0
    %1158 = vmatprep.subr.mxu0 0.0
    %1159 = vmatpush1.msra.mxu0 0.0
    %1160 = vmatprep.subr.mxu0 0.0
    %1161 = vmatpush1.msra.mxu0 0.0
    %1162 = vmatprep.subr.mxu0 0.0
    %1163 = vmatpush1.msra.mxu0 0.0
    %1164 = vmatprep.subr.mxu0 0.0
    %1165 = vmatpush1.msra.mxu0 0.0
    %1166 = vmatprep.subr.mxu0 0.0
    %1167 = vmatpush1.msra.mxu0 0.0
    %1168 = vmatprep.subr.mxu0 0.0
    %1169 = vmatpush1.msra.mxu0 0.0
    %1170 = vmatprep.mubr.f32.mxu0 0.0
    %1171 = vmatmul.mubr.f32.gmra.mrb[0].mxu0 %v741
    %v1172 = vpop.f32.mrb[0].mxu0
    %v1173 = vadd.f32 %v1104, %v1172
    %v1174 = vpop.f32.mrb[0].mxu0
    %1175 = vdwg.mxu0
    %v1176 = vtanh.pop %v1173
    %v1178 = vsel %vm136, %v1176, 0
    %1180 = vmatprep.subr.mxu0 0.0
    %1181 = vmatpush1.msra.mxu0 %v52
    %1182 = vmatprep.subr.mxu0 0.0
    %1183 = vmatpush1.msra.mxu0 0.0
    %1184 = vmatprep.subr.mxu0 0.0
    %1185 = vmatpush1.msra.mxu0 0.0
    %1186 = vmatprep.subr.mxu0 0.0
    %1187 = vmatpush1.msra.mxu0 0.0
    %1188 = vmatprep.subr.mxu0 0.0
    %1189 = vmatpush1.msra.mxu0 0.0
    %1190 = vmatprep.subr.mxu0 0.0
    %1191 = vmatpush1.msra.mxu0 0.0
    %1192 = vmatprep.subr.mxu0 0.0
    %1193 = vmatpush1.msra.mxu0 0.0
    %1194 = vmatprep.subr.mxu0 0.0
    %1195 = vmatpush1.msra.mxu0 0.0
    %1196 = vmatprep.subr.mxu0 0.0
    %1197 = vmatpush1.msra.mxu0 0.0
    %1198 = vmatprep.subr.mxu0 0.0
    %1199 = vmatpush1.msra.mxu0 0.0
    %1200 = vmatprep.subr.mxu0 0.0
    %1201 = vmatpush1.msra.mxu0 0.0
    %1202 = vmatprep.subr.mxu0 0.0
    %1203 = vmatpush1.msra.mxu0 0.0
    %1204 = vmatprep.subr.mxu0 0.0
    %1205 = vmatpush1.msra.mxu0 0.0
    %1206 = vmatprep.subr.mxu0 0.0
    %1207 = vmatpush1.msra.mxu0 0.0
    %1208 = vmatprep.subr.mxu0 0.0
    %1209 = vmatpush1.msra.mxu0 0.0
    %1210 = vmatprep.subr.mxu0 0.0
    %1211 = vmatpush1.msra.mxu0 0.0
    %1212 = vmatprep.subr.mxu0 0.0
    %1213 = vmatpush1.msra.mxu0 0.0
    %1214 = vmatprep.subr.mxu0 0.0
    %1215 = vmatpush1.msra.mxu0 0.0
    %1216 = vmatprep.subr.mxu0 0.0
    %1217 = vmatpush1.msra.mxu0 0.0
    %1218 = vmatprep.subr.mxu0 0.0
    %1219 = vmatpush1.msra.mxu0 0.0
    %1220 = vmatprep.subr.mxu0 0.0
    %1221 = vmatpush1.msra.mxu0 0.0
    %1222 = vmatprep.subr.mxu0 0.0
    %1223 = vmatpush1.msra.mxu0 0.0
    %1224 = vmatprep.subr.mxu0 0.0
    %1225 = vmatpush1.msra.mxu0 0.0
    %1226 = vmatprep.subr.mxu0 0.0
    %1227 = vmatpush1.msra.mxu0 0.0
    %1228 = vmatprep.subr.mxu0 0.0
    %1229 = vmatpush1.msra.mxu0 0.0
    %1230 = vmatprep.subr.mxu0 0.0
    %1231 = vmatpush1.msra.mxu0 0.0
    %1232 = vmatprep.subr.mxu0 0.0
    %1233 = vmatpush1.msra.mxu0 0.0
    %1234 = vmatprep.subr.mxu0 0.0
    %1235 = vmatpush1.msra.mxu0 0.0
    %1236 = vmatprep.subr.mxu0 0.0
    %1237 = vmatpush1.msra.mxu0 0.0
    %1238 = vmatprep.subr.mxu0 0.0
    %1239 = vmatpush1.msra.mxu0 0.0
    %1240 = vmatprep.subr.mxu0 0.0
    %1241 = vmatpush1.msra.mxu0 0.0
    %1242 = vmatprep.subr.mxu0 0.0
    %1243 = vmatpush1.msra.mxu0 0.0
    %1244 = vmatprep.mubr.f32.mxu0 0.0
    %1245 = vmatmul.mubr.f32.gmra.mrb[0].mxu0 %v1178
    %v1246 = vpop.f32.mrb[0].mxu0
    %v1247 = vadd.f32 %v124, %v1246
    %v1248 = vpop.f32.mrb[0].mxu0
    %1249 = vdwg.mxu0
    %1250 = vmatprep.subr.mxu0 0.0
    %1251 = vmatpush1.msra.mxu0 %v51
    %1252 = vmatprep.subr.mxu0 0.0
    %1253 = vmatpush1.msra.mxu0 0.0
    %1254 = vmatprep.subr.mxu0 0.0
    %1255 = vmatpush1.msra.mxu0 0.0
    %1256 = vmatprep.subr.mxu0 0.0
    %1257 = vmatpush1.msra.mxu0 0.0
    %1258 = vmatprep.subr.mxu0 0.0
    %1259 = vmatpush1.msra.mxu0 0.0
    %1260 = vmatprep.subr.mxu0 0.0
    %1261 = vmatpush1.msra.mxu0 0.0
    %1262 = vmatprep.subr.mxu0 0.0
    %1263 = vmatpush1.msra.mxu0 0.0
    %1264 = vmatprep.subr.mxu0 0.0
    %1265 = vmatpush1.msra.mxu0 0.0
    %1266 = vmatprep.subr.mxu0 0.0
    %1267 = vmatpush1.msra.mxu0 0.0
    %1268 = vmatprep.subr.mxu0 0.0
    %1269 = vmatpush1.msra.mxu0 0.0
    %1270 = vmatprep.subr.mxu0 0.0
    %1271 = vmatpush1.msra.mxu0 0.0
    %1272 = vmatprep.subr.mxu0 0.0
    %1273 = vmatpush1.msra.mxu0 0.0
    %1274 = vmatprep.subr.mxu0 0.0
    %1275 = vmatpush1.msra.mxu0 0.0
    %1276 = vmatprep.subr.mxu0 0.0
    %1277 = vmatpush1.msra.mxu0 0.0
    %1278 = vmatprep.subr.mxu0 0.0
    %1279 = vmatpush1.msra.mxu0 0.0
    %1280 = vmatprep.subr.mxu0 0.0
    %1281 = vmatpush1.msra.mxu0 0.0
    %1282 = vmatprep.subr.mxu0 0.0
    %1283 = vmatpush1.msra.mxu0 0.0
    %1284 = vmatprep.subr.mxu0 0.0
    %1285 = vmatpush1.msra.mxu0 0.0
    %1286 = vmatprep.subr.mxu0 0.0
    %1287 = vmatpush1.msra.mxu0 0.0
    %1288 = vmatprep.subr.mxu0 0.0
    %1289 = vmatpush1.msra.mxu0 0.0
    %1290 = vmatprep.subr.mxu0 0.0
    %1291 = vmatpush1.msra.mxu0 0.0
    %1292 = vmatprep.subr.mxu0 0.0
    %1293 = vmatpush1.msra.mxu0 0.0
    %1294 = vmatprep.subr.mxu0 0.0
    %1295 = vmatpush1.msra.mxu0 0.0
    %1296 = vmatprep.subr.mxu0 0.0
    %1297 = vmatpush1.msra.mxu0 0.0
    %1298 = vmatprep.subr.mxu0 0.0
    %1299 = vmatpush1.msra.mxu0 0.0
    %1300 = vmatprep.subr.mxu0 0.0
    %1301 = vmatpush1.msra.mxu0 0.0
    %1302 = vmatprep.subr.mxu0 0.0
    %1303 = vmatpush1.msra.mxu0 0.0
    %1304 = vmatprep.subr.mxu0 0.0
    %1305 = vmatpush1.msra.mxu0 0.0
    %1306 = vmatprep.subr.mxu0 0.0
    %1307 = vmatpush1.msra.mxu0 0.0
    %1308 = vmatprep.subr.mxu0 0.0
    %1309 = vmatpush1.msra.mxu0 0.0
    %1310 = vmatprep.subr.mxu0 0.0
    %1311 = vmatpush1.msra.mxu0 0.0
    %1312 = vmatprep.subr.mxu0 0.0
    %1313 = vmatpush1.msra.mxu0 0.0
    %1314 = vmatprep.mubr.f32.mxu0 0.0
    %1315 = vmatmul.mubr.f32.gmra.mrb[0].mxu0 %v954
    %v1316 = vpop.f32.mrb[0].mxu0
    %v1317 = vadd.f32 0.0, %v1316
    %v1318 = vpop.f32.mrb[0].mxu0
    %1319 = vdwg.mxu0
    %1320 = vmatprep.subr.mxu0 0.0
    %1321 = vmatpush1.msra.mxu0 %v1317
    %1322 = vmatprep.subr.mxu0 0.0
    %1323 = vmatpush1.msra.mxu0 0.0
    %1324 = vmatprep.subr.mxu0 0.0
    %1325 = vmatpush1.msra.mxu0 0.0
    %1326 = vmatprep.subr.mxu0 0.0
    %1327 = vmatpush1.msra.mxu0 0.0
    %1328 = vmatprep.subr.mxu0 0.0
    %1329 = vmatpush1.msra.mxu0 0.0
    %1330 = vmatprep.subr.mxu0 0.0
    %1331 = vmatpush1.msra.mxu0 0.0
    %1332 = vmatprep.subr.mxu0 0.0
    %1333 = vmatpush1.msra.mxu0 0.0
    %1334 = vmatprep.subr.mxu0 0.0
    %1335 = vmatpush1.msra.mxu0 0.0
    %1336 = vmatprep.subr.mxu0 0.0
    %1337 = vmatpush1.msra.mxu0 0.0
    %1338 = vmatprep.subr.mxu0 0.0
    %1339 = vmatpush1.msra.mxu0 0.0
    %1340 = vmatprep.subr.mxu0 0.0
    %1341 = vmatpush1.msra.mxu0 0.0
    %1342 = vmatprep.subr.mxu0 0.0
    %1343 = vmatpush1.msra.mxu0 0.0
    %1344 = vmatprep.subr.mxu0 0.0
    %1345 = vmatpush1.msra.mxu0 0.0
    %1346 = vmatprep.subr.mxu0 0.0
    %1347 = vmatpush1.msra.mxu0 0.0
    %1348 = vmatprep.subr.mxu0 0.0
    %1349 = vmatpush1.msra.mxu0 0.0
    %1350 = vmatprep.subr.mxu0 0.0
    %1351 = vmatpush1.msra.mxu0 0.0
    %1352 = vmatprep.subr.mxu0 0.0
    %1353 = vmatpush1.msra.mxu0 0.0
    %1354 = vmatprep.subr.mxu0 0.0
    %1355 = vmatpush1.msra.mxu0 0.0
    %1356 = vmatprep.subr.mxu0 0.0
    %1357 = vmatpush1.msra.mxu0 0.0
    %1358 = vmatprep.subr.mxu0 0.0
    %1359 = vmatpush1.msra.mxu0 0.0
    %1360 = vmatprep.subr.mxu0 0.0
    %1361 = vmatpush1.msra.mxu0 0.0
    %1362 = vmatprep.subr.mxu0 0.0
    %1363 = vmatpush1.msra.mxu0 0.0
    %1364 = vmatprep.subr.mxu0 0.0
    %1365 = vmatpush1.msra.mxu0 0.0
    %1366 = vmatprep.subr.mxu0 0.0
    %1367 = vmatpush1.msra.mxu0 0.0
    %1368 = vmatprep.subr.mxu0 0.0
    %1369 = vmatpush1.msra.mxu0 0.0
    %1370 = vmatprep.subr.mxu0 0.0
    %1371 = vmatpush1.msra.mxu0 0.0
    %1372 = vmatprep.subr.mxu0 0.0
    %1373 = vmatpush1.msra.mxu0 0.0
    %1374 = vmatprep.subr.mxu0 0.0
    %1375 = vmatpush1.msra.mxu0 0.0
    %1376 = vmatprep.subr.mxu0 0.0
    %1377 = vmatpush1.msra.mxu0 0.0
    %1378 = vmatprep.subr.mxu0 0.0
    %1379 = vmatpush1.msra.mxu0 0.0
    %1380 = vmatprep.subr.mxu0 0.0
    %1381 = vmatpush1.msra.mxu0 0.0
    %1382 = vmatprep.subr.mxu0 0.0
    %1383 = vmatpush1.msra.mxu0 0.0
    %1384 = vmatprep.mubr.f32.mxu0 0.0
    %1385 = vmatmul.mubr.f32.gmra.mrb[0].mxu0 %v441
    %v1386 = vpop.f32.mrb[0].mxu0
    %v1387 = vadd.f32 %v53, %v1386
    %v1388 = vpop.f32.mrb[0].mxu0
    %1389 = vdwg.mxu0
    %v1391 = vsel %vm136, %v1387, 0
    %1393 = vmatprep.subr.mxu0 0.0
    %1394 = vmatpush1.msra.mxu0 %v52
    %1395 = vmatprep.subr.mxu0 0.0
    %1396 = vmatpush1.msra.mxu0 0.0
    %1397 = vmatprep.subr.mxu0 0.0
    %1398 = vmatpush1.msra.mxu0 0.0
    %1399 = vmatprep.subr.mxu0 0.0
    %1400 = vmatpush1.msra.mxu0 0.0
    %1401 = vmatprep.subr.mxu0 0.0
    %1402 = vmatpush1.msra.mxu0 0.0
    %1403 = vmatprep.subr.mxu0 0.0
    %1404 = vmatpush1.msra.mxu0 0.0
    %1405 = vmatprep.subr.mxu0 0.0
    %1406 = vmatpush1.msra.mxu0 0.0
    %1407 = vmatprep.subr.mxu0 0.0
    %1408 = vmatpush1.msra.mxu0 0.0
    %1409 = vmatprep.subr.mxu0 0.0
    %1410 = vmatpush1.msra.mxu0 0.0
    %1411 = vmatprep.subr.mxu0 0.0
    %1412 = vmatpush1.msra.mxu0 0.0
    %1413 = vmatprep.subr.mxu0 0.0
    %1414 = vmatpush1.msra.mxu0 0.0
    %1415 = vmatprep.subr.mxu0 0.0
    %1416 = vmatpush1.msra.mxu0 0.0
    %1417 = vmatprep.subr.mxu0 0.0
    %1418 = vmatpush1.msra.mxu0 0.0
    %1419 = vmatprep.subr.mxu0 0.0
    %1420 = vmatpush1.msra.mxu0 0.0
    %1421 = vmatprep.subr.mxu0 0.0
    %1422 = vmatpush1.msra.mxu0 0.0
    %1423 = vmatprep.subr.mxu0 0.0
    %1424 = vmatpush1.msra.mxu0 0.0
    %1425 = vmatprep.subr.mxu0 0.0
    %1426 = vmatpush1.msra.mxu0 0.0
    %1427 = vmatprep.subr.mxu0 0.0
    %1428 = vmatpush1.msra.mxu0 0.0
    %1429 = vmatprep.subr.mxu0 0.0
    %1430 = vmatpush1.msra.mxu0 0.0
    %1431 = vmatprep.subr.mxu0 0.0
    %1432 = vmatpush1.msra.mxu0 0.0
    %1433 = vmatprep.subr.mxu0 0.0
    %1434 = vmatpush1.msra.mxu0 0.0
    %1435 = vmatprep.subr.mxu0 0.0
    %1436 = vmatpush1.msra.mxu0 0.0
    %1437 = vmatprep.subr.mxu0 0.0
    %1438 = vmatpush1.msra.mxu0 0.0
    %1439 = vmatprep.subr.mxu0 0.0
    %1440 = vmatpush1.msra.mxu0 0.0
    %1441 = vmatprep.subr.mxu0 0.0
    %1442 = vmatpush1.msra.mxu0 0.0
    %1443 = vmatprep.subr.mxu0 0.0
    %1444 = vmatpush1.msra.mxu0 0.0
    %1445 = vmatprep.subr.mxu0 0.0
    %1446 = vmatpush1.msra.mxu0 0.0
    %1447 = vmatprep.subr.mxu0 0.0
    %1448 = vmatpush1.msra.mxu0 0.0
    %1449 = vmatprep.subr.mxu0 0.0
    %1450 = vmatpush1.msra.mxu0 0.0
    %1451 = vmatprep.subr.mxu0 0.0
    %1452 = vmatpush1.msra.mxu0 0.0
    %1453 = vmatprep.subr.mxu0 0.0
    %1454 = vmatpush1.msra.mxu0 0.0
    %1455 = vmatprep.subr.mxu0 0.0
    %1456 = vmatpush1.msra.mxu0 0.0
    %1457 = vmatprep.mubr.f32.mxu0 0.0
    %1458 = vmatmul.mubr.f32.gmra.mrb[0].mxu0 %v1391
    %v1459 = vpop.f32.mrb[0].mxu0
    %v1460 = vadd.f32 0.0, %v1459
    %v1461 = vpop.f32.mrb[0].mxu0
    %1462 = vdwg.mxu0
    %1463 = vmatprep.subr.mxu0 0.0
    %1464 = vmatpush1.msra.mxu0 %v1460
    %1465 = vmatprep.subr.mxu0 0.0
    %1466 = vmatpush1.msra.mxu0 0.0
    %1467 = vmatprep.subr.mxu0 0.0
    %1468 = vmatpush1.msra.mxu0 0.0
    %1469 = vmatprep.subr.mxu0 0.0
    %1470 = vmatpush1.msra.mxu0 0.0
    %1471 = vmatprep.subr.mxu0 0.0
    %1472 = vmatpush1.msra.mxu0 0.0
    %1473 = vmatprep.subr.mxu0 0.0
    %1474 = vmatpush1.msra.mxu0 0.0
    %1475 = vmatprep.subr.mxu0 0.0
    %1476 = vmatpush1.msra.mxu0 0.0
    %1477 = vmatprep.subr.mxu0 0.0
    %1478 = vmatpush1.msra.mxu0 0.0
    %1479 = vmatprep.subr.mxu0 0.0
    %1480 = vmatpush1.msra.mxu0 0.0
    %1481 = vmatprep.subr.mxu0 0.0
    %1482 = vmatpush1.msra.mxu0 0.0
    %1483 = vmatprep.subr.mxu0 0.0
    %1484 = vmatpush1.msra.mxu0 0.0
    %1485 = vmatprep.subr.mxu0 0.0
    %1486 = vmatpush1.msra.mxu0 0.0
    %1487 = vmatprep.subr.mxu0 0.0
    %1488 = vmatpush1.msra.mxu0 0.0
    %1489 = vmatprep.subr.mxu0 0.0
    %1490 = vmatpush1.msra.mxu0 0.0
    %1491 = vmatprep.subr.mxu0 0.0
    %1492 = vmatpush1.msra.mxu0 0.0
    %1493 = vmatprep.subr.mxu0 0.0
    %1494 = vmatpush1.msra.mxu0 0.0
    %1495 = vmatprep.subr.mxu0 0.0
    %1496 = vmatpush1.msra.mxu0 0.0
    %1497 = vmatprep.subr.mxu0 0.0
    %1498 = vmatpush1.msra.mxu0 0.0
    %1499 = vmatprep.subr.mxu0 0.0
    %1500 = vmatpush1.msra.mxu0 0.0
    %1501 = vmatprep.subr.mxu0 0.0
    %1502 = vmatpush1.msra.mxu0 0.0
    %1503 = vmatprep.subr.mxu0 0.0
    %1504 = vmatpush1.msra.mxu0 0.0
    %1505 = vmatprep.subr.mxu0 0.0
    %1506 = vmatpush1.msra.mxu0 0.0
    %1507 = vmatprep.subr.mxu0 0.0
    %1508 = vmatpush1.msra.mxu0 0.0
    %1509 = vmatprep.subr.mxu0 0.0
    %1510 = vmatpush1.msra.mxu0 0.0
    %1511 = vmatprep.subr.mxu0 0.0
    %1512 = vmatpush1.msra.mxu0 0.0
    %1513 = vmatprep.subr.mxu0 0.0
    %1514 = vmatpush1.msra.mxu0 0.0
    %1515 = vmatprep.subr.mxu0 0.0
    %1516 = vmatpush1.msra.mxu0 0.0
    %1517 = vmatprep.subr.mxu0 0.0
    %1518 = vmatpush1.msra.mxu0 0.0
    %1519 = vmatprep.subr.mxu0 0.0
    %1520 = vmatpush1.msra.mxu0 0.0
    %1521 = vmatprep.subr.mxu0 0.0
    %1522 = vmatpush1.msra.mxu0 0.0
    %1523 = vmatprep.subr.mxu0 0.0
    %1524 = vmatpush1.msra.mxu0 0.0
    %1525 = vmatprep.subr.mxu0 0.0
    %1526 = vmatpush1.msra.mxu0 0.0
    %1527 = vmatprep.mubr.f32.mxu0 0.0
    %1528 = vmatmul.mubr.f32.gmra.mrb[0].mxu0 %v587
    %v1529 = vpop.f32.mrb[0].mxu0
    %v1530 = vadd.f32 %v54, %v1529
    %v1531 = vpop.f32.mrb[0].mxu0
    %1532 = vdwg.mxu0
    %s1533 = scalar_lea.vmem [#allocation4], 4
    %1534 = vst.msk [vmem:[%s1533] sm:$0x3] %vm659, %v1176
    %s1535 = scalar_lea.vmem %s12, 4
    %1536 = vst.msk [vmem:[%s1535] sm:$0x3] %vm661, %v1247
    %s1537 = scalar_lea.vmem [#allocation6], 16
    %1538 = vst.msk [vmem:[%s1537] sm:$0xff] %vm136, %v1387
    %s1539 = scalar_lea.vmem %s13, 8
    %1540 = vst.msk [vmem:[%s1539] sm:$0xf] %vm664, %v1530
    %v1541 = vrot.slane %v210, 6
    %1543 = vmatprep.subr.mxu0 0.0
    %1544 = vmatpush1.msra.mxu0 %v51
    %1545 = vmatprep.subr.mxu0 0.0
    %1546 = vmatpush1.msra.mxu0 0.0
    %1547 = vmatprep.subr.mxu0 0.0
    %1548 = vmatpush1.msra.mxu0 0.0
    %1549 = vmatprep.subr.mxu0 0.0
    %1550 = vmatpush1.msra.mxu0 0.0
    %1551 = vmatprep.subr.mxu0 0.0
    %1552 = vmatpush1.msra.mxu0 0.0
    %1553 = vmatprep.subr.mxu0 0.0
    %1554 = vmatpush1.msra.mxu0 0.0
    %1555 = vmatprep.subr.mxu0 0.0
    %1556 = vmatpush1.msra.mxu0 0.0
    %1557 = vmatprep.subr.mxu0 0.0
    %1558 = vmatpush1.msra.mxu0 0.0
    %1559 = vmatprep.subr.mxu0 0.0
    %1560 = vmatpush1.msra.mxu0 0.0
    %1561 = vmatprep.subr.mxu0 0.0
    %1562 = vmatpush1.msra.mxu0 0.0
    %1563 = vmatprep.subr.mxu0 0.0
    %1564 = vmatpush1.msra.mxu0 0.0
    %1565 = vmatprep.subr.mxu0 0.0
    %1566 = vmatpush1.msra.mxu0 0.0
    %1567 = vmatprep.subr.mxu0 0.0
    %1568 = vmatpush1.msra.mxu0 0.0
    %1569 = vmatprep.subr.mxu0 0.0
    %1570 = vmatpush1.msra.mxu0 0.0
    %1571 = vmatprep.subr.mxu0 0.0
    %1572 = vmatpush1.msra.mxu0 0.0
    %1573 = vmatprep.subr.mxu0 0.0
    %1574 = vmatpush1.msra.mxu0 0.0
    %1575 = vmatprep.subr.mxu0 0.0
    %1576 = vmatpush1.msra.mxu0 0.0
    %1577 = vmatprep.subr.mxu0 0.0
    %1578 = vmatpush1.msra.mxu0 0.0
    %1579 = vmatprep.subr.mxu0 0.0
    %1580 = vmatpush1.msra.mxu0 0.0
    %1581 = vmatprep.subr.mxu0 0.0
    %1582 = vmatpush1.msra.mxu0 0.0
    %1583 = vmatprep.subr.mxu0 0.0
    %1584 = vmatpush1.msra.mxu0 0.0
    %1585 = vmatprep.subr.mxu0 0.0
    %1586 = vmatpush1.msra.mxu0 0.0
    %1587 = vmatprep.subr.mxu0 0.0
    %1588 = vmatpush1.msra.mxu0 0.0
    %1589 = vmatprep.subr.mxu0 0.0
    %1590 = vmatpush1.msra.mxu0 0.0
    %1591 = vmatprep.subr.mxu0 0.0
    %1592 = vmatpush1.msra.mxu0 0.0
    %1593 = vmatprep.subr.mxu0 0.0
    %1594 = vmatpush1.msra.mxu0 0.0
    %1595 = vmatprep.subr.mxu0 0.0
    %1596 = vmatpush1.msra.mxu0 0.0
    %1597 = vmatprep.subr.mxu0 0.0
    %1598 = vmatpush1.msra.mxu0 0.0
    %1599 = vmatprep.subr.mxu0 0.0
    %1600 = vmatpush1.msra.mxu0 0.0
    %1601 = vmatprep.subr.mxu0 0.0
    %1602 = vmatpush1.msra.mxu0 0.0
    %1603 = vmatprep.subr.mxu0 0.0
    %1604 = vmatpush1.msra.mxu0 0.0
    %1605 = vmatprep.subr.mxu0 0.0
    %1606 = vmatpush1.msra.mxu0 0.0
    %1607 = vmatprep.mubr.f32.mxu0 0.0
    %1608 = vmatmul.mubr.f32.gmra.mrb[0].mxu0 %v1178
    %v1609 = vpop.f32.mrb[0].mxu0
    %v1610 = vadd.f32 %v1541, %v1609
    %v1611 = vpop.f32.mrb[0].mxu0
    %1612 = vdwg.mxu0
    %v1613 = vtanh.pop %v1610
    %v1615 = vsel %vm136, %v1613, 0
    %1617 = vmatprep.subr.mxu0 0.0
    %1618 = vmatpush1.msra.mxu0 %v52
    %1619 = vmatprep.subr.mxu0 0.0
    %1620 = vmatpush1.msra.mxu0 0.0
    %1621 = vmatprep.subr.mxu0 0.0
    %1622 = vmatpush1.msra.mxu0 0.0
    %1623 = vmatprep.subr.mxu0 0.0
    %1624 = vmatpush1.msra.mxu0 0.0
    %1625 = vmatprep.subr.mxu0 0.0
    %1626 = vmatpush1.msra.mxu0 0.0
    %1627 = vmatprep.subr.mxu0 0.0
    %1628 = vmatpush1.msra.mxu0 0.0
    %1629 = vmatprep.subr.mxu0 0.0
    %1630 = vmatpush1.msra.mxu0 0.0
    %1631 = vmatprep.subr.mxu0 0.0
    %1632 = vmatpush1.msra.mxu0 0.0
    %1633 = vmatprep.subr.mxu0 0.0
    %1634 = vmatpush1.msra.mxu0 0.0
    %1635 = vmatprep.subr.mxu0 0.0
    %1636 = vmatpush1.msra.mxu0 0.0
    %1637 = vmatprep.subr.mxu0 0.0
    %1638 = vmatpush1.msra.mxu0 0.0
    %1639 = vmatprep.subr.mxu0 0.0
    %1640 = vmatpush1.msra.mxu0 0.0
    %1641 = vmatprep.subr.mxu0 0.0
    %1642 = vmatpush1.msra.mxu0 0.0
    %1643 = vmatprep.subr.mxu0 0.0
    %1644 = vmatpush1.msra.mxu0 0.0
    %1645 = vmatprep.subr.mxu0 0.0
    %1646 = vmatpush1.msra.mxu0 0.0
    %1647 = vmatprep.subr.mxu0 0.0
    %1648 = vmatpush1.msra.mxu0 0.0
    %1649 = vmatprep.subr.mxu0 0.0
    %1650 = vmatpush1.msra.mxu0 0.0
    %1651 = vmatprep.subr.mxu0 0.0
    %1652 = vmatpush1.msra.mxu0 0.0
    %1653 = vmatprep.subr.mxu0 0.0
    %1654 = vmatpush1.msra.mxu0 0.0
    %1655 = vmatprep.subr.mxu0 0.0
    %1656 = vmatpush1.msra.mxu0 0.0
    %1657 = vmatprep.subr.mxu0 0.0
    %1658 = vmatpush1.msra.mxu0 0.0
    %1659 = vmatprep.subr.mxu0 0.0
    %1660 = vmatpush1.msra.mxu0 0.0
    %1661 = vmatprep.subr.mxu0 0.0
    %1662 = vmatpush1.msra.mxu0 0.0
    %1663 = vmatprep.subr.mxu0 0.0
    %1664 = vmatpush1.msra.mxu0 0.0
    %1665 = vmatprep.subr.mxu0 0.0
    %1666 = vmatpush1.msra.mxu0 0.0
    %1667 = vmatprep.subr.mxu0 0.0
    %1668 = vmatpush1.msra.mxu0 0.0
    %1669 = vmatprep.subr.mxu0 0.0
    %1670 = vmatpush1.msra.mxu0 0.0
    %1671 = vmatprep.subr.mxu0 0.0
    %1672 = vmatpush1.msra.mxu0 0.0
    %1673 = vmatprep.subr.mxu0 0.0
    %1674 = vmatpush1.msra.mxu0 0.0
    %1675 = vmatprep.subr.mxu0 0.0
    %1676 = vmatpush1.msra.mxu0 0.0
    %1677 = vmatprep.subr.mxu0 0.0
    %1678 = vmatpush1.msra.mxu0 0.0
    %1679 = vmatprep.subr.mxu0 0.0
    %1680 = vmatpush1.msra.mxu0 0.0
    %1681 = vmatprep.mubr.f32.mxu0 0.0
    %1682 = vmatmul.mubr.f32.gmra.mrb[0].mxu0 %v1615
    %v1683 = vpop.f32.mrb[0].mxu0
    %v1684 = vadd.f32 %v124, %v1683
    %v1685 = vpop.f32.mrb[0].mxu0
    %1686 = vdwg.mxu0
    %1687 = vmatprep.subr.mxu0 0.0
    %1688 = vmatpush1.msra.mxu0 %v51
    %1689 = vmatprep.subr.mxu0 0.0
    %1690 = vmatpush1.msra.mxu0 0.0
    %1691 = vmatprep.subr.mxu0 0.0
    %1692 = vmatpush1.msra.mxu0 0.0
    %1693 = vmatprep.subr.mxu0 0.0
    %1694 = vmatpush1.msra.mxu0 0.0
    %1695 = vmatprep.subr.mxu0 0.0
    %1696 = vmatpush1.msra.mxu0 0.0
    %1697 = vmatprep.subr.mxu0 0.0
    %1698 = vmatpush1.msra.mxu0 0.0
    %1699 = vmatprep.subr.mxu0 0.0
    %1700 = vmatpush1.msra.mxu0 0.0
    %1701 = vmatprep.subr.mxu0 0.0
    %1702 = vmatpush1.msra.mxu0 0.0
    %1703 = vmatprep.subr.mxu0 0.0
    %1704 = vmatpush1.msra.mxu0 0.0
    %1705 = vmatprep.subr.mxu0 0.0
    %1706 = vmatpush1.msra.mxu0 0.0
    %1707 = vmatprep.subr.mxu0 0.0
    %1708 = vmatpush1.msra.mxu0 0.0
    %1709 = vmatprep.subr.mxu0 0.0
    %1710 = vmatpush1.msra.mxu0 0.0
    %1711 = vmatprep.subr.mxu0 0.0
    %1712 = vmatpush1.msra.mxu0 0.0
    %1713 = vmatprep.subr.mxu0 0.0
    %1714 = vmatpush1.msra.mxu0 0.0
    %1715 = vmatprep.subr.mxu0 0.0
    %1716 = vmatpush1.msra.mxu0 0.0
    %1717 = vmatprep.subr.mxu0 0.0
    %1718 = vmatpush1.msra.mxu0 0.0
    %1719 = vmatprep.subr.mxu0 0.0
    %1720 = vmatpush1.msra.mxu0 0.0
    %1721 = vmatprep.subr.mxu0 0.0
    %1722 = vmatpush1.msra.mxu0 0.0
    %1723 = vmatprep.subr.mxu0 0.0
    %1724 = vmatpush1.msra.mxu0 0.0
    %1725 = vmatprep.subr.mxu0 0.0
    %1726 = vmatpush1.msra.mxu0 0.0
    %1727 = vmatprep.subr.mxu0 0.0
    %1728 = vmatpush1.msra.mxu0 0.0
    %1729 = vmatprep.subr.mxu0 0.0
    %1730 = vmatpush1.msra.mxu0 0.0
    %1731 = vmatprep.subr.mxu0 0.0
    %1732 = vmatpush1.msra.mxu0 0.0
    %1733 = vmatprep.subr.mxu0 0.0
    %1734 = vmatpush1.msra.mxu0 0.0
    %1735 = vmatprep.subr.mxu0 0.0
    %1736 = vmatpush1.msra.mxu0 0.0
    %1737 = vmatprep.subr.mxu0 0.0
    %1738 = vmatpush1.msra.mxu0 0.0
    %1739 = vmatprep.subr.mxu0 0.0
    %1740 = vmatpush1.msra.mxu0 0.0
    %1741 = vmatprep.subr.mxu0 0.0
    %1742 = vmatpush1.msra.mxu0 0.0
    %1743 = vmatprep.subr.mxu0 0.0
    %1744 = vmatpush1.msra.mxu0 0.0
    %1745 = vmatprep.subr.mxu0 0.0
    %1746 = vmatpush1.msra.mxu0 0.0
    %1747 = vmatprep.subr.mxu0 0.0
    %1748 = vmatpush1.msra.mxu0 0.0
    %1749 = vmatprep.subr.mxu0 0.0
    %1750 = vmatpush1.msra.mxu0 0.0
    %1751 = vmatprep.mubr.f32.mxu0 0.0
    %1752 = vmatmul.mubr.f32.gmra.mrb[0].mxu0 %v1391
    %v1753 = vpop.f32.mrb[0].mxu0
    %v1754 = vadd.f32 0.0, %v1753
    %v1755 = vpop.f32.mrb[0].mxu0
    %1756 = vdwg.mxu0
    %1757 = vmatprep.subr.mxu0 0.0
    %1758 = vmatpush1.msra.mxu0 %v1754
    %1759 = vmatprep.subr.mxu0 0.0
    %1760 = vmatpush1.msra.mxu0 0.0
    %1761 = vmatprep.subr.mxu0 0.0
    %1762 = vmatpush1.msra.mxu0 0.0
    %1763 = vmatprep.subr.mxu0 0.0
    %1764 = vmatpush1.msra.mxu0 0.0
    %1765 = vmatprep.subr.mxu0 0.0
    %1766 = vmatpush1.msra.mxu0 0.0
    %1767 = vmatprep.subr.mxu0 0.0
    %1768 = vmatpush1.msra.mxu0 0.0
    %1769 = vmatprep.subr.mxu0 0.0
    %1770 = vmatpush1.msra.mxu0 0.0
    %1771 = vmatprep.subr.mxu0 0.0
    %1772 = vmatpush1.msra.mxu0 0.0
    %1773 = vmatprep.subr.mxu0 0.0
    %1774 = vmatpush1.msra.mxu0 0.0
    %1775 = vmatprep.subr.mxu0 0.0
    %1776 = vmatpush1.msra.mxu0 0.0
    %1777 = vmatprep.subr.mxu0 0.0
    %1778 = vmatpush1.msra.mxu0 0.0
    %1779 = vmatprep.subr.mxu0 0.0
    %1780 = vmatpush1.msra.mxu0 0.0
    %1781 = vmatprep.subr.mxu0 0.0
    %1782 = vmatpush1.msra.mxu0 0.0
    %1783 = vmatprep.subr.mxu0 0.0
    %1784 = vmatpush1.msra.mxu0 0.0
    %1785 = vmatprep.subr.mxu0 0.0
    %1786 = vmatpush1.msra.mxu0 0.0
    %1787 = vmatprep.subr.mxu0 0.0
    %1788 = vmatpush1.msra.mxu0 0.0
    %1789 = vmatprep.subr.mxu0 0.0
    %1790 = vmatpush1.msra.mxu0 0.0
    %1791 = vmatprep.subr.mxu0 0.0
    %1792 = vmatpush1.msra.mxu0 0.0
    %1793 = vmatprep.subr.mxu0 0.0
    %1794 = vmatpush1.msra.mxu0 0.0
    %1795 = vmatprep.subr.mxu0 0.0
    %1796 = vmatpush1.msra.mxu0 0.0
    %1797 = vmatprep.subr.mxu0 0.0
    %1798 = vmatpush1.msra.mxu0 0.0
    %1799 = vmatprep.subr.mxu0 0.0
    %1800 = vmatpush1.msra.mxu0 0.0
    %1801 = vmatprep.subr.mxu0 0.0
    %1802 = vmatpush1.msra.mxu0 0.0
    %1803 = vmatprep.subr.mxu0 0.0
    %1804 = vmatpush1.msra.mxu0 0.0
    %1805 = vmatprep.subr.mxu0 0.0
    %1806 = vmatpush1.msra.mxu0 0.0
    %1807 = vmatprep.subr.mxu0 0.0
    %1808 = vmatpush1.msra.mxu0 0.0
    %1809 = vmatprep.subr.mxu0 0.0
    %1810 = vmatpush1.msra.mxu0 0.0
    %1811 = vmatprep.subr.mxu0 0.0
    %1812 = vmatpush1.msra.mxu0 0.0
    %1813 = vmatprep.subr.mxu0 0.0
    %1814 = vmatpush1.msra.mxu0 0.0
    %1815 = vmatprep.subr.mxu0 0.0
    %1816 = vmatpush1.msra.mxu0 0.0
    %1817 = vmatprep.subr.mxu0 0.0
    %1818 = vmatpush1.msra.mxu0 0.0
    %1819 = vmatprep.subr.mxu0 0.0
    %1820 = vmatpush1.msra.mxu0 0.0
    %1821 = vmatprep.mubr.f32.mxu0 0.0
    %1822 = vmatmul.mubr.f32.gmra.mrb[0].mxu0 %v441
    %v1823 = vpop.f32.mrb[0].mxu0
    %v1824 = vadd.f32 %v53, %v1823
    %v1825 = vpop.f32.mrb[0].mxu0
    %1826 = vdwg.mxu0
    %v1828 = vsel %vm136, %v1824, 0
    %1830 = vmatprep.subr.mxu0 0.0
    %1831 = vmatpush1.msra.mxu0 %v52
    %1832 = vmatprep.subr.mxu0 0.0
    %1833 = vmatpush1.msra.mxu0 0.0
    %1834 = vmatprep.subr.mxu0 0.0
    %1835 = vmatpush1.msra.mxu0 0.0
    %1836 = vmatprep.subr.mxu0 0.0
    %1837 = vmatpush1.msra.mxu0 0.0
    %1838 = vmatprep.subr.mxu0 0.0
    %1839 = vmatpush1.msra.mxu0 0.0
    %1840 = vmatprep.subr.mxu0 0.0
    %1841 = vmatpush1.msra.mxu0 0.0
    %1842 = vmatprep.subr.mxu0 0.0
    %1843 = vmatpush1.msra.mxu0 0.0
    %1844 = vmatprep.subr.mxu0 0.0
    %1845 = vmatpush1.msra.mxu0 0.0
    %1846 = vmatprep.subr.mxu0 0.0
    %1847 = vmatpush1.msra.mxu0 0.0
    %1848 = vmatprep.subr.mxu0 0.0
    %1849 = vmatpush1.msra.mxu0 0.0
    %1850 = vmatprep.subr.mxu0 0.0
    %1851 = vmatpush1.msra.mxu0 0.0
    %1852 = vmatprep.subr.mxu0 0.0
    %1853 = vmatpush1.msra.mxu0 0.0
    %1854 = vmatprep.subr.mxu0 0.0
    %1855 = vmatpush1.msra.mxu0 0.0
    %1856 = vmatprep.subr.mxu0 0.0
    %1857 = vmatpush1.msra.mxu0 0.0
    %1858 = vmatprep.subr.mxu0 0.0
    %1859 = vmatpush1.msra.mxu0 0.0
    %1860 = vmatprep.subr.mxu0 0.0
    %1861 = vmatpush1.msra.mxu0 0.0
    %1862 = vmatprep.subr.mxu0 0.0
    %1863 = vmatpush1.msra.mxu0 0.0
    %1864 = vmatprep.subr.mxu0 0.0
    %1865 = vmatpush1.msra.mxu0 0.0
    %1866 = vmatprep.subr.mxu0 0.0
    %1867 = vmatpush1.msra.mxu0 0.0
    %1868 = vmatprep.subr.mxu0 0.0
    %1869 = vmatpush1.msra.mxu0 0.0
    %1870 = vmatprep.subr.mxu0 0.0
    %1871 = vmatpush1.msra.mxu0 0.0
    %1872 = vmatprep.subr.mxu0 0.0
    %1873 = vmatpush1.msra.mxu0 0.0
    %1874 = vmatprep.subr.mxu0 0.0
    %1875 = vmatpush1.msra.mxu0 0.0
    %1876 = vmatprep.subr.mxu0 0.0
    %1877 = vmatpush1.msra.mxu0 0.0
    %1878 = vmatprep.subr.mxu0 0.0
    %1879 = vmatpush1.msra.mxu0 0.0
    %1880 = vmatprep.subr.mxu0 0.0
    %1881 = vmatpush1.msra.mxu0 0.0
    %1882 = vmatprep.subr.mxu0 0.0
    %1883 = vmatpush1.msra.mxu0 0.0
    %1884 = vmatprep.subr.mxu0 0.0
    %1885 = vmatpush1.msra.mxu0 0.0
    %1886 = vmatprep.subr.mxu0 0.0
    %1887 = vmatpush1.msra.mxu0 0.0
    %1888 = vmatprep.subr.mxu0 0.0
    %1889 = vmatpush1.msra.mxu0 0.0
    %1890 = vmatprep.subr.mxu0 0.0
    %1891 = vmatpush1.msra.mxu0 0.0
    %1892 = vmatprep.subr.mxu0 0.0
    %1893 = vmatpush1.msra.mxu0 0.0
    %1894 = vmatprep.mubr.f32.mxu0 0.0
    %1895 = vmatmul.mubr.f32.gmra.mrb[0].mxu0 %v1828
    %v1896 = vpop.f32.mrb[0].mxu0
    %v1897 = vadd.f32 0.0, %v1896
    %v1898 = vpop.f32.mrb[0].mxu0
    %1899 = vdwg.mxu0
    %1900 = vmatprep.subr.mxu0 0.0
    %1901 = vmatpush1.msra.mxu0 %v1897
    %1902 = vmatprep.subr.mxu0 0.0
    %1903 = vmatpush1.msra.mxu0 0.0
    %1904 = vmatprep.subr.mxu0 0.0
    %1905 = vmatpush1.msra.mxu0 0.0
    %1906 = vmatprep.subr.mxu0 0.0
    %1907 = vmatpush1.msra.mxu0 0.0
    %1908 = vmatprep.subr.mxu0 0.0
    %1909 = vmatpush1.msra.mxu0 0.0
    %1910 = vmatprep.subr.mxu0 0.0
    %1911 = vmatpush1.msra.mxu0 0.0
    %1912 = vmatprep.subr.mxu0 0.0
    %1913 = vmatpush1.msra.mxu0 0.0
    %1914 = vmatprep.subr.mxu0 0.0
    %1915 = vmatpush1.msra.mxu0 0.0
    %1916 = vmatprep.subr.mxu0 0.0
    %1917 = vmatpush1.msra.mxu0 0.0
    %1918 = vmatprep.subr.mxu0 0.0
    %1919 = vmatpush1.msra.mxu0 0.0
    %1920 = vmatprep.subr.mxu0 0.0
    %1921 = vmatpush1.msra.mxu0 0.0
    %1922 = vmatprep.subr.mxu0 0.0
    %1923 = vmatpush1.msra.mxu0 0.0
    %1924 = vmatprep.subr.mxu0 0.0
    %1925 = vmatpush1.msra.mxu0 0.0
    %1926 = vmatprep.subr.mxu0 0.0
    %1927 = vmatpush1.msra.mxu0 0.0
    %1928 = vmatprep.subr.mxu0 0.0
    %1929 = vmatpush1.msra.mxu0 0.0
    %1930 = vmatprep.subr.mxu0 0.0
    %1931 = vmatpush1.msra.mxu0 0.0
    %1932 = vmatprep.subr.mxu0 0.0
    %1933 = vmatpush1.msra.mxu0 0.0
    %1934 = vmatprep.subr.mxu0 0.0
    %1935 = vmatpush1.msra.mxu0 0.0
    %1936 = vmatprep.subr.mxu0 0.0
    %1937 = vmatpush1.msra.mxu0 0.0
    %1938 = vmatprep.subr.mxu0 0.0
    %1939 = vmatpush1.msra.mxu0 0.0
    %1940 = vmatprep.subr.mxu0 0.0
    %1941 = vmatpush1.msra.mxu0 0.0
    %1942 = vmatprep.subr.mxu0 0.0
    %1943 = vmatpush1.msra.mxu0 0.0
    %1944 = vmatprep.subr.mxu0 0.0
    %1945 = vmatpush1.msra.mxu0 0.0
    %1946 = vmatprep.subr.mxu0 0.0
    %1947 = vmatpush1.msra.mxu0 0.0
    %1948 = vmatprep.subr.mxu0 0.0
    %1949 = vmatpush1.msra.mxu0 0.0
    %1950 = vmatprep.subr.mxu0 0.0
    %1951 = vmatpush1.msra.mxu0 0.0
    %1952 = vmatprep.subr.mxu0 0.0
    %1953 = vmatpush1.msra.mxu0 0.0
    %1954 = vmatprep.subr.mxu0 0.0
    %1955 = vmatpush1.msra.mxu0 0.0
    %1956 = vmatprep.subr.mxu0 0.0
    %1957 = vmatpush1.msra.mxu0 0.0
    %1958 = vmatprep.subr.mxu0 0.0
    %1959 = vmatpush1.msra.mxu0 0.0
    %1960 = vmatprep.subr.mxu0 0.0
    %1961 = vmatpush1.msra.mxu0 0.0
    %1962 = vmatprep.subr.mxu0 0.0
    %1963 = vmatpush1.msra.mxu0 0.0
    %1964 = vmatprep.mubr.f32.mxu0 0.0
    %1965 = vmatmul.mubr.f32.gmra.mrb[0].mxu0 %v587
    %v1966 = vpop.f32.mrb[0].mxu0
    %v1967 = vadd.f32 %v54, %v1966
    %v1968 = vpop.f32.mrb[0].mxu0
    %1969 = vdwg.mxu0
    %s1970 = scalar_lea.vmem [#allocation4], 6
    %1971 = vst.msk [vmem:[%s1970] sm:$0x3] %vm659, %v1613
    %s1972 = scalar_lea.vmem %s12, 6
    %1973 = vst.msk [vmem:[%s1972] sm:$0x3] %vm661, %v1684
    %s1974 = scalar_lea.vmem [#allocation6], 24
    %1975 = vst.msk [vmem:[%s1974] sm:$0xff] %vm136, %v1824
    %s1976 = scalar_lea.vmem %s13, 12
    %1977 = vst.msk [vmem:[%s1976] sm:$0xf] %vm664, %v1967
    %1978 = vmatprep.subr.mxu0 0.0
    %1979 = vmatpush1.msra.mxu0 %v51
    %1980 = vmatprep.subr.mxu0 0.0
    %1981 = vmatpush1.msra.mxu0 0.0
    %1982 = vmatprep.subr.mxu0 0.0
    %1983 = vmatpush1.msra.mxu0 0.0
    %1984 = vmatprep.subr.mxu0 0.0
    %1985 = vmatpush1.msra.mxu0 0.0
    %1986 = vmatprep.subr.mxu0 0.0
    %1987 = vmatpush1.msra.mxu0 0.0
    %1988 = vmatprep.subr.mxu0 0.0
    %1989 = vmatpush1.msra.mxu0 0.0
    %1990 = vmatprep.subr.mxu0 0.0
    %1991 = vmatpush1.msra.mxu0 0.0
    %1992 = vmatprep.subr.mxu0 0.0
    %1993 = vmatpush1.msra.mxu0 0.0
    %1994 = vmatprep.subr.mxu0 0.0
    %1995 = vmatpush1.msra.mxu0 0.0
    %1996 = vmatprep.subr.mxu0 0.0
    %1997 = vmatpush1.msra.mxu0 0.0
    %1998 = vmatprep.subr.mxu0 0.0
    %1999 = vmatpush1.msra.mxu0 0.0
    %2000 = vmatprep.subr.mxu0 0.0
    %2001 = vmatpush1.msra.mxu0 0.0
    %2002 = vmatprep.subr.mxu0 0.0
    %2003 = vmatpush1.msra.mxu0 0.0
    %2004 = vmatprep.subr.mxu0 0.0
    %2005 = vmatpush1.msra.mxu0 0.0
    %2006 = vmatprep.subr.mxu0 0.0
    %2007 = vmatpush1.msra.mxu0 0.0
    %2008 = vmatprep.subr.mxu0 0.0
    %2009 = vmatpush1.msra.mxu0 0.0
    %2010 = vmatprep.subr.mxu0 0.0
    %2011 = vmatpush1.msra.mxu0 0.0
    %2012 = vmatprep.subr.mxu0 0.0
    %2013 = vmatpush1.msra.mxu0 0.0
    %2014 = vmatprep.subr.mxu0 0.0
    %2015 = vmatpush1.msra.mxu0 0.0
    %2016 = vmatprep.subr.mxu0 0.0
    %2017 = vmatpush1.msra.mxu0 0.0
    %2018 = vmatprep.subr.mxu0 0.0
    %2019 = vmatpush1.msra.mxu0 0.0
    %2020 = vmatprep.subr.mxu0 0.0
    %2021 = vmatpush1.msra.mxu0 0.0
    %2022 = vmatprep.subr.mxu0 0.0
    %2023 = vmatpush1.msra.mxu0 0.0
    %2024 = vmatprep.subr.mxu0 0.0
    %2025 = vmatpush1.msra.mxu0 0.0
    %2026 = vmatprep.subr.mxu0 0.0
    %2027 = vmatpush1.msra.mxu0 0.0
    %2028 = vmatprep.subr.mxu0 0.0
    %2029 = vmatpush1.msra.mxu0 0.0
    %2030 = vmatprep.subr.mxu0 0.0
    %2031 = vmatpush1.msra.mxu0 0.0
    %2032 = vmatprep.subr.mxu0 0.0
    %2033 = vmatpush1.msra.mxu0 0.0
    %2034 = vmatprep.subr.mxu0 0.0
    %2035 = vmatpush1.msra.mxu0 0.0
    %2036 = vmatprep.subr.mxu0 0.0
    %2037 = vmatpush1.msra.mxu0 0.0
    %2038 = vmatprep.subr.mxu0 0.0
    %2039 = vmatpush1.msra.mxu0 0.0
    %2040 = vmatprep.subr.mxu0 0.0
    %2041 = vmatpush1.msra.mxu0 0.0
    %2042 = vmatprep.mubr.f32.mxu0 0.0
    %2043 = vmatmul.mubr.f32.gmra.mrb[0].mxu0 %v1615
    %v2044 = vpop.f32.mrb[0].mxu0
    %v2045 = vadd.f32 %v215, %v2044
    %v2046 = vpop.f32.mrb[0].mxu0
    %2047 = vdwg.mxu0
    %v2048 = vtanh.pop %v2045
    %v2050 = vsel %vm136, %v2048, 0
    %2052 = vmatprep.subr.mxu0 0.0
    %2053 = vmatpush1.msra.mxu0 %v52
    %2054 = vmatprep.subr.mxu0 0.0
    %2055 = vmatpush1.msra.mxu0 0.0
    %2056 = vmatprep.subr.mxu0 0.0
    %2057 = vmatpush1.msra.mxu0 0.0
    %2058 = vmatprep.subr.mxu0 0.0
    %2059 = vmatpush1.msra.mxu0 0.0
    %2060 = vmatprep.subr.mxu0 0.0
    %2061 = vmatpush1.msra.mxu0 0.0
    %2062 = vmatprep.subr.mxu0 0.0
    %2063 = vmatpush1.msra.mxu0 0.0
    %2064 = vmatprep.subr.mxu0 0.0
    %2065 = vmatpush1.msra.mxu0 0.0
    %2066 = vmatprep.subr.mxu0 0.0
    %2067 = vmatpush1.msra.mxu0 0.0
    %2068 = vmatprep.subr.mxu0 0.0
    %2069 = vmatpush1.msra.mxu0 0.0
    %2070 = vmatprep.subr.mxu0 0.0
    %2071 = vmatpush1.msra.mxu0 0.0
    %2072 = vmatprep.subr.mxu0 0.0
    %2073 = vmatpush1.msra.mxu0 0.0
    %2074 = vmatprep.subr.mxu0 0.0
    %2075 = vmatpush1.msra.mxu0 0.0
    %2076 = vmatprep.subr.mxu0 0.0
    %2077 = vmatpush1.msra.mxu0 0.0
    %2078 = vmatprep.subr.mxu0 0.0
    %2079 = vmatpush1.msra.mxu0 0.0
    %2080 = vmatprep.subr.mxu0 0.0
    %2081 = vmatpush1.msra.mxu0 0.0
    %2082 = vmatprep.subr.mxu0 0.0
    %2083 = vmatpush1.msra.mxu0 0.0
    %2084 = vmatprep.subr.mxu0 0.0
    %2085 = vmatpush1.msra.mxu0 0.0
    %2086 = vmatprep.subr.mxu0 0.0
    %2087 = vmatpush1.msra.mxu0 0.0
    %2088 = vmatprep.subr.mxu0 0.0
    %2089 = vmatpush1.msra.mxu0 0.0
    %2090 = vmatprep.subr.mxu0 0.0
    %2091 = vmatpush1.msra.mxu0 0.0
    %2092 = vmatprep.subr.mxu0 0.0
    %2093 = vmatpush1.msra.mxu0 0.0
    %2094 = vmatprep.subr.mxu0 0.0
    %2095 = vmatpush1.msra.mxu0 0.0
    %2096 = vmatprep.subr.mxu0 0.0
    %2097 = vmatpush1.msra.mxu0 0.0
    %2098 = vmatprep.subr.mxu0 0.0
    %2099 = vmatpush1.msra.mxu0 0.0
    %2100 = vmatprep.subr.mxu0 0.0
    %2101 = vmatpush1.msra.mxu0 0.0
    %2102 = vmatprep.subr.mxu0 0.0
    %2103 = vmatpush1.msra.mxu0 0.0
    %2104 = vmatprep.subr.mxu0 0.0
    %2105 = vmatpush1.msra.mxu0 0.0
    %2106 = vmatprep.subr.mxu0 0.0
    %2107 = vmatpush1.msra.mxu0 0.0
    %2108 = vmatprep.subr.mxu0 0.0
    %2109 = vmatpush1.msra.mxu0 0.0
    %2110 = vmatprep.subr.mxu0 0.0
    %2111 = vmatpush1.msra.mxu0 0.0
    %2112 = vmatprep.subr.mxu0 0.0
    %2113 = vmatpush1.msra.mxu0 0.0
    %2114 = vmatprep.subr.mxu0 0.0
    %2115 = vmatpush1.msra.mxu0 0.0
    %2116 = vmatprep.mubr.f32.mxu0 0.0
    %2117 = vmatmul.mubr.f32.gmra.mrb[0].mxu0 %v2050
    %v2118 = vpop.f32.mrb[0].mxu0
    %v2119 = vadd.f32 %v124, %v2118
    %v2120 = vpop.f32.mrb[0].mxu0
    %2121 = vdwg.mxu0
    %2122 = vmatprep.subr.mxu0 0.0
    %2123 = vmatpush1.msra.mxu0 %v51
    %2124 = vmatprep.subr.mxu0 0.0
    %2125 = vmatpush1.msra.mxu0 0.0
    %2126 = vmatprep.subr.mxu0 0.0
    %2127 = vmatpush1.msra.mxu0 0.0
    %2128 = vmatprep.subr.mxu0 0.0
    %2129 = vmatpush1.msra.mxu0 0.0
    %2130 = vmatprep.subr.mxu0 0.0
    %2131 = vmatpush1.msra.mxu0 0.0
    %2132 = vmatprep.subr.mxu0 0.0
    %2133 = vmatpush1.msra.mxu0 0.0
    %2134 = vmatprep.subr.mxu0 0.0
    %2135 = vmatpush1.msra.mxu0 0.0
    %2136 = vmatprep.subr.mxu0 0.0
    %2137 = vmatpush1.msra.mxu0 0.0
    %2138 = vmatprep.subr.mxu0 0.0
    %2139 = vmatpush1.msra.mxu0 0.0
    %2140 = vmatprep.subr.mxu0 0.0
    %2141 = vmatpush1.msra.mxu0 0.0
    %2142 = vmatprep.subr.mxu0 0.0
    %2143 = vmatpush1.msra.mxu0 0.0
    %2144 = vmatprep.subr.mxu0 0.0
    %2145 = vmatpush1.msra.mxu0 0.0
    %2146 = vmatprep.subr.mxu0 0.0
    %2147 = vmatpush1.msra.mxu0 0.0
    %2148 = vmatprep.subr.mxu0 0.0
    %2149 = vmatpush1.msra.mxu0 0.0
    %2150 = vmatprep.subr.mxu0 0.0
    %2151 = vmatpush1.msra.mxu0 0.0
    %2152 = vmatprep.subr.mxu0 0.0
    %2153 = vmatpush1.msra.mxu0 0.0
    %2154 = vmatprep.subr.mxu0 0.0
    %2155 = vmatpush1.msra.mxu0 0.0
    %2156 = vmatprep.subr.mxu0 0.0
    %2157 = vmatpush1.msra.mxu0 0.0
    %2158 = vmatprep.subr.mxu0 0.0
    %2159 = vmatpush1.msra.mxu0 0.0
    %2160 = vmatprep.subr.mxu0 0.0
    %2161 = vmatpush1.msra.mxu0 0.0
    %2162 = vmatprep.subr.mxu0 0.0
    %2163 = vmatpush1.msra.mxu0 0.0
    %2164 = vmatprep.subr.mxu0 0.0
    %2165 = vmatpush1.msra.mxu0 0.0
    %2166 = vmatprep.subr.mxu0 0.0
    %2167 = vmatpush1.msra.mxu0 0.0
    %2168 = vmatprep.subr.mxu0 0.0
    %2169 = vmatpush1.msra.mxu0 0.0
    %2170 = vmatprep.subr.mxu0 0.0
    %2171 = vmatpush1.msra.mxu0 0.0
    %2172 = vmatprep.subr.mxu0 0.0
    %2173 = vmatpush1.msra.mxu0 0.0
    %2174 = vmatprep.subr.mxu0 0.0
    %2175 = vmatpush1.msra.mxu0 0.0
    %2176 = vmatprep.subr.mxu0 0.0
    %2177 = vmatpush1.msra.mxu0 0.0
    %2178 = vmatprep.subr.mxu0 0.0
    %2179 = vmatpush1.msra.mxu0 0.0
    %2180 = vmatprep.subr.mxu0 0.0
    %2181 = vmatpush1.msra.mxu0 0.0
    %2182 = vmatprep.subr.mxu0 0.0
    %2183 = vmatpush1.msra.mxu0 0.0
    %2184 = vmatprep.subr.mxu0 0.0
    %2185 = vmatpush1.msra.mxu0 0.0
    %2186 = vmatprep.mubr.f32.mxu0 0.0
    %2187 = vmatmul.mubr.f32.gmra.mrb[0].mxu0 %v1828
    %v2188 = vpop.f32.mrb[0].mxu0
    %v2189 = vadd.f32 0.0, %v2188
    %v2190 = vpop.f32.mrb[0].mxu0
    %2191 = vdwg.mxu0
    %2192 = vmatprep.subr.mxu0 0.0
    %2193 = vmatpush1.msra.mxu0 %v2189
    %2194 = vmatprep.subr.mxu0 0.0
    %2195 = vmatpush1.msra.mxu0 0.0
    %2196 = vmatprep.subr.mxu0 0.0
    %2197 = vmatpush1.msra.mxu0 0.0
    %2198 = vmatprep.subr.mxu0 0.0
    %2199 = vmatpush1.msra.mxu0 0.0
    %2200 = vmatprep.subr.mxu0 0.0
    %2201 = vmatpush1.msra.mxu0 0.0
    %2202 = vmatprep.subr.mxu0 0.0
    %2203 = vmatpush1.msra.mxu0 0.0
    %2204 = vmatprep.subr.mxu0 0.0
    %2205 = vmatpush1.msra.mxu0 0.0
    %2206 = vmatprep.subr.mxu0 0.0
    %2207 = vmatpush1.msra.mxu0 0.0
    %2208 = vmatprep.subr.mxu0 0.0
    %2209 = vmatpush1.msra.mxu0 0.0
    %2210 = vmatprep.subr.mxu0 0.0
    %2211 = vmatpush1.msra.mxu0 0.0
    %2212 = vmatprep.subr.mxu0 0.0
    %2213 = vmatpush1.msra.mxu0 0.0
    %2214 = vmatprep.subr.mxu0 0.0
    %2215 = vmatpush1.msra.mxu0 0.0
    %2216 = vmatprep.subr.mxu0 0.0
    %2217 = vmatpush1.msra.mxu0 0.0
    %2218 = vmatprep.subr.mxu0 0.0
    %2219 = vmatpush1.msra.mxu0 0.0
    %2220 = vmatprep.subr.mxu0 0.0
    %2221 = vmatpush1.msra.mxu0 0.0
    %2222 = vmatprep.subr.mxu0 0.0
    %2223 = vmatpush1.msra.mxu0 0.0
    %2224 = vmatprep.subr.mxu0 0.0
    %2225 = vmatpush1.msra.mxu0 0.0
    %2226 = vmatprep.subr.mxu0 0.0
    %2227 = vmatpush1.msra.mxu0 0.0
    %2228 = vmatprep.subr.mxu0 0.0
    %2229 = vmatpush1.msra.mxu0 0.0
    %2230 = vmatprep.subr.mxu0 0.0
    %2231 = vmatpush1.msra.mxu0 0.0
    %2232 = vmatprep.subr.mxu0 0.0
    %2233 = vmatpush1.msra.mxu0 0.0
    %2234 = vmatprep.subr.mxu0 0.0
    %2235 = vmatpush1.msra.mxu0 0.0
    %2236 = vmatprep.subr.mxu0 0.0
    %2237 = vmatpush1.msra.mxu0 0.0
    %2238 = vmatprep.subr.mxu0 0.0
    %2239 = vmatpush1.msra.mxu0 0.0
    %2240 = vmatprep.subr.mxu0 0.0
    %2241 = vmatpush1.msra.mxu0 0.0
    %2242 = vmatprep.subr.mxu0 0.0
    %2243 = vmatpush1.msra.mxu0 0.0
    %2244 = vmatprep.subr.mxu0 0.0
    %2245 = vmatpush1.msra.mxu0 0.0
    %2246 = vmatprep.subr.mxu0 0.0
    %2247 = vmatpush1.msra.mxu0 0.0
    %2248 = vmatprep.subr.mxu0 0.0
    %2249 = vmatpush1.msra.mxu0 0.0
    %2250 = vmatprep.subr.mxu0 0.0
    %2251 = vmatpush1.msra.mxu0 0.0
    %2252 = vmatprep.subr.mxu0 0.0
    %2253 = vmatpush1.msra.mxu0 0.0
    %2254 = vmatprep.subr.mxu0 0.0
    %2255 = vmatpush1.msra.mxu0 0.0
    %2256 = vmatprep.mubr.f32.mxu0 0.0
    %2257 = vmatmul.mubr.f32.gmra.mrb[0].mxu0 %v441
    %v2258 = vpop.f32.mrb[0].mxu0
    %v2259 = vadd.f32 %v53, %v2258
    %v2260 = vpop.f32.mrb[0].mxu0
    %2261 = vdwg.mxu0
    %v2263 = vsel %vm136, %v2259, 0
    %2265 = vmatprep.subr.mxu0 0.0
    %2266 = vmatpush1.msra.mxu0 %v52
    %2267 = vmatprep.subr.mxu0 0.0
    %2268 = vmatpush1.msra.mxu0 0.0
    %2269 = vmatprep.subr.mxu0 0.0
    %2270 = vmatpush1.msra.mxu0 0.0
    %2271 = vmatprep.subr.mxu0 0.0
    %2272 = vmatpush1.msra.mxu0 0.0
    %2273 = vmatprep.subr.mxu0 0.0
    %2274 = vmatpush1.msra.mxu0 0.0
    %2275 = vmatprep.subr.mxu0 0.0
    %2276 = vmatpush1.msra.mxu0 0.0
    %2277 = vmatprep.subr.mxu0 0.0
    %2278 = vmatpush1.msra.mxu0 0.0
    %2279 = vmatprep.subr.mxu0 0.0
    %2280 = vmatpush1.msra.mxu0 0.0
    %2281 = vmatprep.subr.mxu0 0.0
    %2282 = vmatpush1.msra.mxu0 0.0
    %2283 = vmatprep.subr.mxu0 0.0
    %2284 = vmatpush1.msra.mxu0 0.0
    %2285 = vmatprep.subr.mxu0 0.0
    %2286 = vmatpush1.msra.mxu0 0.0
    %2287 = vmatprep.subr.mxu0 0.0
    %2288 = vmatpush1.msra.mxu0 0.0
    %2289 = vmatprep.subr.mxu0 0.0
    %2290 = vmatpush1.msra.mxu0 0.0
    %2291 = vmatprep.subr.mxu0 0.0
    %2292 = vmatpush1.msra.mxu0 0.0
    %2293 = vmatprep.subr.mxu0 0.0
    %2294 = vmatpush1.msra.mxu0 0.0
    %2295 = vmatprep.subr.mxu0 0.0
    %2296 = vmatpush1.msra.mxu0 0.0
    %2297 = vmatprep.subr.mxu0 0.0
    %2298 = vmatpush1.msra.mxu0 0.0
    %2299 = vmatprep.subr.mxu0 0.0
    %2300 = vmatpush1.msra.mxu0 0.0
    %2301 = vmatprep.subr.mxu0 0.0
    %2302 = vmatpush1.msra.mxu0 0.0
    %2303 = vmatprep.subr.mxu0 0.0
    %2304 = vmatpush1.msra.mxu0 0.0
    %2305 = vmatprep.subr.mxu0 0.0
    %2306 = vmatpush1.msra.mxu0 0.0
    %2307 = vmatprep.subr.mxu0 0.0
    %2308 = vmatpush1.msra.mxu0 0.0
    %2309 = vmatprep.subr.mxu0 0.0
    %2310 = vmatpush1.msra.mxu0 0.0
    %2311 = vmatprep.subr.mxu0 0.0
    %2312 = vmatpush1.msra.mxu0 0.0
    %2313 = vmatprep.subr.mxu0 0.0
    %2314 = vmatpush1.msra.mxu0 0.0
    %2315 = vmatprep.subr.mxu0 0.0
    %2316 = vmatpush1.msra.mxu0 0.0
    %2317 = vmatprep.subr.mxu0 0.0
    %2318 = vmatpush1.msra.mxu0 0.0
    %2319 = vmatprep.subr.mxu0 0.0
    %2320 = vmatpush1.msra.mxu0 0.0
    %2321 = vmatprep.subr.mxu0 0.0
    %2322 = vmatpush1.msra.mxu0 0.0
    %2323 = vmatprep.subr.mxu0 0.0
    %2324 = vmatpush1.msra.mxu0 0.0
    %2325 = vmatprep.subr.mxu0 0.0
    %2326 = vmatpush1.msra.mxu0 0.0
    %2327 = vmatprep.subr.mxu0 0.0
    %2328 = vmatpush1.msra.mxu0 0.0
    %2329 = vmatprep.mubr.f32.mxu0 0.0
    %2330 = vmatmul.mubr.f32.gmra.mrb[0].mxu0 %v2263
    %v2331 = vpop.f32.mrb[0].mxu0
    %v2332 = vadd.f32 0.0, %v2331
    %v2333 = vpop.f32.mrb[0].mxu0
    %2334 = vdwg.mxu0
    %2335 = vmatprep.subr.mxu0 0.0
    %2336 = vmatpush1.msra.mxu0 %v2332
    %2337 = vmatprep.subr.mxu0 0.0
    %2338 = vmatpush1.msra.mxu0 0.0
    %2339 = vmatprep.subr.mxu0 0.0
    %2340 = vmatpush1.msra.mxu0 0.0
    %2341 = vmatprep.subr.mxu0 0.0
    %2342 = vmatpush1.msra.mxu0 0.0
    %2343 = vmatprep.subr.mxu0 0.0
    %2344 = vmatpush1.msra.mxu0 0.0
    %2345 = vmatprep.subr.mxu0 0.0
    %2346 = vmatpush1.msra.mxu0 0.0
    %2347 = vmatprep.subr.mxu0 0.0
    %2348 = vmatpush1.msra.mxu0 0.0
    %2349 = vmatprep.subr.mxu0 0.0
    %2350 = vmatpush1.msra.mxu0 0.0
    %2351 = vmatprep.subr.mxu0 0.0
    %2352 = vmatpush1.msra.mxu0 0.0
    %2353 = vmatprep.subr.mxu0 0.0
    %2354 = vmatpush1.msra.mxu0 0.0
    %2355 = vmatprep.subr.mxu0 0.0
    %2356 = vmatpush1.msra.mxu0 0.0
    %2357 = vmatprep.subr.mxu0 0.0
    %2358 = vmatpush1.msra.mxu0 0.0
    %2359 = vmatprep.subr.mxu0 0.0
    %2360 = vmatpush1.msra.mxu0 0.0
    %2361 = vmatprep.subr.mxu0 0.0
    %2362 = vmatpush1.msra.mxu0 0.0
    %2363 = vmatprep.subr.mxu0 0.0
    %2364 = vmatpush1.msra.mxu0 0.0
    %2365 = vmatprep.subr.mxu0 0.0
    %2366 = vmatpush1.msra.mxu0 0.0
    %2367 = vmatprep.subr.mxu0 0.0
    %2368 = vmatpush1.msra.mxu0 0.0
    %2369 = vmatprep.subr.mxu0 0.0
    %2370 = vmatpush1.msra.mxu0 0.0
    %2371 = vmatprep.subr.mxu0 0.0
    %2372 = vmatpush1.msra.mxu0 0.0
    %2373 = vmatprep.subr.mxu0 0.0
    %2374 = vmatpush1.msra.mxu0 0.0
    %2375 = vmatprep.subr.mxu0 0.0
    %2376 = vmatpush1.msra.mxu0 0.0
    %2377 = vmatprep.subr.mxu0 0.0
    %2378 = vmatpush1.msra.mxu0 0.0
    %2379 = vmatprep.subr.mxu0 0.0
    %2380 = vmatpush1.msra.mxu0 0.0
    %2381 = vmatprep.subr.mxu0 0.0
    %2382 = vmatpush1.msra.mxu0 0.0
    %2383 = vmatprep.subr.mxu0 0.0
    %2384 = vmatpush1.msra.mxu0 0.0
    %2385 = vmatprep.subr.mxu0 0.0
    %2386 = vmatpush1.msra.mxu0 0.0
    %2387 = vmatprep.subr.mxu0 0.0
    %2388 = vmatpush1.msra.mxu0 0.0
    %2389 = vmatprep.subr.mxu0 0.0
    %2390 = vmatpush1.msra.mxu0 0.0
    %2391 = vmatprep.subr.mxu0 0.0
    %2392 = vmatpush1.msra.mxu0 0.0
    %2393 = vmatprep.subr.mxu0 0.0
    %2394 = vmatpush1.msra.mxu0 0.0
    %2395 = vmatprep.subr.mxu0 0.0
    %2396 = vmatpush1.msra.mxu0 0.0
    %2397 = vmatprep.subr.mxu0 0.0
    %2398 = vmatpush1.msra.mxu0 0.0
    %2399 = vmatprep.mubr.f32.mxu0 0.0
    %2400 = vmatmul.mubr.f32.gmra.mrb[0].mxu0 %v587
    %v2401 = vpop.f32.mrb[0].mxu0
    %v2402 = vadd.f32 %v54, %v2401
    %v2403 = vpop.f32.mrb[0].mxu0
    %2404 = vdwg.mxu0
    %s2405 = scalar_lea.vmem [#allocation4], 8
    %2406 = vst.msk [vmem:[%s2405] sm:$0x3] %vm659, %v2048
    %s2407 = scalar_lea.vmem %s12, 8
    %2408 = vst.msk [vmem:[%s2407] sm:$0x3] %vm661, %v2119
    %s2409 = scalar_lea.vmem [#allocation6], 32
    %2410 = vst.msk [vmem:[%s2409] sm:$0xff] %vm136, %v2259
    %s2411 = scalar_lea.vmem %s13, 16
    %2412 = vst.msk [vmem:[%s2411] sm:$0xf] %vm664, %v2402
    %v2414 = vrot.slane %v215, 2
    %2416 = vmatprep.subr.mxu0 0.0
    %2417 = vmatpush1.msra.mxu0 %v51
    %2418 = vmatprep.subr.mxu0 0.0
    %2419 = vmatpush1.msra.mxu0 0.0
    %2420 = vmatprep.subr.mxu0 0.0
    %2421 = vmatpush1.msra.mxu0 0.0
    %2422 = vmatprep.subr.mxu0 0.0
    %2423 = vmatpush1.msra.mxu0 0.0
    %2424 = vmatprep.subr.mxu0 0.0
    %2425 = vmatpush1.msra.mxu0 0.0
    %2426 = vmatprep.subr.mxu0 0.0
    %2427 = vmatpush1.msra.mxu0 0.0
    %2428 = vmatprep.subr.mxu0 0.0
    %2429 = vmatpush1.msra.mxu0 0.0
    %2430 = vmatprep.subr.mxu0 0.0
    %2431 = vmatpush1.msra.mxu0 0.0
    %2432 = vmatprep.subr.mxu0 0.0
    %2433 = vmatpush1.msra.mxu0 0.0
    %2434 = vmatprep.subr.mxu0 0.0
    %2435 = vmatpush1.msra.mxu0 0.0
    %2436 = vmatprep.subr.mxu0 0.0
    %2437 = vmatpush1.msra.mxu0 0.0
    %2438 = vmatprep.subr.mxu0 0.0
    %2439 = vmatpush1.msra.mxu0 0.0
    %2440 = vmatprep.subr.mxu0 0.0
    %2441 = vmatpush1.msra.mxu0 0.0
    %2442 = vmatprep.subr.mxu0 0.0
    %2443 = vmatpush1.msra.mxu0 0.0
    %2444 = vmatprep.subr.mxu0 0.0
    %2445 = vmatpush1.msra.mxu0 0.0
    %2446 = vmatprep.subr.mxu0 0.0
    %2447 = vmatpush1.msra.mxu0 0.0
    %2448 = vmatprep.subr.mxu0 0.0
    %2449 = vmatpush1.msra.mxu0 0.0
    %2450 = vmatprep.subr.mxu0 0.0
    %2451 = vmatpush1.msra.mxu0 0.0
    %2452 = vmatprep.subr.mxu0 0.0
    %2453 = vmatpush1.msra.mxu0 0.0
    %2454 = vmatprep.subr.mxu0 0.0
    %2455 = vmatpush1.msra.mxu0 0.0
    %2456 = vmatprep.subr.mxu0 0.0
    %2457 = vmatpush1.msra.mxu0 0.0
    %2458 = vmatprep.subr.mxu0 0.0
    %2459 = vmatpush1.msra.mxu0 0.0
    %2460 = vmatprep.subr.mxu0 0.0
    %2461 = vmatpush1.msra.mxu0 0.0
    %2462 = vmatprep.subr.mxu0 0.0
    %2463 = vmatpush1.msra.mxu0 0.0
    %2464 = vmatprep.subr.mxu0 0.0
    %2465 = vmatpush1.msra.mxu0 0.0
    %2466 = vmatprep.subr.mxu0 0.0
    %2467 = vmatpush1.msra.mxu0 0.0
    %2468 = vmatprep.subr.mxu0 0.0
    %2469 = vmatpush1.msra.mxu0 0.0
    %2470 = vmatprep.subr.mxu0 0.0
    %2471 = vmatpush1.msra.mxu0 0.0
    %2472 = vmatprep.subr.mxu0 0.0
    %2473 = vmatpush1.msra.mxu0 0.0
    %2474 = vmatprep.subr.mxu0 0.0
    %2475 = vmatpush1.msra.mxu0 0.0
    %2476 = vmatprep.subr.mxu0 0.0
    %2477 = vmatpush1.msra.mxu0 0.0
    %2478 = vmatprep.subr.mxu0 0.0
    %2479 = vmatpush1.msra.mxu0 0.0
    %2480 = vmatprep.mubr.f32.mxu0 0.0
    %2481 = vmatmul.mubr.f32.gmra.mrb[0].mxu0 %v2050
    %v2482 = vpop.f32.mrb[0].mxu0
    %v2483 = vadd.f32 %v2414, %v2482
    %v2484 = vpop.f32.mrb[0].mxu0
    %2485 = vdwg.mxu0
    %v2486 = vtanh.pop %v2483
    %v2488 = vsel %vm136, %v2486, 0
    %2490 = vmatprep.subr.mxu0 0.0
    %2491 = vmatpush1.msra.mxu0 %v52
    %2492 = vmatprep.subr.mxu0 0.0
    %2493 = vmatpush1.msra.mxu0 0.0
    %2494 = vmatprep.subr.mxu0 0.0
    %2495 = vmatpush1.msra.mxu0 0.0
    %2496 = vmatprep.subr.mxu0 0.0
    %2497 = vmatpush1.msra.mxu0 0.0
    %2498 = vmatprep.subr.mxu0 0.0
    %2499 = vmatpush1.msra.mxu0 0.0
    %2500 = vmatprep.subr.mxu0 0.0
    %2501 = vmatpush1.msra.mxu0 0.0
    %2502 = vmatprep.subr.mxu0 0.0
    %2503 = vmatpush1.msra.mxu0 0.0
    %2504 = vmatprep.subr.mxu0 0.0
    %2505 = vmatpush1.msra.mxu0 0.0
    %2506 = vmatprep.subr.mxu0 0.0
    %2507 = vmatpush1.msra.mxu0 0.0
    %2508 = vmatprep.subr.mxu0 0.0
    %2509 = vmatpush1.msra.mxu0 0.0
    %2510 = vmatprep.subr.mxu0 0.0
    %2511 = vmatpush1.msra.mxu0 0.0
    %2512 = vmatprep.subr.mxu0 0.0
    %2513 = vmatpush1.msra.mxu0 0.0
    %2514 = vmatprep.subr.mxu0 0.0
    %2515 = vmatpush1.msra.mxu0 0.0
    %2516 = vmatprep.subr.mxu0 0.0
    %2517 = vmatpush1.msra.mxu0 0.0
    %2518 = vmatprep.subr.mxu0 0.0
    %2519 = vmatpush1.msra.mxu0 0.0
    %2520 = vmatprep.subr.mxu0 0.0
    %2521 = vmatpush1.msra.mxu0 0.0
    %2522 = vmatprep.subr.mxu0 0.0
    %2523 = vmatpush1.msra.mxu0 0.0
    %2524 = vmatprep.subr.mxu0 0.0
    %2525 = vmatpush1.msra.mxu0 0.0
    %2526 = vmatprep.subr.mxu0 0.0
    %2527 = vmatpush1.msra.mxu0 0.0
    %2528 = vmatprep.subr.mxu0 0.0
    %2529 = vmatpush1.msra.mxu0 0.0
    %2530 = vmatprep.subr.mxu0 0.0
    %2531 = vmatpush1.msra.mxu0 0.0
    %2532 = vmatprep.subr.mxu0 0.0
    %2533 = vmatpush1.msra.mxu0 0.0
    %2534 = vmatprep.subr.mxu0 0.0
    %2535 = vmatpush1.msra.mxu0 0.0
    %2536 = vmatprep.subr.mxu0 0.0
    %2537 = vmatpush1.msra.mxu0 0.0
    %2538 = vmatprep.subr.mxu0 0.0
    %2539 = vmatpush1.msra.mxu0 0.0
    %2540 = vmatprep.subr.mxu0 0.0
    %2541 = vmatpush1.msra.mxu0 0.0
    %2542 = vmatprep.subr.mxu0 0.0
    %2543 = vmatpush1.msra.mxu0 0.0
    %2544 = vmatprep.subr.mxu0 0.0
    %2545 = vmatpush1.msra.mxu0 0.0
    %2546 = vmatprep.subr.mxu0 0.0
    %2547 = vmatpush1.msra.mxu0 0.0
    %2548 = vmatprep.subr.mxu0 0.0
    %2549 = vmatpush1.msra.mxu0 0.0
    %2550 = vmatprep.subr.mxu0 0.0
    %2551 = vmatpush1.msra.mxu0 0.0
    %2552 = vmatprep.subr.mxu0 0.0
    %2553 = vmatpush1.msra.mxu0 0.0
    %2554 = vmatprep.mubr.f32.mxu0 0.0
    %2555 = vmatmul.mubr.f32.gmra.mrb[0].mxu0 %v2488
    %v2556 = vpop.f32.mrb[0].mxu0
    %v2557 = vadd.f32 %v124, %v2556
    %v2558 = vpop.f32.mrb[0].mxu0
    %2559 = vdwg.mxu0
    %2560 = vmatprep.subr.mxu0 0.0
    %2561 = vmatpush1.msra.mxu0 %v51
    %2562 = vmatprep.subr.mxu0 0.0
    %2563 = vmatpush1.msra.mxu0 0.0
    %2564 = vmatprep.subr.mxu0 0.0
    %2565 = vmatpush1.msra.mxu0 0.0
    %2566 = vmatprep.subr.mxu0 0.0
    %2567 = vmatpush1.msra.mxu0 0.0
    %2568 = vmatprep.subr.mxu0 0.0
    %2569 = vmatpush1.msra.mxu0 0.0
    %2570 = vmatprep.subr.mxu0 0.0
    %2571 = vmatpush1.msra.mxu0 0.0
    %2572 = vmatprep.subr.mxu0 0.0
    %2573 = vmatpush1.msra.mxu0 0.0
    %2574 = vmatprep.subr.mxu0 0.0
    %2575 = vmatpush1.msra.mxu0 0.0
    %2576 = vmatprep.subr.mxu0 0.0
    %2577 = vmatpush1.msra.mxu0 0.0
    %2578 = vmatprep.subr.mxu0 0.0
    %2579 = vmatpush1.msra.mxu0 0.0
    %2580 = vmatprep.subr.mxu0 0.0
    %2581 = vmatpush1.msra.mxu0 0.0
    %2582 = vmatprep.subr.mxu0 0.0
    %2583 = vmatpush1.msra.mxu0 0.0
    %2584 = vmatprep.subr.mxu0 0.0
    %2585 = vmatpush1.msra.mxu0 0.0
    %2586 = vmatprep.subr.mxu0 0.0
    %2587 = vmatpush1.msra.mxu0 0.0
    %2588 = vmatprep.subr.mxu0 0.0
    %2589 = vmatpush1.msra.mxu0 0.0
    %2590 = vmatprep.subr.mxu0 0.0
    %2591 = vmatpush1.msra.mxu0 0.0
    %2592 = vmatprep.subr.mxu0 0.0
    %2593 = vmatpush1.msra.mxu0 0.0
    %2594 = vmatprep.subr.mxu0 0.0
    %2595 = vmatpush1.msra.mxu0 0.0
    %2596 = vmatprep.subr.mxu0 0.0
    %2597 = vmatpush1.msra.mxu0 0.0
    %2598 = vmatprep.subr.mxu0 0.0
    %2599 = vmatpush1.msra.mxu0 0.0
    %2600 = vmatprep.subr.mxu0 0.0
    %2601 = vmatpush1.msra.mxu0 0.0
    %2602 = vmatprep.subr.mxu0 0.0
    %2603 = vmatpush1.msra.mxu0 0.0
    %2604 = vmatprep.subr.mxu0 0.0
    %2605 = vmatpush1.msra.mxu0 0.0
    %2606 = vmatprep.subr.mxu0 0.0
    %2607 = vmatpush1.msra.mxu0 0.0
    %2608 = vmatprep.subr.mxu0 0.0
    %2609 = vmatpush1.msra.mxu0 0.0
    %2610 = vmatprep.subr.mxu0 0.0
    %2611 = vmatpush1.msra.mxu0 0.0
    %2612 = vmatprep.subr.mxu0 0.0
    %2613 = vmatpush1.msra.mxu0 0.0
    %2614 = vmatprep.subr.mxu0 0.0
    %2615 = vmatpush1.msra.mxu0 0.0
    %2616 = vmatprep.subr.mxu0 0.0
    %2617 = vmatpush1.msra.mxu0 0.0
    %2618 = vmatprep.subr.mxu0 0.0
    %2619 = vmatpush1.msra.mxu0 0.0
    %2620 = vmatprep.subr.mxu0 0.0
    %2621 = vmatpush1.msra.mxu0 0.0
    %2622 = vmatprep.subr.mxu0 0.0
    %2623 = vmatpush1.msra.mxu0 0.0
    %2624 = vmatprep.mubr.f32.mxu0 0.0
    %2625 = vmatmul.mubr.f32.gmra.mrb[0].mxu0 %v2263
    %v2626 = vpop.f32.mrb[0].mxu0
    %v2627 = vadd.f32 0.0, %v2626
    %v2628 = vpop.f32.mrb[0].mxu0
    %2629 = vdwg.mxu0
    %2630 = vmatprep.subr.mxu0 0.0
    %2631 = vmatpush1.msra.mxu0 %v2627
    %2632 = vmatprep.subr.mxu0 0.0
    %2633 = vmatpush1.msra.mxu0 0.0
    %2634 = vmatprep.subr.mxu0 0.0
    %2635 = vmatpush1.msra.mxu0 0.0
    %2636 = vmatprep.subr.mxu0 0.0
    %2637 = vmatpush1.msra.mxu0 0.0
    %2638 = vmatprep.subr.mxu0 0.0
    %2639 = vmatpush1.msra.mxu0 0.0
    %2640 = vmatprep.subr.mxu0 0.0
    %2641 = vmatpush1.msra.mxu0 0.0
    %2642 = vmatprep.subr.mxu0 0.0
    %2643 = vmatpush1.msra.mxu0 0.0
    %2644 = vmatprep.subr.mxu0 0.0
    %2645 = vmatpush1.msra.mxu0 0.0
    %2646 = vmatprep.subr.mxu0 0.0
    %2647 = vmatpush1.msra.mxu0 0.0
    %2648 = vmatprep.subr.mxu0 0.0
    %2649 = vmatpush1.msra.mxu0 0.0
    %2650 = vmatprep.subr.mxu0 0.0
    %2651 = vmatpush1.msra.mxu0 0.0
    %2652 = vmatprep.subr.mxu0 0.0
    %2653 = vmatpush1.msra.mxu0 0.0
    %2654 = vmatprep.subr.mxu0 0.0
    %2655 = vmatpush1.msra.mxu0 0.0
    %2656 = vmatprep.subr.mxu0 0.0
    %2657 = vmatpush1.msra.mxu0 0.0
    %2658 = vmatprep.subr.mxu0 0.0
    %2659 = vmatpush1.msra.mxu0 0.0
    %2660 = vmatprep.subr.mxu0 0.0
    %2661 = vmatpush1.msra.mxu0 0.0
    %2662 = vmatprep.subr.mxu0 0.0
    %2663 = vmatpush1.msra.mxu0 0.0
    %2664 = vmatprep.subr.mxu0 0.0
    %2665 = vmatpush1.msra.mxu0 0.0
    %2666 = vmatprep.subr.mxu0 0.0
    %2667 = vmatpush1.msra.mxu0 0.0
    %2668 = vmatprep.subr.mxu0 0.0
    %2669 = vmatpush1.msra.mxu0 0.0
    %2670 = vmatprep.subr.mxu0 0.0
    %2671 = vmatpush1.msra.mxu0 0.0
    %2672 = vmatprep.subr.mxu0 0.0
    %2673 = vmatpush1.msra.mxu0 0.0
    %2674 = vmatprep.subr.mxu0 0.0
    %2675 = vmatpush1.msra.mxu0 0.0
    %2676 = vmatprep.subr.mxu0 0.0
    %2677 = vmatpush1.msra.mxu0 0.0
    %2678 = vmatprep.subr.mxu0 0.0
    %2679 = vmatpush1.msra.mxu0 0.0
    %2680 = vmatprep.subr.mxu0 0.0
    %2681 = vmatpush1.msra.mxu0 0.0
    %2682 = vmatprep.subr.mxu0 0.0
    %2683 = vmatpush1.msra.mxu0 0.0
    %2684 = vmatprep.subr.mxu0 0.0
    %2685 = vmatpush1.msra.mxu0 0.0
    %2686 = vmatprep.subr.mxu0 0.0
    %2687 = vmatpush1.msra.mxu0 0.0
    %2688 = vmatprep.subr.mxu0 0.0
    %2689 = vmatpush1.msra.mxu0 0.0
    %2690 = vmatprep.subr.mxu0 0.0
    %2691 = vmatpush1.msra.mxu0 0.0
    %2692 = vmatprep.subr.mxu0 0.0
    %2693 = vmatpush1.msra.mxu0 0.0
    %2694 = vmatprep.mubr.f32.mxu0 0.0
    %2695 = vmatmul.mubr.f32.gmra.mrb[0].mxu0 %v441
    %v2696 = vpop.f32.mrb[0].mxu0
    %v2697 = vadd.f32 %v53, %v2696
    %v2698 = vpop.f32.mrb[0].mxu0
    %2699 = vdwg.mxu0
    %v2701 = vsel %vm136, %v2697, 0
    %2703 = vmatprep.subr.mxu0 0.0
    %2704 = vmatpush1.msra.mxu0 %v52
    %2705 = vmatprep.subr.mxu0 0.0
    %2706 = vmatpush1.msra.mxu0 0.0
    %2707 = vmatprep.subr.mxu0 0.0
    %2708 = vmatpush1.msra.mxu0 0.0
    %2709 = vmatprep.subr.mxu0 0.0
    %2710 = vmatpush1.msra.mxu0 0.0
    %2711 = vmatprep.subr.mxu0 0.0
    %2712 = vmatpush1.msra.mxu0 0.0
    %2713 = vmatprep.subr.mxu0 0.0
    %2714 = vmatpush1.msra.mxu0 0.0
    %2715 = vmatprep.subr.mxu0 0.0
    %2716 = vmatpush1.msra.mxu0 0.0
    %2717 = vmatprep.subr.mxu0 0.0
    %2718 = vmatpush1.msra.mxu0 0.0
    %2719 = vmatprep.subr.mxu0 0.0
    %2720 = vmatpush1.msra.mxu0 0.0
    %2721 = vmatprep.subr.mxu0 0.0
    %2722 = vmatpush1.msra.mxu0 0.0
    %2723 = vmatprep.subr.mxu0 0.0
    %2724 = vmatpush1.msra.mxu0 0.0
    %2725 = vmatprep.subr.mxu0 0.0
    %2726 = vmatpush1.msra.mxu0 0.0
    %2727 = vmatprep.subr.mxu0 0.0
    %2728 = vmatpush1.msra.mxu0 0.0
    %2729 = vmatprep.subr.mxu0 0.0
    %2730 = vmatpush1.msra.mxu0 0.0
    %2731 = vmatprep.subr.mxu0 0.0
    %2732 = vmatpush1.msra.mxu0 0.0
    %2733 = vmatprep.subr.mxu0 0.0
    %2734 = vmatpush1.msra.mxu0 0.0
    %2735 = vmatprep.subr.mxu0 0.0
    %2736 = vmatpush1.msra.mxu0 0.0
    %2737 = vmatprep.subr.mxu0 0.0
    %2738 = vmatpush1.msra.mxu0 0.0
    %2739 = vmatprep.subr.mxu0 0.0
    %2740 = vmatpush1.msra.mxu0 0.0
    %2741 = vmatprep.subr.mxu0 0.0
    %2742 = vmatpush1.msra.mxu0 0.0
    %2743 = vmatprep.subr.mxu0 0.0
    %2744 = vmatpush1.msra.mxu0 0.0
    %2745 = vmatprep.subr.mxu0 0.0
    %2746 = vmatpush1.msra.mxu0 0.0
    %2747 = vmatprep.subr.mxu0 0.0
    %2748 = vmatpush1.msra.mxu0 0.0
    %2749 = vmatprep.subr.mxu0 0.0
    %2750 = vmatpush1.msra.mxu0 0.0
    %2751 = vmatprep.subr.mxu0 0.0
    %2752 = vmatpush1.msra.mxu0 0.0
    %2753 = vmatprep.subr.mxu0 0.0
    %2754 = vmatpush1.msra.mxu0 0.0
    %2755 = vmatprep.subr.mxu0 0.0
    %2756 = vmatpush1.msra.mxu0 0.0
    %2757 = vmatprep.subr.mxu0 0.0
    %2758 = vmatpush1.msra.mxu0 0.0
    %2759 = vmatprep.subr.mxu0 0.0
    %2760 = vmatpush1.msra.mxu0 0.0
    %2761 = vmatprep.subr.mxu0 0.0
    %2762 = vmatpush1.msra.mxu0 0.0
    %2763 = vmatprep.subr.mxu0 0.0
    %2764 = vmatpush1.msra.mxu0 0.0
    %2765 = vmatprep.subr.mxu0 0.0
    %2766 = vmatpush1.msra.mxu0 0.0
    %2767 = vmatprep.mubr.f32.mxu0 0.0
    %2768 = vmatmul.mubr.f32.gmra.mrb[0].mxu0 %v2701
    %v2769 = vpop.f32.mrb[0].mxu0
    %v2770 = vadd.f32 0.0, %v2769
    %v2771 = vpop.f32.mrb[0].mxu0
    %2772 = vdwg.mxu0
    %2773 = vmatprep.subr.mxu0 0.0
    %2774 = vmatpush1.msra.mxu0 %v2770
    %2775 = vmatprep.subr.mxu0 0.0
    %2776 = vmatpush1.msra.mxu0 0.0
    %2777 = vmatprep.subr.mxu0 0.0
    %2778 = vmatpush1.msra.mxu0 0.0
    %2779 = vmatprep.subr.mxu0 0.0
    %2780 = vmatpush1.msra.mxu0 0.0
    %2781 = vmatprep.subr.mxu0 0.0
    %2782 = vmatpush1.msra.mxu0 0.0
    %2783 = vmatprep.subr.mxu0 0.0
    %2784 = vmatpush1.msra.mxu0 0.0
    %2785 = vmatprep.subr.mxu0 0.0
    %2786 = vmatpush1.msra.mxu0 0.0
    %2787 = vmatprep.subr.mxu0 0.0
    %2788 = vmatpush1.msra.mxu0 0.0
    %2789 = vmatprep.subr.mxu0 0.0
    %2790 = vmatpush1.msra.mxu0 0.0
    %2791 = vmatprep.subr.mxu0 0.0
    %2792 = vmatpush1.msra.mxu0 0.0
    %2793 = vmatprep.subr.mxu0 0.0
    %2794 = vmatpush1.msra.mxu0 0.0
    %2795 = vmatprep.subr.mxu0 0.0
    %2796 = vmatpush1.msra.mxu0 0.0
    %2797 = vmatprep.subr.mxu0 0.0
    %2798 = vmatpush1.msra.mxu0 0.0
    %2799 = vmatprep.subr.mxu0 0.0
    %2800 = vmatpush1.msra.mxu0 0.0
    %2801 = vmatprep.subr.mxu0 0.0
    %2802 = vmatpush1.msra.mxu0 0.0
    %2803 = vmatprep.subr.mxu0 0.0
    %2804 = vmatpush1.msra.mxu0 0.0
    %2805 = vmatprep.subr.mxu0 0.0
    %2806 = vmatpush1.msra.mxu0 0.0
    %2807 = vmatprep.subr.mxu0 0.0
    %2808 = vmatpush1.msra.mxu0 0.0
    %2809 = vmatprep.subr.mxu0 0.0
    %2810 = vmatpush1.msra.mxu0 0.0
    %2811 = vmatprep.subr.mxu0 0.0
    %2812 = vmatpush1.msra.mxu0 0.0
    %2813 = vmatprep.subr.mxu0 0.0
    %2814 = vmatpush1.msra.mxu0 0.0
    %2815 = vmatprep.subr.mxu0 0.0
    %2816 = vmatpush1.msra.mxu0 0.0
    %2817 = vmatprep.subr.mxu0 0.0
    %2818 = vmatpush1.msra.mxu0 0.0
    %2819 = vmatprep.subr.mxu0 0.0
    %2820 = vmatpush1.msra.mxu0 0.0
    %2821 = vmatprep.subr.mxu0 0.0
    %2822 = vmatpush1.msra.mxu0 0.0
    %2823 = vmatprep.subr.mxu0 0.0
    %2824 = vmatpush1.msra.mxu0 0.0
    %2825 = vmatprep.subr.mxu0 0.0
    %2826 = vmatpush1.msra.mxu0 0.0
    %2827 = vmatprep.subr.mxu0 0.0
    %2828 = vmatpush1.msra.mxu0 0.0
    %2829 = vmatprep.subr.mxu0 0.0
    %2830 = vmatpush1.msra.mxu0 0.0
    %2831 = vmatprep.subr.mxu0 0.0
    %2832 = vmatpush1.msra.mxu0 0.0
    %2833 = vmatprep.subr.mxu0 0.0
    %2834 = vmatpush1.msra.mxu0 0.0
    %2835 = vmatprep.subr.mxu0 0.0
    %2836 = vmatpush1.msra.mxu0 0.0
    %2837 = vmatprep.mubr.f32.mxu0 0.0
    %2838 = vmatmul.mubr.f32.gmra.mrb[0].mxu0 %v587
    %v2839 = vpop.f32.mrb[0].mxu0
    %v2840 = vadd.f32 %v54, %v2839
    %v2841 = vpop.f32.mrb[0].mxu0
    %2842 = vdwg.mxu0
    %s2843 = scalar_lea.vmem [#allocation4], 10
    %2844 = vst.msk [vmem:[%s2843] sm:$0x3] %vm659, %v2486
    %s2845 = scalar_lea.vmem %s12, 10
    %2846 = vst.msk [vmem:[%s2845] sm:$0x3] %vm661, %v2557
    %s2847 = scalar_lea.vmem [#allocation6], 40
    %2848 = vst.msk [vmem:[%s2847] sm:$0xff] %vm136, %v2697
    %s2849 = scalar_lea.vmem %s13, 20
    %2850 = vst.msk [vmem:[%s2849] sm:$0xf] %vm664, %v2840
    %v2851 = vrot.slane %v215, 4
    %2853 = vmatprep.subr.mxu0 0.0
    %2854 = vmatpush1.msra.mxu0 %v51
    %2855 = vmatprep.subr.mxu0 0.0
    %2856 = vmatpush1.msra.mxu0 0.0
    %2857 = vmatprep.subr.mxu0 0.0
    %2858 = vmatpush1.msra.mxu0 0.0
    %2859 = vmatprep.subr.mxu0 0.0
    %2860 = vmatpush1.msra.mxu0 0.0
    %2861 = vmatprep.subr.mxu0 0.0
    %2862 = vmatpush1.msra.mxu0 0.0
    %2863 = vmatprep.subr.mxu0 0.0
    %2864 = vmatpush1.msra.mxu0 0.0
    %2865 = vmatprep.subr.mxu0 0.0
    %2866 = vmatpush1.msra.mxu0 0.0
    %2867 = vmatprep.subr.mxu0 0.0
    %2868 = vmatpush1.msra.mxu0 0.0
    %2869 = vmatprep.subr.mxu0 0.0
    %2870 = vmatpush1.msra.mxu0 0.0
    %2871 = vmatprep.subr.mxu0 0.0
    %2872 = vmatpush1.msra.mxu0 0.0
    %2873 = vmatprep.subr.mxu0 0.0
    %2874 = vmatpush1.msra.mxu0 0.0
    %2875 = vmatprep.subr.mxu0 0.0
    %2876 = vmatpush1.msra.mxu0 0.0
    %2877 = vmatprep.subr.mxu0 0.0
    %2878 = vmatpush1.msra.mxu0 0.0
    %2879 = vmatprep.subr.mxu0 0.0
    %2880 = vmatpush1.msra.mxu0 0.0
    %2881 = vmatprep.subr.mxu0 0.0
    %2882 = vmatpush1.msra.mxu0 0.0
    %2883 = vmatprep.subr.mxu0 0.0
    %2884 = vmatpush1.msra.mxu0 0.0
    %2885 = vmatprep.subr.mxu0 0.0
    %2886 = vmatpush1.msra.mxu0 0.0
    %2887 = vmatprep.subr.mxu0 0.0
    %2888 = vmatpush1.msra.mxu0 0.0
    %2889 = vmatprep.subr.mxu0 0.0
    %2890 = vmatpush1.msra.mxu0 0.0
    %2891 = vmatprep.subr.mxu0 0.0
    %2892 = vmatpush1.msra.mxu0 0.0
    %2893 = vmatprep.subr.mxu0 0.0
    %2894 = vmatpush1.msra.mxu0 0.0
    %2895 = vmatprep.subr.mxu0 0.0
    %2896 = vmatpush1.msra.mxu0 0.0
    %2897 = vmatprep.subr.mxu0 0.0
    %2898 = vmatpush1.msra.mxu0 0.0
    %2899 = vmatprep.subr.mxu0 0.0
    %2900 = vmatpush1.msra.mxu0 0.0
    %2901 = vmatprep.subr.mxu0 0.0
    %2902 = vmatpush1.msra.mxu0 0.0
    %2903 = vmatprep.subr.mxu0 0.0
    %2904 = vmatpush1.msra.mxu0 0.0
    %2905 = vmatprep.subr.mxu0 0.0
    %2906 = vmatpush1.msra.mxu0 0.0
    %2907 = vmatprep.subr.mxu0 0.0
    %2908 = vmatpush1.msra.mxu0 0.0
    %2909 = vmatprep.subr.mxu0 0.0
    %2910 = vmatpush1.msra.mxu0 0.0
    %2911 = vmatprep.subr.mxu0 0.0
    %2912 = vmatpush1.msra.mxu0 0.0
    %2913 = vmatprep.subr.mxu0 0.0
    %2914 = vmatpush1.msra.mxu0 0.0
    %2915 = vmatprep.subr.mxu0 0.0
    %2916 = vmatpush1.msra.mxu0 0.0
    %2917 = vmatprep.mubr.f32.mxu0 0.0
    %2918 = vmatmul.mubr.f32.gmra.mrb[0].mxu0 %v2488
    %v2919 = vpop.f32.mrb[0].mxu0
    %v2920 = vadd.f32 %v2851, %v2919
    %v2921 = vpop.f32.mrb[0].mxu0
    %2922 = vdwg.mxu0
    %v2923 = vtanh.pop %v2920
    %v2925 = vsel %vm136, %v2923, 0
    %2927 = vmatprep.subr.mxu0 0.0
    %2928 = vmatpush1.msra.mxu0 %v52
    %2929 = vmatprep.subr.mxu0 0.0
    %2930 = vmatpush1.msra.mxu0 0.0
    %2931 = vmatprep.subr.mxu0 0.0
    %2932 = vmatpush1.msra.mxu0 0.0
    %2933 = vmatprep.subr.mxu0 0.0
    %2934 = vmatpush1.msra.mxu0 0.0
    %2935 = vmatprep.subr.mxu0 0.0
    %2936 = vmatpush1.msra.mxu0 0.0
    %2937 = vmatprep.subr.mxu0 0.0
    %2938 = vmatpush1.msra.mxu0 0.0
    %2939 = vmatprep.subr.mxu0 0.0
    %2940 = vmatpush1.msra.mxu0 0.0
    %2941 = vmatprep.subr.mxu0 0.0
    %2942 = vmatpush1.msra.mxu0 0.0
    %2943 = vmatprep.subr.mxu0 0.0
    %2944 = vmatpush1.msra.mxu0 0.0
    %2945 = vmatprep.subr.mxu0 0.0
    %2946 = vmatpush1.msra.mxu0 0.0
    %2947 = vmatprep.subr.mxu0 0.0
    %2948 = vmatpush1.msra.mxu0 0.0
    %2949 = vmatprep.subr.mxu0 0.0
    %2950 = vmatpush1.msra.mxu0 0.0
    %2951 = vmatprep.subr.mxu0 0.0
    %2952 = vmatpush1.msra.mxu0 0.0
    %2953 = vmatprep.subr.mxu0 0.0
    %2954 = vmatpush1.msra.mxu0 0.0
    %2955 = vmatprep.subr.mxu0 0.0
    %2956 = vmatpush1.msra.mxu0 0.0
    %2957 = vmatprep.subr.mxu0 0.0
    %2958 = vmatpush1.msra.mxu0 0.0
    %2959 = vmatprep.subr.mxu0 0.0
    %2960 = vmatpush1.msra.mxu0 0.0
    %2961 = vmatprep.subr.mxu0 0.0
    %2962 = vmatpush1.msra.mxu0 0.0
    %2963 = vmatprep.subr.mxu0 0.0
    %2964 = vmatpush1.msra.mxu0 0.0
    %2965 = vmatprep.subr.mxu0 0.0
    %2966 = vmatpush1.msra.mxu0 0.0
    %2967 = vmatprep.subr.mxu0 0.0
    %2968 = vmatpush1.msra.mxu0 0.0
    %2969 = vmatprep.subr.mxu0 0.0
    %2970 = vmatpush1.msra.mxu0 0.0
    %2971 = vmatprep.subr.mxu0 0.0
    %2972 = vmatpush1.msra.mxu0 0.0
    %2973 = vmatprep.subr.mxu0 0.0
    %2974 = vmatpush1.msra.mxu0 0.0
    %2975 = vmatprep.subr.mxu0 0.0
    %2976 = vmatpush1.msra.mxu0 0.0
    %2977 = vmatprep.subr.mxu0 0.0
    %2978 = vmatpush1.msra.mxu0 0.0
    %2979 = vmatprep.subr.mxu0 0.0
    %2980 = vmatpush1.msra.mxu0 0.0
    %2981 = vmatprep.subr.mxu0 0.0
    %2982 = vmatpush1.msra.mxu0 0.0
    %2983 = vmatprep.subr.mxu0 0.0
    %2984 = vmatpush1.msra.mxu0 0.0
    %2985 = vmatprep.subr.mxu0 0.0
    %2986 = vmatpush1.msra.mxu0 0.0
    %2987 = vmatprep.subr.mxu0 0.0
    %2988 = vmatpush1.msra.mxu0 0.0
    %2989 = vmatprep.subr.mxu0 0.0
    %2990 = vmatpush1.msra.mxu0 0.0
    %2991 = vmatprep.mubr.f32.mxu0 0.0
    %2992 = vmatmul.mubr.f32.gmra.mrb[0].mxu0 %v2925
    %v2993 = vpop.f32.mrb[0].mxu0
    %v2994 = vadd.f32 %v124, %v2993
    %v2995 = vpop.f32.mrb[0].mxu0
    %2996 = vdwg.mxu0
    %2997 = vmatprep.subr.mxu0 0.0
    %2998 = vmatpush1.msra.mxu0 %v51
    %2999 = vmatprep.subr.mxu0 0.0
    %3000 = vmatpush1.msra.mxu0 0.0
    %3001 = vmatprep.subr.mxu0 0.0
    %3002 = vmatpush1.msra.mxu0 0.0
    %3003 = vmatprep.subr.mxu0 0.0
    %3004 = vmatpush1.msra.mxu0 0.0
    %3005 = vmatprep.subr.mxu0 0.0
    %3006 = vmatpush1.msra.mxu0 0.0
    %3007 = vmatprep.subr.mxu0 0.0
    %3008 = vmatpush1.msra.mxu0 0.0
    %3009 = vmatprep.subr.mxu0 0.0
    %3010 = vmatpush1.msra.mxu0 0.0
    %3011 = vmatprep.subr.mxu0 0.0
    %3012 = vmatpush1.msra.mxu0 0.0
    %3013 = vmatprep.subr.mxu0 0.0
    %3014 = vmatpush1.msra.mxu0 0.0
    %3015 = vmatprep.subr.mxu0 0.0
    %3016 = vmatpush1.msra.mxu0 0.0
    %3017 = vmatprep.subr.mxu0 0.0
    %3018 = vmatpush1.msra.mxu0 0.0
    %3019 = vmatprep.subr.mxu0 0.0
    %3020 = vmatpush1.msra.mxu0 0.0
    %3021 = vmatprep.subr.mxu0 0.0
    %3022 = vmatpush1.msra.mxu0 0.0
    %3023 = vmatprep.subr.mxu0 0.0
    %3024 = vmatpush1.msra.mxu0 0.0
    %3025 = vmatprep.subr.mxu0 0.0
    %3026 = vmatpush1.msra.mxu0 0.0
    %3027 = vmatprep.subr.mxu0 0.0
    %3028 = vmatpush1.msra.mxu0 0.0
    %3029 = vmatprep.subr.mxu0 0.0
    %3030 = vmatpush1.msra.mxu0 0.0
    %3031 = vmatprep.subr.mxu0 0.0
    %3032 = vmatpush1.msra.mxu0 0.0
    %3033 = vmatprep.subr.mxu0 0.0
    %3034 = vmatpush1.msra.mxu0 0.0
    %3035 = vmatprep.subr.mxu0 0.0
    %3036 = vmatpush1.msra.mxu0 0.0
    %3037 = vmatprep.subr.mxu0 0.0
    %3038 = vmatpush1.msra.mxu0 0.0
    %3039 = vmatprep.subr.mxu0 0.0
    %3040 = vmatpush1.msra.mxu0 0.0
    %3041 = vmatprep.subr.mxu0 0.0
    %3042 = vmatpush1.msra.mxu0 0.0
    %3043 = vmatprep.subr.mxu0 0.0
    %3044 = vmatpush1.msra.mxu0 0.0
    %3045 = vmatprep.subr.mxu0 0.0
    %3046 = vmatpush1.msra.mxu0 0.0
    %3047 = vmatprep.subr.mxu0 0.0
    %3048 = vmatpush1.msra.mxu0 0.0
    %3049 = vmatprep.subr.mxu0 0.0
    %3050 = vmatpush1.msra.mxu0 0.0
    %3051 = vmatprep.subr.mxu0 0.0
    %3052 = vmatpush1.msra.mxu0 0.0
    %3053 = vmatprep.subr.mxu0 0.0
    %3054 = vmatpush1.msra.mxu0 0.0
    %3055 = vmatprep.subr.mxu0 0.0
    %3056 = vmatpush1.msra.mxu0 0.0
    %3057 = vmatprep.subr.mxu0 0.0
    %3058 = vmatpush1.msra.mxu0 0.0
    %3059 = vmatprep.subr.mxu0 0.0
    %3060 = vmatpush1.msra.mxu0 0.0
    %3061 = vmatprep.mubr.f32.mxu0 0.0
    %3062 = vmatmul.mubr.f32.gmra.mrb[0].mxu0 %v2701
    %v3063 = vpop.f32.mrb[0].mxu0
    %v3064 = vadd.f32 0.0, %v3063
    %v3065 = vpop.f32.mrb[0].mxu0
    %3066 = vdwg.mxu0
    %3067 = vmatprep.subr.mxu0 0.0
    %3068 = vmatpush1.msra.mxu0 %v3064
    %3069 = vmatprep.subr.mxu0 0.0
    %3070 = vmatpush1.msra.mxu0 0.0
    %3071 = vmatprep.subr.mxu0 0.0
    %3072 = vmatpush1.msra.mxu0 0.0
    %3073 = vmatprep.subr.mxu0 0.0
    %3074 = vmatpush1.msra.mxu0 0.0
    %3075 = vmatprep.subr.mxu0 0.0
    %3076 = vmatpush1.msra.mxu0 0.0
    %3077 = vmatprep.subr.mxu0 0.0
    %3078 = vmatpush1.msra.mxu0 0.0
    %3079 = vmatprep.subr.mxu0 0.0
    %3080 = vmatpush1.msra.mxu0 0.0
    %3081 = vmatprep.subr.mxu0 0.0
    %3082 = vmatpush1.msra.mxu0 0.0
    %3083 = vmatprep.subr.mxu0 0.0
    %3084 = vmatpush1.msra.mxu0 0.0
    %3085 = vmatprep.subr.mxu0 0.0
    %3086 = vmatpush1.msra.mxu0 0.0
    %3087 = vmatprep.subr.mxu0 0.0
    %3088 = vmatpush1.msra.mxu0 0.0
    %3089 = vmatprep.subr.mxu0 0.0
    %3090 = vmatpush1.msra.mxu0 0.0
    %3091 = vmatprep.subr.mxu0 0.0
    %3092 = vmatpush1.msra.mxu0 0.0
    %3093 = vmatprep.subr.mxu0 0.0
    %3094 = vmatpush1.msra.mxu0 0.0
    %3095 = vmatprep.subr.mxu0 0.0
    %3096 = vmatpush1.msra.mxu0 0.0
    %3097 = vmatprep.subr.mxu0 0.0
    %3098 = vmatpush1.msra.mxu0 0.0
    %3099 = vmatprep.subr.mxu0 0.0
    %3100 = vmatpush1.msra.mxu0 0.0
    %3101 = vmatprep.subr.mxu0 0.0
    %3102 = vmatpush1.msra.mxu0 0.0
    %3103 = vmatprep.subr.mxu0 0.0
    %3104 = vmatpush1.msra.mxu0 0.0
    %3105 = vmatprep.subr.mxu0 0.0
    %3106 = vmatpush1.msra.mxu0 0.0
    %3107 = vmatprep.subr.mxu0 0.0
    %3108 = vmatpush1.msra.mxu0 0.0
    %3109 = vmatprep.subr.mxu0 0.0
    %3110 = vmatpush1.msra.mxu0 0.0
    %3111 = vmatprep.subr.mxu0 0.0
    %3112 = vmatpush1.msra.mxu0 0.0
    %3113 = vmatprep.subr.mxu0 0.0
    %3114 = vmatpush1.msra.mxu0 0.0
    %3115 = vmatprep.subr.mxu0 0.0
    %3116 = vmatpush1.msra.mxu0 0.0
    %3117 = vmatprep.subr.mxu0 0.0
    %3118 = vmatpush1.msra.mxu0 0.0
    %3119 = vmatprep.subr.mxu0 0.0
    %3120 = vmatpush1.msra.mxu0 0.0
    %3121 = vmatprep.subr.mxu0 0.0
    %3122 = vmatpush1.msra.mxu0 0.0
    %3123 = vmatprep.subr.mxu0 0.0
    %3124 = vmatpush1.msra.mxu0 0.0
    %3125 = vmatprep.subr.mxu0 0.0
    %3126 = vmatpush1.msra.mxu0 0.0
    %3127 = vmatprep.subr.mxu0 0.0
    %3128 = vmatpush1.msra.mxu0 0.0
    %3129 = vmatprep.subr.mxu0 0.0
    %3130 = vmatpush1.msra.mxu0 0.0
    %3131 = vmatprep.mubr.f32.mxu0 0.0
    %3132 = vmatmul.mubr.f32.gmra.mrb[0].mxu0 %v441
    %v3133 = vpop.f32.mrb[0].mxu0
    %v3134 = vadd.f32 %v53, %v3133
    %v3135 = vpop.f32.mrb[0].mxu0
    %3136 = vdwg.mxu0
    %v3138 = vsel %vm136, %v3134, 0
    %3140 = vmatprep.subr.mxu0 0.0
    %3141 = vmatpush1.msra.mxu0 %v52
    %3142 = vmatprep.subr.mxu0 0.0
    %3143 = vmatpush1.msra.mxu0 0.0
    %3144 = vmatprep.subr.mxu0 0.0
    %3145 = vmatpush1.msra.mxu0 0.0
    %3146 = vmatprep.subr.mxu0 0.0
    %3147 = vmatpush1.msra.mxu0 0.0
    %3148 = vmatprep.subr.mxu0 0.0
    %3149 = vmatpush1.msra.mxu0 0.0
    %3150 = vmatprep.subr.mxu0 0.0
    %3151 = vmatpush1.msra.mxu0 0.0
    %3152 = vmatprep.subr.mxu0 0.0
    %3153 = vmatpush1.msra.mxu0 0.0
    %3154 = vmatprep.subr.mxu0 0.0
    %3155 = vmatpush1.msra.mxu0 0.0
    %3156 = vmatprep.subr.mxu0 0.0
    %3157 = vmatpush1.msra.mxu0 0.0
    %3158 = vmatprep.subr.mxu0 0.0
    %3159 = vmatpush1.msra.mxu0 0.0
    %3160 = vmatprep.subr.mxu0 0.0
    %3161 = vmatpush1.msra.mxu0 0.0
    %3162 = vmatprep.subr.mxu0 0.0
    %3163 = vmatpush1.msra.mxu0 0.0
    %3164 = vmatprep.subr.mxu0 0.0
    %3165 = vmatpush1.msra.mxu0 0.0
    %3166 = vmatprep.subr.mxu0 0.0
    %3167 = vmatpush1.msra.mxu0 0.0
    %3168 = vmatprep.subr.mxu0 0.0
    %3169 = vmatpush1.msra.mxu0 0.0
    %3170 = vmatprep.subr.mxu0 0.0
    %3171 = vmatpush1.msra.mxu0 0.0
    %3172 = vmatprep.subr.mxu0 0.0
    %3173 = vmatpush1.msra.mxu0 0.0
    %3174 = vmatprep.subr.mxu0 0.0
    %3175 = vmatpush1.msra.mxu0 0.0
    %3176 = vmatprep.subr.mxu0 0.0
    %3177 = vmatpush1.msra.mxu0 0.0
    %3178 = vmatprep.subr.mxu0 0.0
    %3179 = vmatpush1.msra.mxu0 0.0
    %3180 = vmatprep.subr.mxu0 0.0
    %3181 = vmatpush1.msra.mxu0 0.0
    %3182 = vmatprep.subr.mxu0 0.0
    %3183 = vmatpush1.msra.mxu0 0.0
    %3184 = vmatprep.subr.mxu0 0.0
    %3185 = vmatpush1.msra.mxu0 0.0
    %3186 = vmatprep.subr.mxu0 0.0
    %3187 = vmatpush1.msra.mxu0 0.0
    %3188 = vmatprep.subr.mxu0 0.0
    %3189 = vmatpush1.msra.mxu0 0.0
    %3190 = vmatprep.subr.mxu0 0.0
    %3191 = vmatpush1.msra.mxu0 0.0
    %3192 = vmatprep.subr.mxu0 0.0
    %3193 = vmatpush1.msra.mxu0 0.0
    %3194 = vmatprep.subr.mxu0 0.0
    %3195 = vmatpush1.msra.mxu0 0.0
    %3196 = vmatprep.subr.mxu0 0.0
    %3197 = vmatpush1.msra.mxu0 0.0
    %3198 = vmatprep.subr.mxu0 0.0
    %3199 = vmatpush1.msra.mxu0 0.0
    %3200 = vmatprep.subr.mxu0 0.0
    %3201 = vmatpush1.msra.mxu0 0.0
    %3202 = vmatprep.subr.mxu0 0.0
    %3203 = vmatpush1.msra.mxu0 0.0
    %3204 = vmatprep.mubr.f32.mxu0 0.0
    %3205 = vmatmul.mubr.f32.gmra.mrb[0].mxu0 %v3138
    %v3206 = vpop.f32.mrb[0].mxu0
    %v3207 = vadd.f32 0.0, %v3206
    %v3208 = vpop.f32.mrb[0].mxu0
    %3209 = vdwg.mxu0
    %3210 = vmatprep.subr.mxu0 0.0
    %3211 = vmatpush1.msra.mxu0 %v3207
    %3212 = vmatprep.subr.mxu0 0.0
    %3213 = vmatpush1.msra.mxu0 0.0
    %3214 = vmatprep.subr.mxu0 0.0
    %3215 = vmatpush1.msra.mxu0 0.0
    %3216 = vmatprep.subr.mxu0 0.0
    %3217 = vmatpush1.msra.mxu0 0.0
    %3218 = vmatprep.subr.mxu0 0.0
    %3219 = vmatpush1.msra.mxu0 0.0
    %3220 = vmatprep.subr.mxu0 0.0
    %3221 = vmatpush1.msra.mxu0 0.0
    %3222 = vmatprep.subr.mxu0 0.0
    %3223 = vmatpush1.msra.mxu0 0.0
    %3224 = vmatprep.subr.mxu0 0.0
    %3225 = vmatpush1.msra.mxu0 0.0
    %3226 = vmatprep.subr.mxu0 0.0
    %3227 = vmatpush1.msra.mxu0 0.0
    %3228 = vmatprep.subr.mxu0 0.0
    %3229 = vmatpush1.msra.mxu0 0.0
    %3230 = vmatprep.subr.mxu0 0.0
    %3231 = vmatpush1.msra.mxu0 0.0
    %3232 = vmatprep.subr.mxu0 0.0
    %3233 = vmatpush1.msra.mxu0 0.0
    %3234 = vmatprep.subr.mxu0 0.0
    %3235 = vmatpush1.msra.mxu0 0.0
    %3236 = vmatprep.subr.mxu0 0.0
    %3237 = vmatpush1.msra.mxu0 0.0
    %3238 = vmatprep.subr.mxu0 0.0
    %3239 = vmatpush1.msra.mxu0 0.0
    %3240 = vmatprep.subr.mxu0 0.0
    %3241 = vmatpush1.msra.mxu0 0.0
    %3242 = vmatprep.subr.mxu0 0.0
    %3243 = vmatpush1.msra.mxu0 0.0
    %3244 = vmatprep.subr.mxu0 0.0
    %3245 = vmatpush1.msra.mxu0 0.0
    %3246 = vmatprep.subr.mxu0 0.0
    %3247 = vmatpush1.msra.mxu0 0.0
    %3248 = vmatprep.subr.mxu0 0.0
    %3249 = vmatpush1.msra.mxu0 0.0
    %3250 = vmatprep.subr.mxu0 0.0
    %3251 = vmatpush1.msra.mxu0 0.0
    %3252 = vmatprep.subr.mxu0 0.0
    %3253 = vmatpush1.msra.mxu0 0.0
    %3254 = vmatprep.subr.mxu0 0.0
    %3255 = vmatpush1.msra.mxu0 0.0
    %3256 = vmatprep.subr.mxu0 0.0
    %3257 = vmatpush1.msra.mxu0 0.0
    %3258 = vmatprep.subr.mxu0 0.0
    %3259 = vmatpush1.msra.mxu0 0.0
    %3260 = vmatprep.subr.mxu0 0.0
    %3261 = vmatpush1.msra.mxu0 0.0
    %3262 = vmatprep.subr.mxu0 0.0
    %3263 = vmatpush1.msra.mxu0 0.0
    %3264 = vmatprep.subr.mxu0 0.0
    %3265 = vmatpush1.msra.mxu0 0.0
    %3266 = vmatprep.subr.mxu0 0.0
    %3267 = vmatpush1.msra.mxu0 0.0
    %3268 = vmatprep.subr.mxu0 0.0
    %3269 = vmatpush1.msra.mxu0 0.0
    %3270 = vmatprep.subr.mxu0 0.0
    %3271 = vmatpush1.msra.mxu0 0.0
    %3272 = vmatprep.subr.mxu0 0.0
    %3273 = vmatpush1.msra.mxu0 0.0
    %3274 = vmatprep.mubr.f32.mxu0 0.0
    %3275 = vmatmul.mubr.f32.gmra.mrb[0].mxu0 %v587
    %v3276 = vpop.f32.mrb[0].mxu0
    %v3277 = vadd.f32 %v54, %v3276
    %v3278 = vpop.f32.mrb[0].mxu0
    %3279 = vdwg.mxu0
    %s3280 = scalar_lea.vmem [#allocation4], 12
    %3281 = vst.msk [vmem:[%s3280] sm:$0x3] %vm659, %v2923
    %s3282 = scalar_lea.vmem %s12, 12
    %3283 = vst.msk [vmem:[%s3282] sm:$0x3] %vm661, %v2994
    %s3284 = scalar_lea.vmem [#allocation6], 48
    %3285 = vst.msk [vmem:[%s3284] sm:$0xff] %vm136, %v3134
    %s3286 = scalar_lea.vmem %s13, 24
    %3287 = vst.msk [vmem:[%s3286] sm:$0xf] %vm664, %v3277
    %v3288 = vrot.slane %v215, 6
    %3290 = vmatprep.subr.mxu0 0.0
    %3291 = vmatpush1.msra.mxu0 %v51
    %3292 = vmatprep.subr.mxu0 0.0
    %3293 = vmatpush1.msra.mxu0 0.0
    %3294 = vmatprep.subr.mxu0 0.0
    %3295 = vmatpush1.msra.mxu0 0.0
    %3296 = vmatprep.subr.mxu0 0.0
    %3297 = vmatpush1.msra.mxu0 0.0
    %3298 = vmatprep.subr.mxu0 0.0
    %3299 = vmatpush1.msra.mxu0 0.0
    %3300 = vmatprep.subr.mxu0 0.0
    %3301 = vmatpush1.msra.mxu0 0.0
    %3302 = vmatprep.subr.mxu0 0.0
    %3303 = vmatpush1.msra.mxu0 0.0
    %3304 = vmatprep.subr.mxu0 0.0
    %3305 = vmatpush1.msra.mxu0 0.0
    %3306 = vmatprep.subr.mxu0 0.0
    %3307 = vmatpush1.msra.mxu0 0.0
    %3308 = vmatprep.subr.mxu0 0.0
    %3309 = vmatpush1.msra.mxu0 0.0
    %3310 = vmatprep.subr.mxu0 0.0
    %3311 = vmatpush1.msra.mxu0 0.0
    %3312 = vmatprep.subr.mxu0 0.0
    %3313 = vmatpush1.msra.mxu0 0.0
    %3314 = vmatprep.subr.mxu0 0.0
    %3315 = vmatpush1.msra.mxu0 0.0
    %3316 = vmatprep.subr.mxu0 0.0
    %3317 = vmatpush1.msra.mxu0 0.0
    %3318 = vmatprep.subr.mxu0 0.0
    %3319 = vmatpush1.msra.mxu0 0.0
    %3320 = vmatprep.subr.mxu0 0.0
    %3321 = vmatpush1.msra.mxu0 0.0
    %3322 = vmatprep.subr.mxu0 0.0
    %3323 = vmatpush1.msra.mxu0 0.0
    %3324 = vmatprep.subr.mxu0 0.0
    %3325 = vmatpush1.msra.mxu0 0.0
    %3326 = vmatprep.subr.mxu0 0.0
    %3327 = vmatpush1.msra.mxu0 0.0
    %3328 = vmatprep.subr.mxu0 0.0
    %3329 = vmatpush1.msra.mxu0 0.0
    %3330 = vmatprep.subr.mxu0 0.0
    %3331 = vmatpush1.msra.mxu0 0.0
    %3332 = vmatprep.subr.mxu0 0.0
    %3333 = vmatpush1.msra.mxu0 0.0
    %3334 = vmatprep.subr.mxu0 0.0
    %3335 = vmatpush1.msra.mxu0 0.0
    %3336 = vmatprep.subr.mxu0 0.0
    %3337 = vmatpush1.msra.mxu0 0.0
    %3338 = vmatprep.subr.mxu0 0.0
    %3339 = vmatpush1.msra.mxu0 0.0
    %3340 = vmatprep.subr.mxu0 0.0
    %3341 = vmatpush1.msra.mxu0 0.0
    %3342 = vmatprep.subr.mxu0 0.0
    %3343 = vmatpush1.msra.mxu0 0.0
    %3344 = vmatprep.subr.mxu0 0.0
    %3345 = vmatpush1.msra.mxu0 0.0
    %3346 = vmatprep.subr.mxu0 0.0
    %3347 = vmatpush1.msra.mxu0 0.0
    %3348 = vmatprep.subr.mxu0 0.0
    %3349 = vmatpush1.msra.mxu0 0.0
    %3350 = vmatprep.subr.mxu0 0.0
    %3351 = vmatpush1.msra.mxu0 0.0
    %3352 = vmatprep.subr.mxu0 0.0
    %3353 = vmatpush1.msra.mxu0 0.0
    %3354 = vmatprep.mubr.f32.mxu0 0.0
    %3355 = vmatmul.mubr.f32.gmra.mrb[0].mxu0 %v2925
    %v3356 = vpop.f32.mrb[0].mxu0
    %v3357 = vadd.f32 %v3288, %v3356
    %v3358 = vpop.f32.mrb[0].mxu0
    %3359 = vdwg.mxu0
    %v3360 = vtanh.pop %v3357
    %v3362 = vsel %vm136, %v3360, 0
    %3364 = vmatprep.subr.mxu0 0.0
    %3365 = vmatpush1.msra.mxu0 %v52
    %3366 = vmatprep.subr.mxu0 0.0
    %3367 = vmatpush1.msra.mxu0 0.0
    %3368 = vmatprep.subr.mxu0 0.0
    %3369 = vmatpush1.msra.mxu0 0.0
    %3370 = vmatprep.subr.mxu0 0.0
    %3371 = vmatpush1.msra.mxu0 0.0
    %3372 = vmatprep.subr.mxu0 0.0
    %3373 = vmatpush1.msra.mxu0 0.0
    %3374 = vmatprep.subr.mxu0 0.0
    %3375 = vmatpush1.msra.mxu0 0.0
    %3376 = vmatprep.subr.mxu0 0.0
    %3377 = vmatpush1.msra.mxu0 0.0
    %3378 = vmatprep.subr.mxu0 0.0
    %3379 = vmatpush1.msra.mxu0 0.0
    %3380 = vmatprep.subr.mxu0 0.0
    %3381 = vmatpush1.msra.mxu0 0.0
    %3382 = vmatprep.subr.mxu0 0.0
    %3383 = vmatpush1.msra.mxu0 0.0
    %3384 = vmatprep.subr.mxu0 0.0
    %3385 = vmatpush1.msra.mxu0 0.0
    %3386 = vmatprep.subr.mxu0 0.0
    %3387 = vmatpush1.msra.mxu0 0.0
    %3388 = vmatprep.subr.mxu0 0.0
    %3389 = vmatpush1.msra.mxu0 0.0
    %3390 = vmatprep.subr.mxu0 0.0
    %3391 = vmatpush1.msra.mxu0 0.0
    %3392 = vmatprep.subr.mxu0 0.0
    %3393 = vmatpush1.msra.mxu0 0.0
    %3394 = vmatprep.subr.mxu0 0.0
    %3395 = vmatpush1.msra.mxu0 0.0
    %3396 = vmatprep.subr.mxu0 0.0
    %3397 = vmatpush1.msra.mxu0 0.0
    %3398 = vmatprep.subr.mxu0 0.0
    %3399 = vmatpush1.msra.mxu0 0.0
    %3400 = vmatprep.subr.mxu0 0.0
    %3401 = vmatpush1.msra.mxu0 0.0
    %3402 = vmatprep.subr.mxu0 0.0
    %3403 = vmatpush1.msra.mxu0 0.0
    %3404 = vmatprep.subr.mxu0 0.0
    %3405 = vmatpush1.msra.mxu0 0.0
    %3406 = vmatprep.subr.mxu0 0.0
    %3407 = vmatpush1.msra.mxu0 0.0
    %3408 = vmatprep.subr.mxu0 0.0
    %3409 = vmatpush1.msra.mxu0 0.0
    %3410 = vmatprep.subr.mxu0 0.0
    %3411 = vmatpush1.msra.mxu0 0.0
    %3412 = vmatprep.subr.mxu0 0.0
    %3413 = vmatpush1.msra.mxu0 0.0
    %3414 = vmatprep.subr.mxu0 0.0
    %3415 = vmatpush1.msra.mxu0 0.0
    %3416 = vmatprep.subr.mxu0 0.0
    %3417 = vmatpush1.msra.mxu0 0.0
    %3418 = vmatprep.subr.mxu0 0.0
    %3419 = vmatpush1.msra.mxu0 0.0
    %3420 = vmatprep.subr.mxu0 0.0
    %3421 = vmatpush1.msra.mxu0 0.0
    %3422 = vmatprep.subr.mxu0 0.0
    %3423 = vmatpush1.msra.mxu0 0.0
    %3424 = vmatprep.subr.mxu0 0.0
    %3425 = vmatpush1.msra.mxu0 0.0
    %3426 = vmatprep.subr.mxu0 0.0
    %3427 = vmatpush1.msra.mxu0 0.0
    %3428 = vmatprep.mubr.f32.mxu0 0.0
    %3429 = vmatmul.mubr.f32.gmra.mrb[0].mxu0 %v3362
    %v3430 = vpop.f32.mrb[0].mxu0
    %v3431 = vadd.f32 %v124, %v3430
    %v3432 = vpop.f32.mrb[0].mxu0
    %3433 = vdwg.mxu0
    %3434 = vmatprep.subr.mxu0 0.0
    %3435 = vmatpush1.msra.mxu0 %v51
    %3436 = vmatprep.subr.mxu0 0.0
    %3437 = vmatpush1.msra.mxu0 0.0
    %3438 = vmatprep.subr.mxu0 0.0
    %3439 = vmatpush1.msra.mxu0 0.0
    %3440 = vmatprep.subr.mxu0 0.0
    %3441 = vmatpush1.msra.mxu0 0.0
    %3442 = vmatprep.subr.mxu0 0.0
    %3443 = vmatpush1.msra.mxu0 0.0
    %3444 = vmatprep.subr.mxu0 0.0
    %3445 = vmatpush1.msra.mxu0 0.0
    %3446 = vmatprep.subr.mxu0 0.0
    %3447 = vmatpush1.msra.mxu0 0.0
    %3448 = vmatprep.subr.mxu0 0.0
    %3449 = vmatpush1.msra.mxu0 0.0
    %3450 = vmatprep.subr.mxu0 0.0
    %3451 = vmatpush1.msra.mxu0 0.0
    %3452 = vmatprep.subr.mxu0 0.0
    %3453 = vmatpush1.msra.mxu0 0.0
    %3454 = vmatprep.subr.mxu0 0.0
    %3455 = vmatpush1.msra.mxu0 0.0
    %3456 = vmatprep.subr.mxu0 0.0
    %3457 = vmatpush1.msra.mxu0 0.0
    %3458 = vmatprep.subr.mxu0 0.0
    %3459 = vmatpush1.msra.mxu0 0.0
    %3460 = vmatprep.subr.mxu0 0.0
    %3461 = vmatpush1.msra.mxu0 0.0
    %3462 = vmatprep.subr.mxu0 0.0
    %3463 = vmatpush1.msra.mxu0 0.0
    %3464 = vmatprep.subr.mxu0 0.0
    %3465 = vmatpush1.msra.mxu0 0.0
    %3466 = vmatprep.subr.mxu0 0.0
    %3467 = vmatpush1.msra.mxu0 0.0
    %3468 = vmatprep.subr.mxu0 0.0
    %3469 = vmatpush1.msra.mxu0 0.0
    %3470 = vmatprep.subr.mxu0 0.0
    %3471 = vmatpush1.msra.mxu0 0.0
    %3472 = vmatprep.subr.mxu0 0.0
    %3473 = vmatpush1.msra.mxu0 0.0
    %3474 = vmatprep.subr.mxu0 0.0
    %3475 = vmatpush1.msra.mxu0 0.0
    %3476 = vmatprep.subr.mxu0 0.0
    %3477 = vmatpush1.msra.mxu0 0.0
    %3478 = vmatprep.subr.mxu0 0.0
    %3479 = vmatpush1.msra.mxu0 0.0
    %3480 = vmatprep.subr.mxu0 0.0
    %3481 = vmatpush1.msra.mxu0 0.0
    %3482 = vmatprep.subr.mxu0 0.0
    %3483 = vmatpush1.msra.mxu0 0.0
    %3484 = vmatprep.subr.mxu0 0.0
    %3485 = vmatpush1.msra.mxu0 0.0
    %3486 = vmatprep.subr.mxu0 0.0
    %3487 = vmatpush1.msra.mxu0 0.0
    %3488 = vmatprep.subr.mxu0 0.0
    %3489 = vmatpush1.msra.mxu0 0.0
    %3490 = vmatprep.subr.mxu0 0.0
    %3491 = vmatpush1.msra.mxu0 0.0
    %3492 = vmatprep.subr.mxu0 0.0
    %3493 = vmatpush1.msra.mxu0 0.0
    %3494 = vmatprep.subr.mxu0 0.0
    %3495 = vmatpush1.msra.mxu0 0.0
    %3496 = vmatprep.subr.mxu0 0.0
    %3497 = vmatpush1.msra.mxu0 0.0
    %3498 = vmatprep.mubr.f32.mxu0 0.0
    %3499 = vmatmul.mubr.f32.gmra.mrb[0].mxu0 %v3138
    %v3500 = vpop.f32.mrb[0].mxu0
    %v3501 = vadd.f32 0.0, %v3500
    %v3502 = vpop.f32.mrb[0].mxu0
    %3503 = vdwg.mxu0
    %3504 = vmatprep.subr.mxu0 0.0
    %3505 = vmatpush1.msra.mxu0 %v3501
    %3506 = vmatprep.subr.mxu0 0.0
    %3507 = vmatpush1.msra.mxu0 0.0
    %3508 = vmatprep.subr.mxu0 0.0
    %3509 = vmatpush1.msra.mxu0 0.0
    %3510 = vmatprep.subr.mxu0 0.0
    %3511 = vmatpush1.msra.mxu0 0.0
    %3512 = vmatprep.subr.mxu0 0.0
    %3513 = vmatpush1.msra.mxu0 0.0
    %3514 = vmatprep.subr.mxu0 0.0
    %3515 = vmatpush1.msra.mxu0 0.0
    %3516 = vmatprep.subr.mxu0 0.0
    %3517 = vmatpush1.msra.mxu0 0.0
    %3518 = vmatprep.subr.mxu0 0.0
    %3519 = vmatpush1.msra.mxu0 0.0
    %3520 = vmatprep.subr.mxu0 0.0
    %3521 = vmatpush1.msra.mxu0 0.0
    %3522 = vmatprep.subr.mxu0 0.0
    %3523 = vmatpush1.msra.mxu0 0.0
    %3524 = vmatprep.subr.mxu0 0.0
    %3525 = vmatpush1.msra.mxu0 0.0
    %3526 = vmatprep.subr.mxu0 0.0
    %3527 = vmatpush1.msra.mxu0 0.0
    %3528 = vmatprep.subr.mxu0 0.0
    %3529 = vmatpush1.msra.mxu0 0.0
    %3530 = vmatprep.subr.mxu0 0.0
    %3531 = vmatpush1.msra.mxu0 0.0
    %3532 = vmatprep.subr.mxu0 0.0
    %3533 = vmatpush1.msra.mxu0 0.0
    %3534 = vmatprep.subr.mxu0 0.0
    %3535 = vmatpush1.msra.mxu0 0.0
    %3536 = vmatprep.subr.mxu0 0.0
    %3537 = vmatpush1.msra.mxu0 0.0
    %3538 = vmatprep.subr.mxu0 0.0
    %3539 = vmatpush1.msra.mxu0 0.0
    %3540 = vmatprep.subr.mxu0 0.0
    %3541 = vmatpush1.msra.mxu0 0.0
    %3542 = vmatprep.subr.mxu0 0.0
    %3543 = vmatpush1.msra.mxu0 0.0
    %3544 = vmatprep.subr.mxu0 0.0
    %3545 = vmatpush1.msra.mxu0 0.0
    %3546 = vmatprep.subr.mxu0 0.0
    %3547 = vmatpush1.msra.mxu0 0.0
    %3548 = vmatprep.subr.mxu0 0.0
    %3549 = vmatpush1.msra.mxu0 0.0
    %3550 = vmatprep.subr.mxu0 0.0
    %3551 = vmatpush1.msra.mxu0 0.0
    %3552 = vmatprep.subr.mxu0 0.0
    %3553 = vmatpush1.msra.mxu0 0.0
    %3554 = vmatprep.subr.mxu0 0.0
    %3555 = vmatpush1.msra.mxu0 0.0
    %3556 = vmatprep.subr.mxu0 0.0
    %3557 = vmatpush1.msra.mxu0 0.0
    %3558 = vmatprep.subr.mxu0 0.0
    %3559 = vmatpush1.msra.mxu0 0.0
    %3560 = vmatprep.subr.mxu0 0.0
    %3561 = vmatpush1.msra.mxu0 0.0
    %3562 = vmatprep.subr.mxu0 0.0
    %3563 = vmatpush1.msra.mxu0 0.0
    %3564 = vmatprep.subr.mxu0 0.0
    %3565 = vmatpush1.msra.mxu0 0.0
    %3566 = vmatprep.subr.mxu0 0.0
    %3567 = vmatpush1.msra.mxu0 0.0
    %3568 = vmatprep.mubr.f32.mxu0 0.0
    %3569 = vmatmul.mubr.f32.gmra.mrb[0].mxu0 %v441
    %v3570 = vpop.f32.mrb[0].mxu0
    %v3571 = vadd.f32 %v53, %v3570
    %v3572 = vpop.f32.mrb[0].mxu0
    %3573 = vdwg.mxu0
    %v3575 = vsel %vm136, %v3571, 0
    %3577 = vmatprep.subr.mxu0 0.0
    %3578 = vmatpush1.msra.mxu0 %v52
    %3579 = vmatprep.subr.mxu0 0.0
    %3580 = vmatpush1.msra.mxu0 0.0
    %3581 = vmatprep.subr.mxu0 0.0
    %3582 = vmatpush1.msra.mxu0 0.0
    %3583 = vmatprep.subr.mxu0 0.0
    %3584 = vmatpush1.msra.mxu0 0.0
    %3585 = vmatprep.subr.mxu0 0.0
    %3586 = vmatpush1.msra.mxu0 0.0
    %3587 = vmatprep.subr.mxu0 0.0
    %3588 = vmatpush1.msra.mxu0 0.0
    %3589 = vmatprep.subr.mxu0 0.0
    %3590 = vmatpush1.msra.mxu0 0.0
    %3591 = vmatprep.subr.mxu0 0.0
    %3592 = vmatpush1.msra.mxu0 0.0
    %3593 = vmatprep.subr.mxu0 0.0
    %3594 = vmatpush1.msra.mxu0 0.0
    %3595 = vmatprep.subr.mxu0 0.0
    %3596 = vmatpush1.msra.mxu0 0.0
    %3597 = vmatprep.subr.mxu0 0.0
    %3598 = vmatpush1.msra.mxu0 0.0
    %3599 = vmatprep.subr.mxu0 0.0
    %3600 = vmatpush1.msra.mxu0 0.0
    %3601 = vmatprep.subr.mxu0 0.0
    %3602 = vmatpush1.msra.mxu0 0.0
    %3603 = vmatprep.subr.mxu0 0.0
    %3604 = vmatpush1.msra.mxu0 0.0
    %3605 = vmatprep.subr.mxu0 0.0
    %3606 = vmatpush1.msra.mxu0 0.0
    %3607 = vmatprep.subr.mxu0 0.0
    %3608 = vmatpush1.msra.mxu0 0.0
    %3609 = vmatprep.subr.mxu0 0.0
    %3610 = vmatpush1.msra.mxu0 0.0
    %3611 = vmatprep.subr.mxu0 0.0
    %3612 = vmatpush1.msra.mxu0 0.0
    %3613 = vmatprep.subr.mxu0 0.0
    %3614 = vmatpush1.msra.mxu0 0.0
    %3615 = vmatprep.subr.mxu0 0.0
    %3616 = vmatpush1.msra.mxu0 0.0
    %3617 = vmatprep.subr.mxu0 0.0
    %3618 = vmatpush1.msra.mxu0 0.0
    %3619 = vmatprep.subr.mxu0 0.0
    %3620 = vmatpush1.msra.mxu0 0.0
    %3621 = vmatprep.subr.mxu0 0.0
    %3622 = vmatpush1.msra.mxu0 0.0
    %3623 = vmatprep.subr.mxu0 0.0
    %3624 = vmatpush1.msra.mxu0 0.0
    %3625 = vmatprep.subr.mxu0 0.0
    %3626 = vmatpush1.msra.mxu0 0.0
    %3627 = vmatprep.subr.mxu0 0.0
    %3628 = vmatpush1.msra.mxu0 0.0
    %3629 = vmatprep.subr.mxu0 0.0
    %3630 = vmatpush1.msra.mxu0 0.0
    %3631 = vmatprep.subr.mxu0 0.0
    %3632 = vmatpush1.msra.mxu0 0.0
    %3633 = vmatprep.subr.mxu0 0.0
    %3634 = vmatpush1.msra.mxu0 0.0
    %3635 = vmatprep.subr.mxu0 0.0
    %3636 = vmatpush1.msra.mxu0 0.0
    %3637 = vmatprep.subr.mxu0 0.0
    %3638 = vmatpush1.msra.mxu0 0.0
    %3639 = vmatprep.subr.mxu0 0.0
    %3640 = vmatpush1.msra.mxu0 0.0
    %3641 = vmatprep.mubr.f32.mxu0 0.0
    %3642 = vmatmul.mubr.f32.gmra.mrb[0].mxu0 %v3575
    %v3643 = vpop.f32.mrb[0].mxu0
    %v3644 = vadd.f32 0.0, %v3643
    %v3645 = vpop.f32.mrb[0].mxu0
    %3646 = vdwg.mxu0
    %3647 = vmatprep.subr.mxu0 0.0
    %3648 = vmatpush1.msra.mxu0 %v3644
    %3649 = vmatprep.subr.mxu0 0.0
    %3650 = vmatpush1.msra.mxu0 0.0
    %3651 = vmatprep.subr.mxu0 0.0
    %3652 = vmatpush1.msra.mxu0 0.0
    %3653 = vmatprep.subr.mxu0 0.0
    %3654 = vmatpush1.msra.mxu0 0.0
    %3655 = vmatprep.subr.mxu0 0.0
    %3656 = vmatpush1.msra.mxu0 0.0
    %3657 = vmatprep.subr.mxu0 0.0
    %3658 = vmatpush1.msra.mxu0 0.0
    %3659 = vmatprep.subr.mxu0 0.0
    %3660 = vmatpush1.msra.mxu0 0.0
    %3661 = vmatprep.subr.mxu0 0.0
    %3662 = vmatpush1.msra.mxu0 0.0
    %3663 = vmatprep.subr.mxu0 0.0
    %3664 = vmatpush1.msra.mxu0 0.0
    %3665 = vmatprep.subr.mxu0 0.0
    %3666 = vmatpush1.msra.mxu0 0.0
    %3667 = vmatprep.subr.mxu0 0.0
    %3668 = vmatpush1.msra.mxu0 0.0
    %3669 = vmatprep.subr.mxu0 0.0
    %3670 = vmatpush1.msra.mxu0 0.0
    %3671 = vmatprep.subr.mxu0 0.0
    %3672 = vmatpush1.msra.mxu0 0.0
    %3673 = vmatprep.subr.mxu0 0.0
    %3674 = vmatpush1.msra.mxu0 0.0
    %3675 = vmatprep.subr.mxu0 0.0
    %3676 = vmatpush1.msra.mxu0 0.0
    %3677 = vmatprep.subr.mxu0 0.0
    %3678 = vmatpush1.msra.mxu0 0.0
    %3679 = vmatprep.subr.mxu0 0.0
    %3680 = vmatpush1.msra.mxu0 0.0
    %3681 = vmatprep.subr.mxu0 0.0
    %3682 = vmatpush1.msra.mxu0 0.0
    %3683 = vmatprep.subr.mxu0 0.0
    %3684 = vmatpush1.msra.mxu0 0.0
    %3685 = vmatprep.subr.mxu0 0.0
    %3686 = vmatpush1.msra.mxu0 0.0
    %3687 = vmatprep.subr.mxu0 0.0
    %3688 = vmatpush1.msra.mxu0 0.0
    %3689 = vmatprep.subr.mxu0 0.0
    %3690 = vmatpush1.msra.mxu0 0.0
    %3691 = vmatprep.subr.mxu0 0.0
    %3692 = vmatpush1.msra.mxu0 0.0
    %3693 = vmatprep.subr.mxu0 0.0
    %3694 = vmatpush1.msra.mxu0 0.0
    %3695 = vmatprep.subr.mxu0 0.0
    %3696 = vmatpush1.msra.mxu0 0.0
    %3697 = vmatprep.subr.mxu0 0.0
    %3698 = vmatpush1.msra.mxu0 0.0
    %3699 = vmatprep.subr.mxu0 0.0
    %3700 = vmatpush1.msra.mxu0 0.0
    %3701 = vmatprep.subr.mxu0 0.0
    %3702 = vmatpush1.msra.mxu0 0.0
    %3703 = vmatprep.subr.mxu0 0.0
    %3704 = vmatpush1.msra.mxu0 0.0
    %3705 = vmatprep.subr.mxu0 0.0
    %3706 = vmatpush1.msra.mxu0 0.0
    %3707 = vmatprep.subr.mxu0 0.0
    %3708 = vmatpush1.msra.mxu0 0.0
    %3709 = vmatprep.subr.mxu0 0.0
    %3710 = vmatpush1.msra.mxu0 0.0
    %3711 = vmatprep.mubr.f32.mxu0 0.0
    %3712 = vmatmul.mubr.f32.gmra.mrb[0].mxu0 %v587
    %v3713 = vpop.f32.mrb[0].mxu0
    %v3714 = vadd.f32 %v54, %v3713
    %v3715 = vpop.f32.mrb[0].mxu0
    %3716 = vdwg.mxu0
    %s3717 = scalar_lea.vmem [#allocation4], 14
    %3718 = vst.msk [vmem:[%s3717] sm:$0x3] %vm659, %v3360
    %s3719 = scalar_lea.vmem %s12, 14
    %3720 = vst.msk [vmem:[%s3719] sm:$0x3] %vm661, %v3431
    %s3721 = scalar_lea.vmem [#allocation6], 56
    %3722 = vst.msk [vmem:[%s3721] sm:$0xff] %vm136, %v3571
    %s3723 = scalar_lea.vmem %s13, 28
    %3724 = vst.msk [vmem:[%s3723] sm:$0xf] %vm664, %v3714
    %3725 = vst.msk [vmem:[#allocation2] sm:$0x3] %vm659, %v3360
    %3726 = vst.msk [vmem:[#allocation3] sm:$0xff] %vm136, %v3571
    // Predicated region
    $region46: #{tpu_custom_call.1} parent=1 // pred_check
      _
    $region47: #{tpu_custom_call.1} parent=1 // pred_check_branch
      %3728 = sbr.rel (0) target = $region49
    $region48: #{tpu_custom_call.1} parent=1 // pred_region
      %s3730 = ssub.s32 256, 256
      %3731 = vsyncadd [#allocation5], %s3730
      %s3732 = sshll.u32 [#allocation4], 4
      %s3733 = int_to_ptr.vmem [resolvable:$true] %s3732
      %3738 = dma.vmem_to_hbm [thread:$0]  %s3733, 256, %s10, [#allocation5], 32, 32, 2
    $region49: #{tpu_custom_call.1} parent=1 // pred_fallthru
      _
    // Predicated region
    $region50: #{tpu_custom_call.1} parent=1 // pred_check
      _
    $region51: #{tpu_custom_call.1} parent=1 // pred_check_branch
      %3740 = sbr.rel (0) target = $region53
    $region52: #{tpu_custom_call.1} parent=1 // pred_region
      %s3742 = ssub.s32 1024, 1024
      %3743 = vsyncadd [#allocation7], %s3742
      %s3744 = sshll.u32 [#allocation6], 4
      %s3745 = int_to_ptr.vmem [resolvable:$true] %s3744
      %3750 = dma.vmem_to_hbm [thread:$0]  %s3745, 1024, %s11, [#allocation7], 128, 128, 8
    $region53: #{tpu_custom_call.1} parent=1 // pred_fallthru
      _
    // Predicated region
    $region54: #{tpu_custom_call.1} parent=1 // pred_check
      _
    $region55: #{tpu_custom_call.1} parent=1 // pred_check_branch
      %3752 = sbr.rel (0) target = $region57
    $region56: #{tpu_custom_call.1} parent=1 // pred_region
      _
    $region57: #{tpu_custom_call.1} parent=1 // pred_fallthru
      _
    // Predicated region
    $region58: #{tpu_custom_call.1} parent=1 // pred_check
      _
    $region59: #{tpu_custom_call.1} parent=1 // pred_check_branch
      %3754 = sbr.rel (0) target = $region61
    $region60: #{tpu_custom_call.1} parent=1 // pred_region
      _
    $region61: #{tpu_custom_call.1} parent=1 // pred_fallthru
      _
    // Predicated region
    $region62: #{tpu_custom_call.1} parent=1 // pred_check
      _
    $region63: #{tpu_custom_call.1} parent=1 // pred_check_branch
      %3756 = sbr.rel (0) target = $region65
    $region64: #{tpu_custom_call.1} parent=1 // pred_region
      %3757 = dma.done [#allocation5], 256
    $region65: #{tpu_custom_call.1} parent=1 // pred_fallthru
      _
    // Predicated region
    $region66: #{tpu_custom_call.1} parent=1 // pred_check
      _
    $region67: #{tpu_custom_call.1} parent=1 // pred_check_branch
      %3759 = sbr.rel (0) target = $region69
    $region68: #{tpu_custom_call.1} parent=1 // pred_region
      %3760 = dma.done [#allocation7], 1024
    $region69: #{tpu_custom_call.1} parent=1 // pred_fallthru
      _
    // Predicated region
    $region70: #{tpu_custom_call.1} parent=1 // pred_check
      _
    $region71: #{tpu_custom_call.1} parent=1 // pred_check_branch
      %3762 = sbr.rel (0) target = $region73
    $region72: #{tpu_custom_call.1} parent=1 // pred_region
      _
    $region73: #{tpu_custom_call.1} parent=1 // pred_fallthru
      _
    // Predicated region
    $region74: #{tpu_custom_call.1} parent=1 // pred_check
      _
    $region75: #{tpu_custom_call.1} parent=1 // pred_check_branch
      %3764 = sbr.rel (0) target = $region77
    $region76: #{tpu_custom_call.1} parent=1 // pred_region
      _
    $region77: #{tpu_custom_call.1} parent=1 // pred_fallthru
      _
    %3765 = vsyncpa [#allocation5], 1
    %3766 = vsyncpa [#allocation7], 1

</llo_original>
